<compile_context>
chip_gen: v5e
topology: v5e:2x2
jax: 0.10.0
libtpu: 0.0.40
codegen_flags: <defaults>
</compile_context>

<pallas_src>
import functools
import math

import numpy as np
import jax
import jax.numpy as jnp
from jax import lax
from jax.experimental import pallas as pl
from jax.experimental.pallas import tpu as pltpu

NEG_SLOPE = 0.2                       # leaky_relu negative slope (module default)
LANE = 128                            # TPU lane width; channel axis padded to this
_NT = (((1,), (1,)), ((), ()))        # dot_general contraction on the last dims
_MASK_OFF = -1e30                     # additive "no edge" bias


# -----------------------------------------------------------------------------
# Fused kernel: one grid step == `block_b` batch elements through ALL layers
# -----------------------------------------------------------------------------

def _fused_kernel(x_ref, mb_ref, aw_ref,
                  projW_ref, projb_ref, wsrc_ref, wdst_ref,
                  c1_ref, c0_ref, agWa_ref, agWh_ref, agb_ref,
                  q_ref, kW_ref, kb_ref,
                  out_ref, *, node_num, n_layers):
    Bb, N, Cp = x_ref.shape
    n_t = N - node_num
    # dense edge-type order: 0 s2s (dst 's'), 1 t2t ('t'), 2 s2t ('t'), 3 t2s ('s')
    dst_lo = (0, node_num, node_num, 0)
    dst_n = (node_num, n_t, n_t, node_num)

    cur = x_ref[...]                                           # (Bb, N, Cp) f32

    for l in range(n_layers):                                  # static unroll
        # ---- per-node-type input projection, flat over the sub-batch -------
        xs = cur[:, :node_num].reshape(Bb * node_num, Cp).astype(jnp.bfloat16)
        xt = cur[:, node_num:].reshape(Bb * n_t, Cp).astype(jnp.bfloat16)
        hs = (jnp.dot(xs, projW_ref[l, 0], preferred_element_type=jnp.float32)
              + projb_ref[l, 0])
        ht = (jnp.dot(xt, projW_ref[l, 1], preferred_element_type=jnp.float32)
              + projb_ref[l, 1])
        h3 = jnp.concatenate([hs.reshape(Bb, node_num, Cp),
                              ht.reshape(Bb, n_t, Cp)], axis=1)  # (Bb,N,Cp) f32
        hb3 = h3.astype(jnp.bfloat16)

        # ---- per-edge-type weighted attention conv --------------------------
        # softmax is per batch element -> short inner loop only for the (d,N)
        # score part; aggregation results are re-batched afterwards.
        # TODO(synk): for large graphs, block the source axis with a grid axis
        # + online softmax instead of dense (d, N) scores (v7x 64 MiB VMEM).
        aggr = [[] for _ in range(4)]
        for b in range(Bb):
            h_b = hb3[b]                                       # (N, Cp) bf16
            s_dst = lax.dot_general(h_b, wdst_ref[l], _NT,
                                    preferred_element_type=jnp.float32)   # (N,4)
            s_srcT = lax.dot_general(wsrc_ref[l], h_b, _NT,
                                     preferred_element_type=jnp.float32)  # (4,N)
            for e in range(4):
                lo, d = dst_lo[e], dst_n[e]
                w_e = aw_ref[b, e].astype(jnp.float32)         # (N, N) weights
                m_e = mb_ref[b, e].astype(jnp.float32)         # (N, N) 0/-1e30
                score = (s_dst[lo:lo + d, e:e + 1] + s_srcT[e:e + 1, :]
                         + c1_ref[l, e] * w_e[lo:lo + d] + c0_ref[l, e])
                score = jnp.maximum(score, NEG_SLOPE * score)  # leaky_relu
                masked = score + m_e[lo:lo + d]                # additive mask
                row_max = jnp.max(masked, axis=-1, keepdims=True)
                row_max = jnp.where(row_max > -1e29, row_max, 0.0)  # empty rows
                ex = jnp.exp(masked - row_max)                 # 0 off-edge
                den = jnp.sum(ex, axis=-1, keepdims=True)
                inv = pl.reciprocal(jnp.where(den > 0.0, den, 1.0), approx=True)
                attn = (ex * inv).astype(jnp.bfloat16)
                # TODO(synk): F.dropout on attn omitted (dropout=0.0 -> identity)
                aggr[e].append(jnp.dot(attn, h_b,
                                       preferred_element_type=jnp.float32))

        # ---- update: relu(agg_lin([aggr | h_dst])) as two summed matmuls ----
        outs = []
        for e in range(4):
            lo, d = dst_lo[e], dst_n[e]
            ag = jnp.concatenate(aggr[e], axis=0).astype(jnp.bfloat16)  # (Bb*d,Cp)
            hd = h3[:, lo:lo + d].reshape(Bb * d, Cp).astype(jnp.bfloat16)
            lin = (jnp.dot(ag, agWa_ref[l, e], preferred_element_type=jnp.float32)
                   + jnp.dot(hd, agWh_ref[l, e], preferred_element_type=jnp.float32)
                   + agb_ref[l, e])
            outs.append(jnp.maximum(lin, 0.0).reshape(Bb, d, Cp))       # ReLU

        # ---- semantic ("group") attention per destination node type ---------
        def sem_mix(o_a, o_b, nt, d):
            def _sem_score(o):                                  # (Bb, 1) per batch
                of = o.reshape(Bb * d, Cp).astype(jnp.bfloat16)
                t = jnp.tanh(jnp.dot(of, kW_ref[l, nt],
                                     preferred_element_type=jnp.float32)
                             + kb_ref[l, nt])
                m = jnp.mean(t.reshape(Bb, d, Cp), axis=1)      # (Bb, Cp)
                return jnp.sum(q_ref[l, nt] * m, axis=-1, keepdims=True)
            sa, sb = _sem_score(o_a), _sem_score(o_b)
            mx = jnp.maximum(sa, sb)
            ea, eb = jnp.exp(sa - mx), jnp.exp(sb - mx)
            inv = pl.reciprocal(ea + eb, approx=True)
            return ((ea * inv)[:, :, None] * o_a + (eb * inv)[:, :, None] * o_b)

        # edge_index_dict insertion order gives:
        #   's' <- [s2s, t2s] = outs[0], outs[3];  't' <- [t2t, s2t] = outs[1], outs[2]
        out_s = sem_mix(outs[0], outs[3], 0, node_num)
        out_t = sem_mix(outs[1], outs[2], 1, n_t)
        cur = jnp.concatenate([out_s, out_t], axis=1)          # (Bb, N, Cp) f32
        # TODO(synk): inter-layer F.dropout omitted (dropout=0.0 -> identity)

    out_ref[...] = cur


# -----------------------------------------------------------------------------
# pallas_call wrapper: one call for the whole forward, grid over batch blocks
# -----------------------------------------------------------------------------

def _forward_impl(xp, mb, aw, p, node_num, block_b):
    Bp, N, Cp = xp.shape
    L = p["projW"].shape[0]
    nblk = Bp // block_b
    kernel = functools.partial(_fused_kernel, node_num=node_num, n_layers=L)

    def whole(a):   # whole-array block, constant across the batch grid
        nd = a.ndim
        return pl.BlockSpec(a.shape, lambda g: (0,) * nd)

    in_specs = [
        pl.BlockSpec((block_b, N, Cp), lambda g: (g, 0, 0)),        # x
        pl.BlockSpec((block_b, 4, N, N), lambda g: (g, 0, 0, 0)),   # mask bias
        pl.BlockSpec((block_b, 4, N, N), lambda g: (g, 0, 0, 0)),   # edge weights
        whole(p["projW"]), whole(p["projb"]),
        whole(p["wsrc"]), whole(p["wdst"]),
        whole(p["c1"]), whole(p["c0"]),
        whole(p["agWa"]), whole(p["agWh"]), whole(p["agb"]),
        whole(p["q"]), whole(p["kW"]), whole(p["kb"]),
    ]

    # advisory cost estimate for XLA's scheduler
    d_list = (node_num, N - node_num, N - node_num, node_num)
    fl_layer = (2 * N * Cp * Cp + 16 * N * Cp
                + sum(2 * d * N * Cp + 4 * d * Cp * Cp for d in d_list)
                + 4 * N * Cp * Cp)
    flops = int(Bp * L * fl_layer)
    transc = int(Bp * L * (sum(d * N for d in d_list) + 2 * N * Cp + 4))
    param_bytes = sum(int(p[k].size) * p[k].dtype.itemsize for k in p)
    bytes_accessed = int(4 * xp.size + 2 * mb.size + 2 * aw.size
                         + 4 * Bp * N * Cp + param_bytes)

    return pl.pallas_call(
        kernel,
        out_shape=jax.ShapeDtypeStruct((Bp, N, Cp), jnp.float32),
        grid_spec=pltpu.PrefetchScalarGridSpec(
            num_scalar_prefetch=0,
            grid=(nblk,),
            in_specs=in_specs,
            out_specs=pl.BlockSpec((block_b, N, Cp), lambda g: (g, 0, 0)),
        ),
        compiler_params=pltpu.CompilerParams(
            dimension_semantics=("parallel",),      # batch blocks across v7x TCs
            # usage here is ~2 MiB; raise toward 64-100 MiB on v5e/v6e only if
            # N / block_b grow (v7x has 64 MiB physical VMEM).
            vmem_limit_bytes=32 * 1024 * 1024),
        cost_estimate=pl.CostEstimate(flops=flops, transcendentals=transc,
                                      bytes_accessed=bytes_accessed),
    )(xp, mb, aw, p["projW"], p["projb"], p["wsrc"], p["wdst"],
      p["c1"], p["c0"], p["agWa"], p["agWh"], p["agb"],
      p["q"], p["kW"], p["kb"])


@functools.partial(jax.jit, static_argnames=("node_num",))
def hstg_attn_forward(x, mask_bias, adj_weight, params, *, node_num):
    """x: (B, N, C); mask_bias/adj_weight: (B, 4, N, N) bf16; returns (B, N, C)."""
    B, N, C = x.shape
    Cp = params["projW"].shape[-1]
    # sub-batch blocking: fill the MXU M dim while keeping >= 2 grid steps when
    # possible (v7x megacore split; no-op on single-TC v5e/v6e).
    block_b = max(1, min(8, B // 2)) if B >= 2 else 1
    nblk = -(-B // block_b)
    Bp = nblk * block_b
    xp = jnp.pad(x, ((0, Bp - B), (0, 0), (0, Cp - C)))       # lane-dense channels
    if Bp != B:
        mask_bias = jnp.pad(mask_bias, ((0, Bp - B), (0, 0), (0, 0), (0, 0)))
        adj_weight = jnp.pad(adj_weight, ((0, Bp - B), (0, 0), (0, 0), (0, 0)))
    out = _forward_impl(xp, mask_bias, adj_weight, params, node_num, block_b)
    return out[:B, :, :C]


# -----------------------------------------------------------------------------
# Host-side structural glue: dense adjacency built once, before the forward
# -----------------------------------------------------------------------------

def build_dense_adjacency(edge_index, edge_attr, node_num, n_nodes):
    """Per-edge-type additive mask bias (0 edge / -1e30 none) and edge weights,
    both (B, 4, N, N) bf16, edge-type order [s2s, t2t, s2t, t2s]."""
    edge_index = np.asarray(edge_index)
    edge_attr = np.asarray(edge_attr, np.float32)
    B = edge_index.shape[0]
    MB = np.full((B, 4, n_nodes, n_nodes), _MASK_OFF, np.float32)
    W = np.zeros((B, 4, n_nodes, n_nodes), np.float32)
    for b in range(B):
        src, dst, w = edge_index[b, 0], edge_index[b, 1], edge_attr[b]
        s_src, s_dst = src < node_num, dst < node_num
        for e, m in enumerate([s_src & s_dst, ~s_src & ~s_dst,
                               s_src & ~s_dst, ~s_src & s_dst]):
            # TODO(synk): duplicate parallel edges of one type collapse
            # (last-write-wins) in the dense form; exact only for simple graphs.
            MB[b, e, dst[m], src[m]] = 0.0
            W[b, e, dst[m], src[m]] = w[m]
    return jnp.asarray(MB, jnp.bfloat16), jnp.asarray(W, jnp.bfloat16)


# -----------------------------------------------------------------------------
# Parameter initialization (deterministic, synthetic; padded to LANE channels)
# -----------------------------------------------------------------------------

def _init_linear(key, cin, cout):
    k1, k2 = jax.random.split(key)
    s = 1.0 / math.sqrt(cin)
    W = jax.random.uniform(k1, (cout, cin), jnp.float32, -s, s)
    b = jax.random.uniform(k2, (cout,), jnp.float32, -s, s)
    return W, b


def _pad2(a, shape):
    return jnp.zeros(shape, jnp.float32).at[:a.shape[0], :a.shape[1]].set(a)


def _pad_vec(v, n):
    return jnp.zeros((n,), jnp.float32).at[:v.shape[0]].set(v)


def init_conv_params(key, C, Cp):
    """One WeightedHANConv layer; edge_att/edge_proj/lin_src/lin_dst folded into
    per-edge-type score coefficients; matmul weights bf16, padded to Cp lanes."""
    ks = jax.random.split(key, 10)
    g = 1.0 / math.sqrt(C)

    projW, projb = [], []
    for i in range(2):                         # node types: 0='s', 1='t'
        W, b = _init_linear(ks[i], C, C)
        projW.append(_pad2(W.T, (Cp, Cp)))
        projb.append(_pad2(b[None, :], (1, Cp)))

    qs, kWs, kbs = [], [], []
    for i in range(2):
        q = jax.random.normal(ks[2 + i], (1, C), jnp.float32) * g
        W, b = _init_linear(ks[4 + i], C, C)
        qs.append(_pad2(q, (1, Cp)))
        kWs.append(_pad2(W.T, (Cp, Cp)))
        kbs.append(_pad2(b[None, :], (1, Cp)))

    wsrc, wdst, c1s, c0s, agWa, agWh, agbs = [], [], [], [], [], [], []
    for i in range(4):                         # edge types: s2s, t2t, s2t, t2s
        eks = jax.random.split(ks[6 + i], 5)
        lin_src = jax.random.normal(eks[0], (C,), jnp.float32) * g
        lin_dst = jax.random.normal(eks[1], (C,), jnp.float32) * g
        ep_W, ep_b = _init_linear(eks[2], 1, C)        # edge_proj: Linear(1, C)
        ea_W, ea_b = _init_linear(eks[3], 3 * C, C)    # edge_att : Linear(3C, C)
        ag_W, ag_b = _init_linear(eks[4], 2 * C, C)    # agg_lin  : Linear(2C, C)

        # Exact fold (f32): score = <h_dst, wdst> + <h_src, wsrc> + c1*edge_w + c0
        wsum = jnp.sum(ea_W, axis=0)                   # (3C,)
        wsrc.append(_pad_vec(lin_src * wsum[:C], Cp))
        wdst.append(_pad_vec(lin_dst * wsum[C:2 * C], Cp))
        ws_e = wsum[2 * C:]
        c1s.append(jnp.dot(ep_W[:, 0], ws_e))
        c0s.append(jnp.dot(ep_b, ws_e) + jnp.sum(ea_b))

        agT = ag_W.T                                   # (2C, C)
        agWa.append(_pad2(agT[:C], (Cp, Cp)))          # acts on aggr
        agWh.append(_pad2(agT[C:], (Cp, Cp)))          # acts on h_dst
        agbs.append(_pad2(ag_b[None, :], (1, Cp)))

    bf = jnp.bfloat16
    return dict(
        projW=jnp.stack(projW).astype(bf), projb=jnp.stack(projb),
        q=jnp.stack(qs), kW=jnp.stack(kWs).astype(bf), kb=jnp.stack(kbs),
        wsrc=jnp.stack(wsrc).astype(bf), wdst=jnp.stack(wdst).astype(bf),
        c1=jnp.stack(c1s).reshape(4, 1, 1), c0=jnp.stack(c0s).reshape(4, 1, 1),
        agWa=jnp.stack(agWa).astype(bf), agWh=jnp.stack(agWh).astype(bf),
        agb=jnp.stack(agbs),
    )


def init_params(key, C, n_layers, lane=LANE):
    """Per-layer params stacked on a leading L axis for the single fused kernel."""
    Cp = ((C + lane - 1) // lane) * lane
    keys = jax.random.split(key, n_layers)
    per_layer = [init_conv_params(k, C, Cp) for k in keys]
    return {name: jnp.stack([pl_[name] for pl_ in per_layer])
            for name in per_layer[0]}


# -----------------------------------------------------------------------------
# Example run
# -----------------------------------------------------------------------------

if __name__ == "__main__":
    node_num = 8     # spatial ('s') nodes
    seq_len = 8      # temporal ('t') nodes
    C = 32           # in_channels == hidden_channels == out_channels
    B = 2
    n_layers = 2

    key = jax.random.PRNGKey(0)
    kx, kw, kp = jax.random.split(key, 3)

    N = node_num + seq_len
    x = jax.random.normal(kx, (B, N, C), jnp.float32)

    # deterministic edge set covering all four edge types (no duplicates)
    s2s = [(i, (i + 1) % node_num) for i in range(node_num)] + \
          [(i, (i + 3) % node_num) for i in range(node_num)]
    t2t = [(node_num + i, node_num + (i + 1) % seq_len) for i in range(seq_len)]
    s2t = [(i, node_num + i) for i in range(node_num)]
    t2s = [(node_num + i, (i + 5) % node_num) for i in range(seq_len)]
    edges = s2s + t2t + s2t + t2s
    E = len(edges)
    ei = np.array(edges, np.int32).T                         # (2, E)
    edge_index = np.stack([ei] * B)                          # (B, 2, E)
    edge_attr = np.asarray(
        jax.random.uniform(kw, (B, E), jnp.float32))         # (B, E)

    params = init_params(kp, C, n_layers)
    mask_bias, adj_weight = build_dense_adjacency(edge_index, edge_attr,
                                                  node_num, N)

    out = hstg_attn_forward(x, mask_bias, adj_weight, params, node_num=node_num)
    out = jax.block_until_ready(out)
    assert out.shape == (B, N, C), out.shape
    assert bool(jnp.all(jnp.isfinite(out)))
    print("KERNEL_OK")
</pallas_src>

<mosaic_0001>
module attributes {stable_mosaic.version = 11 : i64} {
  func.func @_fused_kernel(%arg0: i32, %arg1: memref<1x16x128xf32, #tpu.memory_space<vmem>>, %arg2: memref<1x4x16x16xbf16, #tpu.memory_space<vmem>>, %arg3: memref<1x4x16x16xbf16, #tpu.memory_space<vmem>>, %arg4: memref<2x2x128x128xbf16, #tpu.memory_space<vmem>>, %arg5: memref<2x2x1x128xf32, #tpu.memory_space<vmem>>, %arg6: memref<2x4x128xbf16, #tpu.memory_space<vmem>>, %arg7: memref<2x4x128xbf16, #tpu.memory_space<vmem>>, %arg8: memref<2x4x1x1xf32, #tpu.memory_space<vmem>>, %arg9: memref<2x4x1x1xf32, #tpu.memory_space<vmem>>, %arg10: memref<2x4x128x128xbf16, #tpu.memory_space<vmem>>, %arg11: memref<2x4x128x128xbf16, #tpu.memory_space<vmem>>, %arg12: memref<2x4x1x128xf32, #tpu.memory_space<vmem>>, %arg13: memref<2x2x1x128xf32, #tpu.memory_space<vmem>>, %arg14: memref<2x2x128x128xbf16, #tpu.memory_space<vmem>>, %arg15: memref<2x2x1x128xf32, #tpu.memory_space<vmem>>, %arg16: memref<1x16x128xf32, #tpu.memory_space<vmem>>) attributes {dimension_semantics = [#tpu.dimension_semantics<parallel>], iteration_bounds = array<i64: 2>, scalar_prefetch = 0 : i64, scratch_operands = 0 : i64, tpu.core_type = #tpu.core_type<tc>, window_params = [{transform_indices = @transform_0, window_bounds = array<i64: 1, 16, 128>}, {transform_indices = @transform_1, window_bounds = array<i64: 1, 4, 16, 16>}, {transform_indices = @transform_2, window_bounds = array<i64: 1, 4, 16, 16>}, {pipeline_mode = #tpu.pipeline_mode<synchronous>, transform_indices = @transform_3, window_bounds = array<i64: 2, 2, 128, 128>}, {pipeline_mode = #tpu.pipeline_mode<synchronous>, transform_indices = @transform_4, window_bounds = array<i64: 2, 2, 1, 128>}, {pipeline_mode = #tpu.pipeline_mode<synchronous>, transform_indices = @transform_5, window_bounds = array<i64: 2, 4, 128>}, {pipeline_mode = #tpu.pipeline_mode<synchronous>, transform_indices = @transform_6, window_bounds = array<i64: 2, 4, 128>}, {pipeline_mode = #tpu.pipeline_mode<synchronous>, transform_indices = @transform_7, window_bounds = array<i64: 2, 4, 1, 1>}, {pipeline_mode = #tpu.pipeline_mode<synchronous>, transform_indices = @transform_8, window_bounds = array<i64: 2, 4, 1, 1>}, {pipeline_mode = #tpu.pipeline_mode<synchronous>, transform_indices = @transform_9, window_bounds = array<i64: 2, 4, 128, 128>}, {pipeline_mode = #tpu.pipeline_mode<synchronous>, transform_indices = @transform_10, window_bounds = array<i64: 2, 4, 128, 128>}, {pipeline_mode = #tpu.pipeline_mode<synchronous>, transform_indices = @transform_11, window_bounds = array<i64: 2, 4, 1, 128>}, {pipeline_mode = #tpu.pipeline_mode<synchronous>, transform_indices = @transform_12, window_bounds = array<i64: 2, 2, 1, 128>}, {pipeline_mode = #tpu.pipeline_mode<synchronous>, transform_indices = @transform_13, window_bounds = array<i64: 2, 2, 128, 128>}, {pipeline_mode = #tpu.pipeline_mode<synchronous>, transform_indices = @transform_14, window_bounds = array<i64: 2, 2, 1, 128>}, {transform_indices = @transform_15, window_bounds = array<i64: 1, 16, 128>}]} {
    %c0 = arith.constant 0 : index
    %c0_0 = arith.constant 0 : index
    %c0_1 = arith.constant 0 : index
    %0 = vector.load %arg1[%c0, %c0_0, %c0_1] : memref<1x16x128xf32, #tpu.memory_space<vmem>>, vector<1x16x128xf32>
    %1 = vector.extract_strided_slice %0 {offsets = [0, 0, 0], sizes = [1, 8, 128], strides = [1, 1, 1]} : vector<1x16x128xf32> to vector<1x8x128xf32>
    %2 = vector.shape_cast %1 : vector<1x8x128xf32> to vector<8x128xf32>
    %3 = arith.truncf %2 : vector<8x128xf32> to vector<8x128xbf16>
    %4 = vector.extract_strided_slice %0 {offsets = [0, 8, 0], sizes = [1, 8, 128], strides = [1, 1, 1]} : vector<1x16x128xf32> to vector<1x8x128xf32>
    %5 = vector.shape_cast %4 : vector<1x8x128xf32> to vector<8x128xf32>
    %6 = arith.truncf %5 : vector<8x128xf32> to vector<8x128xbf16>
    %c0_2 = arith.constant 0 : index
    %c0_3 = arith.constant 0 : index
    %c0_4 = arith.constant 0 : index
    %c0_5 = arith.constant 0 : index
    %7 = vector.load %arg4[%c0_2, %c0_3, %c0_4, %c0_5] : memref<2x2x128x128xbf16, #tpu.memory_space<vmem>>, vector<1x1x128x128xbf16>
    %8 = vector.shape_cast %7 : vector<1x1x128x128xbf16> to vector<128x128xbf16>
    %cst = arith.constant dense<0.000000e+00> : vector<8x128xf32>
    %9 = tpu.matmul %3, %8, %cst {dimension_numbers = #tpu.dot_dimension_numbers<[1], [0], [0], [1], [0, 0, 1, 1], [], []>} : vector<8x128xbf16>, vector<128x128xbf16>, vector<8x128xf32> -> vector<8x128xf32>
    %c0_6 = arith.constant 0 : index
    %c0_7 = arith.constant 0 : index
    %c0_8 = arith.constant 0 : index
    %c0_9 = arith.constant 0 : index
    %10 = vector.load %arg5[%c0_6, %c0_7, %c0_8, %c0_9] : memref<2x2x1x128xf32, #tpu.memory_space<vmem>>, vector<1x1x1x128xf32>
    %11 = vector.shape_cast %10 : vector<1x1x1x128xf32> to vector<1x128xf32>
    %12 = vector.broadcast %11 : vector<1x128xf32> to vector<8x128xf32>
    %13 = arith.addf %9, %12 : vector<8x128xf32>
    %c0_10 = arith.constant 0 : index
    %c1 = arith.constant 1 : index
    %c0_11 = arith.constant 0 : index
    %c0_12 = arith.constant 0 : index
    %14 = vector.load %arg4[%c0_10, %c1, %c0_11, %c0_12] : memref<2x2x128x128xbf16, #tpu.memory_space<vmem>>, vector<1x1x128x128xbf16>
    %15 = vector.shape_cast %14 : vector<1x1x128x128xbf16> to vector<128x128xbf16>
    %cst_13 = arith.constant dense<0.000000e+00> : vector<8x128xf32>
    %16 = tpu.matmul %6, %15, %cst_13 {dimension_numbers = #tpu.dot_dimension_numbers<[1], [0], [0], [1], [0, 0, 1, 1], [], []>} : vector<8x128xbf16>, vector<128x128xbf16>, vector<8x128xf32> -> vector<8x128xf32>
    %c0_14 = arith.constant 0 : index
    %c1_15 = arith.constant 1 : index
    %c0_16 = arith.constant 0 : index
    %c0_17 = arith.constant 0 : index
    %17 = vector.load %arg5[%c0_14, %c1_15, %c0_16, %c0_17] : memref<2x2x1x128xf32, #tpu.memory_space<vmem>>, vector<1x1x1x128xf32>
    %18 = vector.shape_cast %17 : vector<1x1x1x128xf32> to vector<1x128xf32>
    %19 = vector.broadcast %18 : vector<1x128xf32> to vector<8x128xf32>
    %20 = arith.addf %16, %19 : vector<8x128xf32>
    %21 = vector.shape_cast %13 : vector<8x128xf32> to vector<1x8x128xf32>
    %22 = vector.shape_cast %20 : vector<8x128xf32> to vector<1x8x128xf32>
    %23 = tpu.concatenate %21, %22 in 1 : vector<1x8x128xf32>, vector<1x8x128xf32> -> vector<1x16x128xf32>
    %24 = arith.truncf %23 : vector<1x16x128xf32> to vector<1x16x128xbf16>
    %25 = vector.shape_cast %24 : vector<1x16x128xbf16> to vector<16x128xbf16>
    %c0_18 = arith.constant 0 : index
    %c0_19 = arith.constant 0 : index
    %c0_20 = arith.constant 0 : index
    %26 = vector.load %arg7[%c0_18, %c0_19, %c0_20] : memref<2x4x128xbf16, #tpu.memory_space<vmem>>, vector<1x4x128xbf16>
    %27 = vector.shape_cast %26 : vector<1x4x128xbf16> to vector<4x128xbf16>
    %cst_21 = arith.constant dense<0.000000e+00> : vector<16x4xf32>
    %28 = tpu.matmul %25, %27, %cst_21 {dimension_numbers = #tpu.dot_dimension_numbers<[1], [1], [0], [0], [0, 0, 1, 0], [], []>} : vector<16x128xbf16>, vector<4x128xbf16>, vector<16x4xf32> -> vector<16x4xf32>
    %c0_22 = arith.constant 0 : index
    %c0_23 = arith.constant 0 : index
    %c0_24 = arith.constant 0 : index
    %29 = vector.load %arg6[%c0_22, %c0_23, %c0_24] : memref<2x4x128xbf16, #tpu.memory_space<vmem>>, vector<1x4x128xbf16>
    %30 = vector.shape_cast %29 : vector<1x4x128xbf16> to vector<4x128xbf16>
    %cst_25 = arith.constant dense<0.000000e+00> : vector<4x16xf32>
    %31 = tpu.matmul %30, %25, %cst_25 {dimension_numbers = #tpu.dot_dimension_numbers<[1], [1], [0], [0], [0, 0, 1, 0], [], []>} : vector<4x128xbf16>, vector<16x128xbf16>, vector<4x16xf32> -> vector<4x16xf32>
    %c0_26 = arith.constant 0 : index
    %c0_27 = arith.constant 0 : index
    %c0_28 = arith.constant 0 : index
    %c0_29 = arith.constant 0 : index
    %32 = vector.load %arg3[%c0_26, %c0_27, %c0_28, %c0_29] : memref<1x4x16x16xbf16, #tpu.memory_space<vmem>>, vector<1x1x16x16xbf16>
    %33 = vector.shape_cast %32 : vector<1x1x16x16xbf16> to vector<16x16xbf16>
    %34 = arith.extf %33 : vector<16x16xbf16> to vector<16x16xf32>
    %c0_30 = arith.constant 0 : index
    %c0_31 = arith.constant 0 : index
    %c0_32 = arith.constant 0 : index
    %c0_33 = arith.constant 0 : index
    %35 = vector.load %arg2[%c0_30, %c0_31, %c0_32, %c0_33] : memref<1x4x16x16xbf16, #tpu.memory_space<vmem>>, vector<1x1x16x16xbf16>
    %36 = vector.shape_cast %35 : vector<1x1x16x16xbf16> to vector<16x16xbf16>
    %37 = arith.extf %36 : vector<16x16xbf16> to vector<16x16xf32>
    %38 = vector.extract_strided_slice %28 {offsets = [0, 0], sizes = [8, 1], strides = [1, 1]} : vector<16x4xf32> to vector<8x1xf32>
    %39 = vector.extract_strided_slice %31 {offsets = [0, 0], sizes = [1, 16], strides = [1, 1]} : vector<4x16xf32> to vector<1x16xf32>
    %40 = vector.broadcast %38 : vector<8x1xf32> to vector<8x16xf32>
    %41 = vector.broadcast %39 : vector<1x16xf32> to vector<8x16xf32>
    %42 = arith.addf %40, %41 : vector<8x16xf32>
    %c0_34 = arith.constant 0 : index
    %c0_35 = arith.constant 0 : index
    %c0_36 = arith.constant 0 : index
    %c0_37 = arith.constant 0 : index
    %43 = vector.load %arg8[%c0_34, %c0_35, %c0_36, %c0_37] : memref<2x4x1x1xf32, #tpu.memory_space<vmem>>, vector<1x1x1x1xf32>
    %44 = vector.shape_cast %43 : vector<1x1x1x1xf32> to vector<1x1xf32>
    %45 = vector.extract_strided_slice %34 {offsets = [0, 0], sizes = [8, 16], strides = [1, 1]} : vector<16x16xf32> to vector<8x16xf32>
    %46 = vector.broadcast %44 : vector<1x1xf32> to vector<8x16xf32>
    %47 = arith.mulf %46, %45 : vector<8x16xf32>
    %48 = arith.addf %42, %47 : vector<8x16xf32>
    %c0_38 = arith.constant 0 : index
    %c0_39 = arith.constant 0 : index
    %c0_40 = arith.constant 0 : index
    %c0_41 = arith.constant 0 : index
    %49 = vector.load %arg9[%c0_38, %c0_39, %c0_40, %c0_41] : memref<2x4x1x1xf32, #tpu.memory_space<vmem>>, vector<1x1x1x1xf32>
    %50 = vector.shape_cast %49 : vector<1x1x1x1xf32> to vector<1x1xf32>
    %51 = vector.broadcast %50 : vector<1x1xf32> to vector<8x16xf32>
    %52 = arith.addf %48, %51 : vector<8x16xf32>
    %cst_42 = arith.constant 2.000000e-01 : f32
    %53 = vector.broadcast %cst_42 : f32 to vector<8x16xf32>
    %54 = arith.mulf %53, %52 : vector<8x16xf32>
    %55 = arith.maximumf %52, %54 : vector<8x16xf32>
    %56 = vector.extract_strided_slice %37 {offsets = [0, 0], sizes = [8, 16], strides = [1, 1]} : vector<16x16xf32> to vector<8x16xf32>
    %57 = arith.addf %55, %56 : vector<8x16xf32>
    %cst_43 = arith.constant dense<0xFF800000> : vector<8xf32>
    %58 = vector.multi_reduction <maximumf>, %57, %cst_43 [1] : vector<8x16xf32> to vector<8xf32>
    %59 = vector.shape_cast %58 : vector<8xf32> to vector<8x1xf32>
    %cst_44 = arith.constant -1.000000e+29 : f32
    %60 = vector.broadcast %cst_44 : f32 to vector<8x1xf32>
    %61 = arith.cmpf ogt, %59, %60 : vector<8x1xf32>
    %cst_45 = arith.constant 0.000000e+00 : f32
    %62 = vector.broadcast %cst_45 : f32 to vector<8x1xf32>
    %63 = arith.select %61, %59, %62 : vector<8x1xi1>, vector<8x1xf32>
    %64 = vector.broadcast %63 : vector<8x1xf32> to vector<8x16xf32>
    %65 = arith.subf %57, %64 : vector<8x16xf32>
    %66 = math.exp %65 : vector<8x16xf32>
    %cst_46 = arith.constant dense<0.000000e+00> : vector<8xf32>
    %67 = vector.multi_reduction <add>, %66, %cst_46 [1] : vector<8x16xf32> to vector<8xf32>
    %68 = vector.shape_cast %67 : vector<8xf32> to vector<8x1xf32>
    %cst_47 = arith.constant 0.000000e+00 : f32
    %69 = vector.broadcast %cst_47 : f32 to vector<8x1xf32>
    %70 = arith.cmpf ogt, %68, %69 : vector<8x1xf32>
    %cst_48 = arith.constant 1.000000e+00 : f32
    %71 = vector.broadcast %cst_48 : f32 to vector<8x1xf32>
    %72 = arith.select %70, %68, %71 : vector<8x1xi1>, vector<8x1xf32>
    %73 = tpu.reciprocal %72 {approx = true} : vector<8x1xf32> -> vector<8x1xf32>
    %74 = vector.broadcast %73 : vector<8x1xf32> to vector<8x16xf32>
    %75 = arith.mulf %66, %74 : vector<8x16xf32>
    %76 = arith.truncf %75 : vector<8x16xf32> to vector<8x16xbf16>
    %cst_49 = arith.constant dense<0.000000e+00> : vector<8x128xf32>
    %77 = tpu.matmul %76, %25, %cst_49 {dimension_numbers = #tpu.dot_dimension_numbers<[1], [0], [0], [1], [0, 0, 1, 1], [], []>} : vector<8x16xbf16>, vector<16x128xbf16>, vector<8x128xf32> -> vector<8x128xf32>
    %c0_50 = arith.constant 0 : index
    %c1_51 = arith.constant 1 : index
    %c0_52 = arith.constant 0 : index
    %c0_53 = arith.constant 0 : index
    %78 = vector.load %arg3[%c0_50, %c1_51, %c0_52, %c0_53] : memref<1x4x16x16xbf16, #tpu.memory_space<vmem>>, vector<1x1x16x16xbf16>
    %79 = vector.shape_cast %78 : vector<1x1x16x16xbf16> to vector<16x16xbf16>
    %80 = arith.extf %79 : vector<16x16xbf16> to vector<16x16xf32>
    %c0_54 = arith.constant 0 : index
    %c1_55 = arith.constant 1 : index
    %c0_56 = arith.constant 0 : index
    %c0_57 = arith.constant 0 : index
    %81 = vector.load %arg2[%c0_54, %c1_55, %c0_56, %c0_57] : memref<1x4x16x16xbf16, #tpu.memory_space<vmem>>, vector<1x1x16x16xbf16>
    %82 = vector.shape_cast %81 : vector<1x1x16x16xbf16> to vector<16x16xbf16>
    %83 = arith.extf %82 : vector<16x16xbf16> to vector<16x16xf32>
    %84 = vector.extract_strided_slice %28 {offsets = [8, 1], sizes = [8, 1], strides = [1, 1]} : vector<16x4xf32> to vector<8x1xf32>
    %85 = vector.extract_strided_slice %31 {offsets = [1, 0], sizes = [1, 16], strides = [1, 1]} : vector<4x16xf32> to vector<1x16xf32>
    %86 = vector.broadcast %84 : vector<8x1xf32> to vector<8x16xf32>
    %87 = vector.broadcast %85 : vector<1x16xf32> to vector<8x16xf32>
    %88 = arith.addf %86, %87 : vector<8x16xf32>
    %c0_58 = arith.constant 0 : index
    %c1_59 = arith.constant 1 : index
    %c0_60 = arith.constant 0 : index
    %c0_61 = arith.constant 0 : index
    %89 = vector.load %arg8[%c0_58, %c1_59, %c0_60, %c0_61] : memref<2x4x1x1xf32, #tpu.memory_space<vmem>>, vector<1x1x1x1xf32>
    %90 = vector.shape_cast %89 : vector<1x1x1x1xf32> to vector<1x1xf32>
    %91 = vector.extract_strided_slice %80 {offsets = [8, 0], sizes = [8, 16], strides = [1, 1]} : vector<16x16xf32> to vector<8x16xf32>
    %92 = vector.broadcast %90 : vector<1x1xf32> to vector<8x16xf32>
    %93 = arith.mulf %92, %91 : vector<8x16xf32>
    %94 = arith.addf %88, %93 : vector<8x16xf32>
    %c0_62 = arith.constant 0 : index
    %c1_63 = arith.constant 1 : index
    %c0_64 = arith.constant 0 : index
    %c0_65 = arith.constant 0 : index
    %95 = vector.load %arg9[%c0_62, %c1_63, %c0_64, %c0_65] : memref<2x4x1x1xf32, #tpu.memory_space<vmem>>, vector<1x1x1x1xf32>
    %96 = vector.shape_cast %95 : vector<1x1x1x1xf32> to vector<1x1xf32>
    %97 = vector.broadcast %96 : vector<1x1xf32> to vector<8x16xf32>
    %98 = arith.addf %94, %97 : vector<8x16xf32>
    %cst_66 = arith.constant 2.000000e-01 : f32
    %99 = vector.broadcast %cst_66 : f32 to vector<8x16xf32>
    %100 = arith.mulf %99, %98 : vector<8x16xf32>
    %101 = arith.maximumf %98, %100 : vector<8x16xf32>
    %102 = vector.extract_strided_slice %83 {offsets = [8, 0], sizes = [8, 16], strides = [1, 1]} : vector<16x16xf32> to vector<8x16xf32>
    %103 = arith.addf %101, %102 : vector<8x16xf32>
    %cst_67 = arith.constant dense<0xFF800000> : vector<8xf32>
    %104 = vector.multi_reduction <maximumf>, %103, %cst_67 [1] : vector<8x16xf32> to vector<8xf32>
    %105 = vector.shape_cast %104 : vector<8xf32> to vector<8x1xf32>
    %cst_68 = arith.constant -1.000000e+29 : f32
    %106 = vector.broadcast %cst_68 : f32 to vector<8x1xf32>
    %107 = arith.cmpf ogt, %105, %106 : vector<8x1xf32>
    %cst_69 = arith.constant 0.000000e+00 : f32
    %108 = vector.broadcast %cst_69 : f32 to vector<8x1xf32>
    %109 = arith.select %107, %105, %108 : vector<8x1xi1>, vector<8x1xf32>
    %110 = vector.broadcast %109 : vector<8x1xf32> to vector<8x16xf32>
    %111 = arith.subf %103, %110 : vector<8x16xf32>
    %112 = math.exp %111 : vector<8x16xf32>
    %cst_70 = arith.constant dense<0.000000e+00> : vector<8xf32>
    %113 = vector.multi_reduction <add>, %112, %cst_70 [1] : vector<8x16xf32> to vector<8xf32>
    %114 = vector.shape_cast %113 : vector<8xf32> to vector<8x1xf32>
    %cst_71 = arith.constant 0.000000e+00 : f32
    %115 = vector.broadcast %cst_71 : f32 to vector<8x1xf32>
    %116 = arith.cmpf ogt, %114, %115 : vector<8x1xf32>
    %cst_72 = arith.constant 1.000000e+00 : f32
    %117 = vector.broadcast %cst_72 : f32 to vector<8x1xf32>
    %118 = arith.select %116, %114, %117 : vector<8x1xi1>, vector<8x1xf32>
    %119 = tpu.reciprocal %118 {approx = true} : vector<8x1xf32> -> vector<8x1xf32>
    %120 = vector.broadcast %119 : vector<8x1xf32> to vector<8x16xf32>
    %121 = arith.mulf %112, %120 : vector<8x16xf32>
    %122 = arith.truncf %121 : vector<8x16xf32> to vector<8x16xbf16>
    %cst_73 = arith.constant dense<0.000000e+00> : vector<8x128xf32>
    %123 = tpu.matmul %122, %25, %cst_73 {dimension_numbers = #tpu.dot_dimension_numbers<[1], [0], [0], [1], [0, 0, 1, 1], [], []>} : vector<8x16xbf16>, vector<16x128xbf16>, vector<8x128xf32> -> vector<8x128xf32>
    %c0_74 = arith.constant 0 : index
    %c2 = arith.constant 2 : index
    %c0_75 = arith.constant 0 : index
    %c0_76 = arith.constant 0 : index
    %124 = vector.load %arg3[%c0_74, %c2, %c0_75, %c0_76] : memref<1x4x16x16xbf16, #tpu.memory_space<vmem>>, vector<1x1x16x16xbf16>
    %125 = vector.shape_cast %124 : vector<1x1x16x16xbf16> to vector<16x16xbf16>
    %126 = arith.extf %125 : vector<16x16xbf16> to vector<16x16xf32>
    %c0_77 = arith.constant 0 : index
    %c2_78 = arith.constant 2 : index
    %c0_79 = arith.constant 0 : index
    %c0_80 = arith.constant 0 : index
    %127 = vector.load %arg2[%c0_77, %c2_78, %c0_79, %c0_80] : memref<1x4x16x16xbf16, #tpu.memory_space<vmem>>, vector<1x1x16x16xbf16>
    %128 = vector.shape_cast %127 : vector<1x1x16x16xbf16> to vector<16x16xbf16>
    %129 = arith.extf %128 : vector<16x16xbf16> to vector<16x16xf32>
    %130 = vector.extract_strided_slice %28 {offsets = [8, 2], sizes = [8, 1], strides = [1, 1]} : vector<16x4xf32> to vector<8x1xf32>
    %131 = vector.extract_strided_slice %31 {offsets = [2, 0], sizes = [1, 16], strides = [1, 1]} : vector<4x16xf32> to vector<1x16xf32>
    %132 = vector.broadcast %130 : vector<8x1xf32> to vector<8x16xf32>
    %133 = vector.broadcast %131 : vector<1x16xf32> to vector<8x16xf32>
    %134 = arith.addf %132, %133 : vector<8x16xf32>
    %c0_81 = arith.constant 0 : index
    %c2_82 = arith.constant 2 : index
    %c0_83 = arith.constant 0 : index
    %c0_84 = arith.constant 0 : index
    %135 = vector.load %arg8[%c0_81, %c2_82, %c0_83, %c0_84] : memref<2x4x1x1xf32, #tpu.memory_space<vmem>>, vector<1x1x1x1xf32>
    %136 = vector.shape_cast %135 : vector<1x1x1x1xf32> to vector<1x1xf32>
    %137 = vector.extract_strided_slice %126 {offsets = [8, 0], sizes = [8, 16], strides = [1, 1]} : vector<16x16xf32> to vector<8x16xf32>
    %138 = vector.broadcast %136 : vector<1x1xf32> to vector<8x16xf32>
    %139 = arith.mulf %138, %137 : vector<8x16xf32>
    %140 = arith.addf %134, %139 : vector<8x16xf32>
    %c0_85 = arith.constant 0 : index
    %c2_86 = arith.constant 2 : index
    %c0_87 = arith.constant 0 : index
    %c0_88 = arith.constant 0 : index
    %141 = vector.load %arg9[%c0_85, %c2_86, %c0_87, %c0_88] : memref<2x4x1x1xf32, #tpu.memory_space<vmem>>, vector<1x1x1x1xf32>
    %142 = vector.shape_cast %141 : vector<1x1x1x1xf32> to vector<1x1xf32>
    %143 = vector.broadcast %142 : vector<1x1xf32> to vector<8x16xf32>
    %144 = arith.addf %140, %143 : vector<8x16xf32>
    %cst_89 = arith.constant 2.000000e-01 : f32
    %145 = vector.broadcast %cst_89 : f32 to vector<8x16xf32>
    %146 = arith.mulf %145, %144 : vector<8x16xf32>
    %147 = arith.maximumf %144, %146 : vector<8x16xf32>
    %148 = vector.extract_strided_slice %129 {offsets = [8, 0], sizes = [8, 16], strides = [1, 1]} : vector<16x16xf32> to vector<8x16xf32>
    %149 = arith.addf %147, %148 : vector<8x16xf32>
    %cst_90 = arith.constant dense<0xFF800000> : vector<8xf32>
    %150 = vector.multi_reduction <maximumf>, %149, %cst_90 [1] : vector<8x16xf32> to vector<8xf32>
    %151 = vector.shape_cast %150 : vector<8xf32> to vector<8x1xf32>
    %cst_91 = arith.constant -1.000000e+29 : f32
    %152 = vector.broadcast %cst_91 : f32 to vector<8x1xf32>
    %153 = arith.cmpf ogt, %151, %152 : vector<8x1xf32>
    %cst_92 = arith.constant 0.000000e+00 : f32
    %154 = vector.broadcast %cst_92 : f32 to vector<8x1xf32>
    %155 = arith.select %153, %151, %154 : vector<8x1xi1>, vector<8x1xf32>
    %156 = vector.broadcast %155 : vector<8x1xf32> to vector<8x16xf32>
    %157 = arith.subf %149, %156 : vector<8x16xf32>
    %158 = math.exp %157 : vector<8x16xf32>
    %cst_93 = arith.constant dense<0.000000e+00> : vector<8xf32>
    %159 = vector.multi_reduction <add>, %158, %cst_93 [1] : vector<8x16xf32> to vector<8xf32>
    %160 = vector.shape_cast %159 : vector<8xf32> to vector<8x1xf32>
    %cst_94 = arith.constant 0.000000e+00 : f32
    %161 = vector.broadcast %cst_94 : f32 to vector<8x1xf32>
    %162 = arith.cmpf ogt, %160, %161 : vector<8x1xf32>
    %cst_95 = arith.constant 1.000000e+00 : f32
    %163 = vector.broadcast %cst_95 : f32 to vector<8x1xf32>
    %164 = arith.select %162, %160, %163 : vector<8x1xi1>, vector<8x1xf32>
    %165 = tpu.reciprocal %164 {approx = true} : vector<8x1xf32> -> vector<8x1xf32>
    %166 = vector.broadcast %165 : vector<8x1xf32> to vector<8x16xf32>
    %167 = arith.mulf %158, %166 : vector<8x16xf32>
    %168 = arith.truncf %167 : vector<8x16xf32> to vector<8x16xbf16>
    %cst_96 = arith.constant dense<0.000000e+00> : vector<8x128xf32>
    %169 = tpu.matmul %168, %25, %cst_96 {dimension_numbers = #tpu.dot_dimension_numbers<[1], [0], [0], [1], [0, 0, 1, 1], [], []>} : vector<8x16xbf16>, vector<16x128xbf16>, vector<8x128xf32> -> vector<8x128xf32>
    %c0_97 = arith.constant 0 : index
    %c3 = arith.constant 3 : index
    %c0_98 = arith.constant 0 : index
    %c0_99 = arith.constant 0 : index
    %170 = vector.load %arg3[%c0_97, %c3, %c0_98, %c0_99] : memref<1x4x16x16xbf16, #tpu.memory_space<vmem>>, vector<1x1x16x16xbf16>
    %171 = vector.shape_cast %170 : vector<1x1x16x16xbf16> to vector<16x16xbf16>
    %172 = arith.extf %171 : vector<16x16xbf16> to vector<16x16xf32>
    %c0_100 = arith.constant 0 : index
    %c3_101 = arith.constant 3 : index
    %c0_102 = arith.constant 0 : index
    %c0_103 = arith.constant 0 : index
    %173 = vector.load %arg2[%c0_100, %c3_101, %c0_102, %c0_103] : memref<1x4x16x16xbf16, #tpu.memory_space<vmem>>, vector<1x1x16x16xbf16>
    %174 = vector.shape_cast %173 : vector<1x1x16x16xbf16> to vector<16x16xbf16>
    %175 = arith.extf %174 : vector<16x16xbf16> to vector<16x16xf32>
    %176 = vector.extract_strided_slice %28 {offsets = [0, 3], sizes = [8, 1], strides = [1, 1]} : vector<16x4xf32> to vector<8x1xf32>
    %177 = vector.extract_strided_slice %31 {offsets = [3, 0], sizes = [1, 16], strides = [1, 1]} : vector<4x16xf32> to vector<1x16xf32>
    %178 = vector.broadcast %176 : vector<8x1xf32> to vector<8x16xf32>
    %179 = vector.broadcast %177 : vector<1x16xf32> to vector<8x16xf32>
    %180 = arith.addf %178, %179 : vector<8x16xf32>
    %c0_104 = arith.constant 0 : index
    %c3_105 = arith.constant 3 : index
    %c0_106 = arith.constant 0 : index
    %c0_107 = arith.constant 0 : index
    %181 = vector.load %arg8[%c0_104, %c3_105, %c0_106, %c0_107] : memref<2x4x1x1xf32, #tpu.memory_space<vmem>>, vector<1x1x1x1xf32>
    %182 = vector.shape_cast %181 : vector<1x1x1x1xf32> to vector<1x1xf32>
    %183 = vector.extract_strided_slice %172 {offsets = [0, 0], sizes = [8, 16], strides = [1, 1]} : vector<16x16xf32> to vector<8x16xf32>
    %184 = vector.broadcast %182 : vector<1x1xf32> to vector<8x16xf32>
    %185 = arith.mulf %184, %183 : vector<8x16xf32>
    %186 = arith.addf %180, %185 : vector<8x16xf32>
    %c0_108 = arith.constant 0 : index
    %c3_109 = arith.constant 3 : index
    %c0_110 = arith.constant 0 : index
    %c0_111 = arith.constant 0 : index
    %187 = vector.load %arg9[%c0_108, %c3_109, %c0_110, %c0_111] : memref<2x4x1x1xf32, #tpu.memory_space<vmem>>, vector<1x1x1x1xf32>
    %188 = vector.shape_cast %187 : vector<1x1x1x1xf32> to vector<1x1xf32>
    %189 = vector.broadcast %188 : vector<1x1xf32> to vector<8x16xf32>
    %190 = arith.addf %186, %189 : vector<8x16xf32>
    %cst_112 = arith.constant 2.000000e-01 : f32
    %191 = vector.broadcast %cst_112 : f32 to vector<8x16xf32>
    %192 = arith.mulf %191, %190 : vector<8x16xf32>
    %193 = arith.maximumf %190, %192 : vector<8x16xf32>
    %194 = vector.extract_strided_slice %175 {offsets = [0, 0], sizes = [8, 16], strides = [1, 1]} : vector<16x16xf32> to vector<8x16xf32>
    %195 = arith.addf %193, %194 : vector<8x16xf32>
    %cst_113 = arith.constant dense<0xFF800000> : vector<8xf32>
    %196 = vector.multi_reduction <maximumf>, %195, %cst_113 [1] : vector<8x16xf32> to vector<8xf32>
    %197 = vector.shape_cast %196 : vector<8xf32> to vector<8x1xf32>
    %cst_114 = arith.constant -1.000000e+29 : f32
    %198 = vector.broadcast %cst_114 : f32 to vector<8x1xf32>
    %199 = arith.cmpf ogt, %197, %198 : vector<8x1xf32>
    %cst_115 = arith.constant 0.000000e+00 : f32
    %200 = vector.broadcast %cst_115 : f32 to vector<8x1xf32>
    %201 = arith.select %199, %197, %200 : vector<8x1xi1>, vector<8x1xf32>
    %202 = vector.broadcast %201 : vector<8x1xf32> to vector<8x16xf32>
    %203 = arith.subf %195, %202 : vector<8x16xf32>
    %204 = math.exp %203 : vector<8x16xf32>
    %cst_116 = arith.constant dense<0.000000e+00> : vector<8xf32>
    %205 = vector.multi_reduction <add>, %204, %cst_116 [1] : vector<8x16xf32> to vector<8xf32>
    %206 = vector.shape_cast %205 : vector<8xf32> to vector<8x1xf32>
    %cst_117 = arith.constant 0.000000e+00 : f32
    %207 = vector.broadcast %cst_117 : f32 to vector<8x1xf32>
    %208 = arith.cmpf ogt, %206, %207 : vector<8x1xf32>
    %cst_118 = arith.constant 1.000000e+00 : f32
    %209 = vector.broadcast %cst_118 : f32 to vector<8x1xf32>
    %210 = arith.select %208, %206, %209 : vector<8x1xi1>, vector<8x1xf32>
    %211 = tpu.reciprocal %210 {approx = true} : vector<8x1xf32> -> vector<8x1xf32>
    %212 = vector.broadcast %211 : vector<8x1xf32> to vector<8x16xf32>
    %213 = arith.mulf %204, %212 : vector<8x16xf32>
    %214 = arith.truncf %213 : vector<8x16xf32> to vector<8x16xbf16>
    %cst_119 = arith.constant dense<0.000000e+00> : vector<8x128xf32>
    %215 = tpu.matmul %214, %25, %cst_119 {dimension_numbers = #tpu.dot_dimension_numbers<[1], [0], [0], [1], [0, 0, 1, 1], [], []>} : vector<8x16xbf16>, vector<16x128xbf16>, vector<8x128xf32> -> vector<8x128xf32>
    %216 = arith.truncf %77 : vector<8x128xf32> to vector<8x128xbf16>
    %217 = vector.extract_strided_slice %23 {offsets = [0, 0, 0], sizes = [1, 8, 128], strides = [1, 1, 1]} : vector<1x16x128xf32> to vector<1x8x128xf32>
    %218 = vector.shape_cast %217 : vector<1x8x128xf32> to vector<8x128xf32>
    %219 = arith.truncf %218 : vector<8x128xf32> to vector<8x128xbf16>
    %c0_120 = arith.constant 0 : index
    %c0_121 = arith.constant 0 : index
    %c0_122 = arith.constant 0 : index
    %c0_123 = arith.constant 0 : index
    %220 = vector.load %arg10[%c0_120, %c0_121, %c0_122, %c0_123] : memref<2x4x128x128xbf16, #tpu.memory_space<vmem>>, vector<1x1x128x128xbf16>
    %221 = vector.shape_cast %220 : vector<1x1x128x128xbf16> to vector<128x128xbf16>
    %cst_124 = arith.constant dense<0.000000e+00> : vector<8x128xf32>
    %222 = tpu.matmul %216, %221, %cst_124 {dimension_numbers = #tpu.dot_dimension_numbers<[1], [0], [0], [1], [0, 0, 1, 1], [], []>} : vector<8x128xbf16>, vector<128x128xbf16>, vector<8x128xf32> -> vector<8x128xf32>
    %c0_125 = arith.constant 0 : index
    %c0_126 = arith.constant 0 : index
    %c0_127 = arith.constant 0 : index
    %c0_128 = arith.constant 0 : index
    %223 = vector.load %arg11[%c0_125, %c0_126, %c0_127, %c0_128] : memref<2x4x128x128xbf16, #tpu.memory_space<vmem>>, vector<1x1x128x128xbf16>
    %224 = vector.shape_cast %223 : vector<1x1x128x128xbf16> to vector<128x128xbf16>
    %cst_129 = arith.constant dense<0.000000e+00> : vector<8x128xf32>
    %225 = tpu.matmul %219, %224, %cst_129 {dimension_numbers = #tpu.dot_dimension_numbers<[1], [0], [0], [1], [0, 0, 1, 1], [], []>} : vector<8x128xbf16>, vector<128x128xbf16>, vector<8x128xf32> -> vector<8x128xf32>
    %226 = arith.addf %222, %225 : vector<8x128xf32>
    %c0_130 = arith.constant 0 : index
    %c0_131 = arith.constant 0 : index
    %c0_132 = arith.constant 0 : index
    %c0_133 = arith.constant 0 : index
    %227 = vector.load %arg12[%c0_130, %c0_131, %c0_132, %c0_133] : memref<2x4x1x128xf32, #tpu.memory_space<vmem>>, vector<1x1x1x128xf32>
    %228 = vector.shape_cast %227 : vector<1x1x1x128xf32> to vector<1x128xf32>
    %229 = vector.broadcast %228 : vector<1x128xf32> to vector<8x128xf32>
    %230 = arith.addf %226, %229 : vector<8x128xf32>
    %cst_134 = arith.constant 0.000000e+00 : f32
    %231 = vector.broadcast %cst_134 : f32 to vector<8x128xf32>
    %232 = arith.maximumf %230, %231 : vector<8x128xf32>
    %233 = vector.shape_cast %232 : vector<8x128xf32> to vector<1x8x128xf32>
    %234 = arith.truncf %123 : vector<8x128xf32> to vector<8x128xbf16>
    %235 = vector.extract_strided_slice %23 {offsets = [0, 8, 0], sizes = [1, 8, 128], strides = [1, 1, 1]} : vector<1x16x128xf32> to vector<1x8x128xf32>
    %236 = vector.shape_cast %235 : vector<1x8x128xf32> to vector<8x128xf32>
    %237 = arith.truncf %236 : vector<8x128xf32> to vector<8x128xbf16>
    %c0_135 = arith.constant 0 : index
    %c1_136 = arith.constant 1 : index
    %c0_137 = arith.constant 0 : index
    %c0_138 = arith.constant 0 : index
    %238 = vector.load %arg10[%c0_135, %c1_136, %c0_137, %c0_138] : memref<2x4x128x128xbf16, #tpu.memory_space<vmem>>, vector<1x1x128x128xbf16>
    %239 = vector.shape_cast %238 : vector<1x1x128x128xbf16> to vector<128x128xbf16>
    %cst_139 = arith.constant dense<0.000000e+00> : vector<8x128xf32>
    %240 = tpu.matmul %234, %239, %cst_139 {dimension_numbers = #tpu.dot_dimension_numbers<[1], [0], [0], [1], [0, 0, 1, 1], [], []>} : vector<8x128xbf16>, vector<128x128xbf16>, vector<8x128xf32> -> vector<8x128xf32>
    %c0_140 = arith.constant 0 : index
    %c1_141 = arith.constant 1 : index
    %c0_142 = arith.constant 0 : index
    %c0_143 = arith.constant 0 : index
    %241 = vector.load %arg11[%c0_140, %c1_141, %c0_142, %c0_143] : memref<2x4x128x128xbf16, #tpu.memory_space<vmem>>, vector<1x1x128x128xbf16>
    %242 = vector.shape_cast %241 : vector<1x1x128x128xbf16> to vector<128x128xbf16>
    %cst_144 = arith.constant dense<0.000000e+00> : vector<8x128xf32>
    %243 = tpu.matmul %237, %242, %cst_144 {dimension_numbers = #tpu.dot_dimension_numbers<[1], [0], [0], [1], [0, 0, 1, 1], [], []>} : vector<8x128xbf16>, vector<128x128xbf16>, vector<8x128xf32> -> vector<8x128xf32>
    %244 = arith.addf %240, %243 : vector<8x128xf32>
    %c0_145 = arith.constant 0 : index
    %c1_146 = arith.constant 1 : index
    %c0_147 = arith.constant 0 : index
    %c0_148 = arith.constant 0 : index
    %245 = vector.load %arg12[%c0_145, %c1_146, %c0_147, %c0_148] : memref<2x4x1x128xf32, #tpu.memory_space<vmem>>, vector<1x1x1x128xf32>
    %246 = vector.shape_cast %245 : vector<1x1x1x128xf32> to vector<1x128xf32>
    %247 = vector.broadcast %246 : vector<1x128xf32> to vector<8x128xf32>
    %248 = arith.addf %244, %247 : vector<8x128xf32>
    %cst_149 = arith.constant 0.000000e+00 : f32
    %249 = vector.broadcast %cst_149 : f32 to vector<8x128xf32>
    %250 = arith.maximumf %248, %249 : vector<8x128xf32>
    %251 = vector.shape_cast %250 : vector<8x128xf32> to vector<1x8x128xf32>
    %252 = arith.truncf %169 : vector<8x128xf32> to vector<8x128xbf16>
    %253 = vector.extract_strided_slice %23 {offsets = [0, 8, 0], sizes = [1, 8, 128], strides = [1, 1, 1]} : vector<1x16x128xf32> to vector<1x8x128xf32>
    %254 = vector.shape_cast %253 : vector<1x8x128xf32> to vector<8x128xf32>
    %255 = arith.truncf %254 : vector<8x128xf32> to vector<8x128xbf16>
    %c0_150 = arith.constant 0 : index
    %c2_151 = arith.constant 2 : index
    %c0_152 = arith.constant 0 : index
    %c0_153 = arith.constant 0 : index
    %256 = vector.load %arg10[%c0_150, %c2_151, %c0_152, %c0_153] : memref<2x4x128x128xbf16, #tpu.memory_space<vmem>>, vector<1x1x128x128xbf16>
    %257 = vector.shape_cast %256 : vector<1x1x128x128xbf16> to vector<128x128xbf16>
    %cst_154 = arith.constant dense<0.000000e+00> : vector<8x128xf32>
    %258 = tpu.matmul %252, %257, %cst_154 {dimension_numbers = #tpu.dot_dimension_numbers<[1], [0], [0], [1], [0, 0, 1, 1], [], []>} : vector<8x128xbf16>, vector<128x128xbf16>, vector<8x128xf32> -> vector<8x128xf32>
    %c0_155 = arith.constant 0 : index
    %c2_156 = arith.constant 2 : index
    %c0_157 = arith.constant 0 : index
    %c0_158 = arith.constant 0 : index
    %259 = vector.load %arg11[%c0_155, %c2_156, %c0_157, %c0_158] : memref<2x4x128x128xbf16, #tpu.memory_space<vmem>>, vector<1x1x128x128xbf16>
    %260 = vector.shape_cast %259 : vector<1x1x128x128xbf16> to vector<128x128xbf16>
    %cst_159 = arith.constant dense<0.000000e+00> : vector<8x128xf32>
    %261 = tpu.matmul %255, %260, %cst_159 {dimension_numbers = #tpu.dot_dimension_numbers<[1], [0], [0], [1], [0, 0, 1, 1], [], []>} : vector<8x128xbf16>, vector<128x128xbf16>, vector<8x128xf32> -> vector<8x128xf32>
    %262 = arith.addf %258, %261 : vector<8x128xf32>
    %c0_160 = arith.constant 0 : index
    %c2_161 = arith.constant 2 : index
    %c0_162 = arith.constant 0 : index
    %c0_163 = arith.constant 0 : index
    %263 = vector.load %arg12[%c0_160, %c2_161, %c0_162, %c0_163] : memref<2x4x1x128xf32, #tpu.memory_space<vmem>>, vector<1x1x1x128xf32>
    %264 = vector.shape_cast %263 : vector<1x1x1x128xf32> to vector<1x128xf32>
    %265 = vector.broadcast %264 : vector<1x128xf32> to vector<8x128xf32>
    %266 = arith.addf %262, %265 : vector<8x128xf32>
    %cst_164 = arith.constant 0.000000e+00 : f32
    %267 = vector.broadcast %cst_164 : f32 to vector<8x128xf32>
    %268 = arith.maximumf %266, %267 : vector<8x128xf32>
    %269 = vector.shape_cast %268 : vector<8x128xf32> to vector<1x8x128xf32>
    %270 = arith.truncf %215 : vector<8x128xf32> to vector<8x128xbf16>
    %271 = vector.extract_strided_slice %23 {offsets = [0, 0, 0], sizes = [1, 8, 128], strides = [1, 1, 1]} : vector<1x16x128xf32> to vector<1x8x128xf32>
    %272 = vector.shape_cast %271 : vector<1x8x128xf32> to vector<8x128xf32>
    %273 = arith.truncf %272 : vector<8x128xf32> to vector<8x128xbf16>
    %c0_165 = arith.constant 0 : index
    %c3_166 = arith.constant 3 : index
    %c0_167 = arith.constant 0 : index
    %c0_168 = arith.constant 0 : index
    %274 = vector.load %arg10[%c0_165, %c3_166, %c0_167, %c0_168] : memref<2x4x128x128xbf16, #tpu.memory_space<vmem>>, vector<1x1x128x128xbf16>
    %275 = vector.shape_cast %274 : vector<1x1x128x128xbf16> to vector<128x128xbf16>
    %cst_169 = arith.constant dense<0.000000e+00> : vector<8x128xf32>
    %276 = tpu.matmul %270, %275, %cst_169 {dimension_numbers = #tpu.dot_dimension_numbers<[1], [0], [0], [1], [0, 0, 1, 1], [], []>} : vector<8x128xbf16>, vector<128x128xbf16>, vector<8x128xf32> -> vector<8x128xf32>
    %c0_170 = arith.constant 0 : index
    %c3_171 = arith.constant 3 : index
    %c0_172 = arith.constant 0 : index
    %c0_173 = arith.constant 0 : index
    %277 = vector.load %arg11[%c0_170, %c3_171, %c0_172, %c0_173] : memref<2x4x128x128xbf16, #tpu.memory_space<vmem>>, vector<1x1x128x128xbf16>
    %278 = vector.shape_cast %277 : vector<1x1x128x128xbf16> to vector<128x128xbf16>
    %cst_174 = arith.constant dense<0.000000e+00> : vector<8x128xf32>
    %279 = tpu.matmul %273, %278, %cst_174 {dimension_numbers = #tpu.dot_dimension_numbers<[1], [0], [0], [1], [0, 0, 1, 1], [], []>} : vector<8x128xbf16>, vector<128x128xbf16>, vector<8x128xf32> -> vector<8x128xf32>
    %280 = arith.addf %276, %279 : vector<8x128xf32>
    %c0_175 = arith.constant 0 : index
    %c3_176 = arith.constant 3 : index
    %c0_177 = arith.constant 0 : index
    %c0_178 = arith.constant 0 : index
    %281 = vector.load %arg12[%c0_175, %c3_176, %c0_177, %c0_178] : memref<2x4x1x128xf32, #tpu.memory_space<vmem>>, vector<1x1x1x128xf32>
    %282 = vector.shape_cast %281 : vector<1x1x1x128xf32> to vector<1x128xf32>
    %283 = vector.broadcast %282 : vector<1x128xf32> to vector<8x128xf32>
    %284 = arith.addf %280, %283 : vector<8x128xf32>
    %cst_179 = arith.constant 0.000000e+00 : f32
    %285 = vector.broadcast %cst_179 : f32 to vector<8x128xf32>
    %286 = arith.maximumf %284, %285 : vector<8x128xf32>
    %287 = vector.shape_cast %286 : vector<8x128xf32> to vector<1x8x128xf32>
    %288 = vector.shape_cast %233 : vector<1x8x128xf32> to vector<8x128xf32>
    %289 = arith.truncf %288 : vector<8x128xf32> to vector<8x128xbf16>
    %c0_180 = arith.constant 0 : index
    %c0_181 = arith.constant 0 : index
    %c0_182 = arith.constant 0 : index
    %c0_183 = arith.constant 0 : index
    %290 = vector.load %arg14[%c0_180, %c0_181, %c0_182, %c0_183] : memref<2x2x128x128xbf16, #tpu.memory_space<vmem>>, vector<1x1x128x128xbf16>
    %291 = vector.shape_cast %290 : vector<1x1x128x128xbf16> to vector<128x128xbf16>
    %cst_184 = arith.constant dense<0.000000e+00> : vector<8x128xf32>
    %292 = tpu.matmul %289, %291, %cst_184 {dimension_numbers = #tpu.dot_dimension_numbers<[1], [0], [0], [1], [0, 0, 1, 1], [], []>} : vector<8x128xbf16>, vector<128x128xbf16>, vector<8x128xf32> -> vector<8x128xf32>
    %c0_185 = arith.constant 0 : index
    %c0_186 = arith.constant 0 : index
    %c0_187 = arith.constant 0 : index
    %c0_188 = arith.constant 0 : index
    %293 = vector.load %arg15[%c0_185, %c0_186, %c0_187, %c0_188] : memref<2x2x1x128xf32, #tpu.memory_space<vmem>>, vector<1x1x1x128xf32>
    %294 = vector.shape_cast %293 : vector<1x1x1x128xf32> to vector<1x128xf32>
    %295 = vector.broadcast %294 : vector<1x128xf32> to vector<8x128xf32>
    %296 = arith.addf %292, %295 : vector<8x128xf32>
    %297 = math.tanh %296 : vector<8x128xf32>
    %298 = vector.shape_cast %297 : vector<8x128xf32> to vector<1x8x128xf32>
    %cst_189 = arith.constant dense<0.000000e+00> : vector<1x128xf32>
    %299 = vector.multi_reduction <add>, %298, %cst_189 [1] : vector<1x8x128xf32> to vector<1x128xf32>
    %cst_190 = arith.constant 8.000000e+00 : f32
    %300 = vector.broadcast %cst_190 : f32 to vector<1x128xf32>
    %301 = arith.divf %299, %300 : vector<1x128xf32>
    %c0_191 = arith.constant 0 : index
    %c0_192 = arith.constant 0 : index
    %c0_193 = arith.constant 0 : index
    %c0_194 = arith.constant 0 : index
    %302 = vector.load %arg13[%c0_191, %c0_192, %c0_193, %c0_194] : memref<2x2x1x128xf32, #tpu.memory_space<vmem>>, vector<1x1x1x128xf32>
    %303 = vector.shape_cast %302 : vector<1x1x1x128xf32> to vector<1x128xf32>
    %304 = arith.mulf %303, %301 : vector<1x128xf32>
    %cst_195 = arith.constant dense<0.000000e+00> : vector<1xf32>
    %305 = vector.multi_reduction <add>, %304, %cst_195 [1] : vector<1x128xf32> to vector<1xf32>
    %306 = vector.shape_cast %305 : vector<1xf32> to vector<1x1xf32>
    %307 = vector.shape_cast %287 : vector<1x8x128xf32> to vector<8x128xf32>
    %308 = arith.truncf %307 : vector<8x128xf32> to vector<8x128xbf16>
    %c0_196 = arith.constant 0 : index
    %c0_197 = arith.constant 0 : index
    %c0_198 = arith.constant 0 : index
    %c0_199 = arith.constant 0 : index
    %309 = vector.load %arg14[%c0_196, %c0_197, %c0_198, %c0_199] : memref<2x2x128x128xbf16, #tpu.memory_space<vmem>>, vector<1x1x128x128xbf16>
    %310 = vector.shape_cast %309 : vector<1x1x128x128xbf16> to vector<128x128xbf16>
    %cst_200 = arith.constant dense<0.000000e+00> : vector<8x128xf32>
    %311 = tpu.matmul %308, %310, %cst_200 {dimension_numbers = #tpu.dot_dimension_numbers<[1], [0], [0], [1], [0, 0, 1, 1], [], []>} : vector<8x128xbf16>, vector<128x128xbf16>, vector<8x128xf32> -> vector<8x128xf32>
    %c0_201 = arith.constant 0 : index
    %c0_202 = arith.constant 0 : index
    %c0_203 = arith.constant 0 : index
    %c0_204 = arith.constant 0 : index
    %312 = vector.load %arg15[%c0_201, %c0_202, %c0_203, %c0_204] : memref<2x2x1x128xf32, #tpu.memory_space<vmem>>, vector<1x1x1x128xf32>
    %313 = vector.shape_cast %312 : vector<1x1x1x128xf32> to vector<1x128xf32>
    %314 = vector.broadcast %313 : vector<1x128xf32> to vector<8x128xf32>
    %315 = arith.addf %311, %314 : vector<8x128xf32>
    %316 = math.tanh %315 : vector<8x128xf32>
    %317 = vector.shape_cast %316 : vector<8x128xf32> to vector<1x8x128xf32>
    %cst_205 = arith.constant dense<0.000000e+00> : vector<1x128xf32>
    %318 = vector.multi_reduction <add>, %317, %cst_205 [1] : vector<1x8x128xf32> to vector<1x128xf32>
    %cst_206 = arith.constant 8.000000e+00 : f32
    %319 = vector.broadcast %cst_206 : f32 to vector<1x128xf32>
    %320 = arith.divf %318, %319 : vector<1x128xf32>
    %c0_207 = arith.constant 0 : index
    %c0_208 = arith.constant 0 : index
    %c0_209 = arith.constant 0 : index
    %c0_210 = arith.constant 0 : index
    %321 = vector.load %arg13[%c0_207, %c0_208, %c0_209, %c0_210] : memref<2x2x1x128xf32, #tpu.memory_space<vmem>>, vector<1x1x1x128xf32>
    %322 = vector.shape_cast %321 : vector<1x1x1x128xf32> to vector<1x128xf32>
    %323 = arith.mulf %322, %320 : vector<1x128xf32>
    %cst_211 = arith.constant dense<0.000000e+00> : vector<1xf32>
    %324 = vector.multi_reduction <add>, %323, %cst_211 [1] : vector<1x128xf32> to vector<1xf32>
    %325 = vector.shape_cast %324 : vector<1xf32> to vector<1x1xf32>
    %326 = arith.maximumf %306, %325 : vector<1x1xf32>
    %327 = arith.subf %306, %326 : vector<1x1xf32>
    %328 = math.exp %327 : vector<1x1xf32>
    %329 = arith.subf %325, %326 : vector<1x1xf32>
    %330 = math.exp %329 : vector<1x1xf32>
    %331 = arith.addf %328, %330 : vector<1x1xf32>
    %332 = tpu.reciprocal %331 {approx = true} : vector<1x1xf32> -> vector<1x1xf32>
    %333 = arith.mulf %328, %332 : vector<1x1xf32>
    %334 = vector.shape_cast %333 : vector<1x1xf32> to vector<1x1x1xf32>
    %335 = vector.broadcast %334 : vector<1x1x1xf32> to vector<1x8x128xf32>
    %336 = arith.mulf %335, %233 : vector<1x8x128xf32>
    %337 = arith.mulf %330, %332 : vector<1x1xf32>
    %338 = vector.shape_cast %337 : vector<1x1xf32> to vector<1x1x1xf32>
    %339 = vector.broadcast %338 : vector<1x1x1xf32> to vector<1x8x128xf32>
    %340 = arith.mulf %339, %287 : vector<1x8x128xf32>
    %341 = arith.addf %336, %340 : vector<1x8x128xf32>
    %342 = vector.shape_cast %251 : vector<1x8x128xf32> to vector<8x128xf32>
    %343 = arith.truncf %342 : vector<8x128xf32> to vector<8x128xbf16>
    %c0_212 = arith.constant 0 : index
    %c1_213 = arith.constant 1 : index
    %c0_214 = arith.constant 0 : index
    %c0_215 = arith.constant 0 : index
    %344 = vector.load %arg14[%c0_212, %c1_213, %c0_214, %c0_215] : memref<2x2x128x128xbf16, #tpu.memory_space<vmem>>, vector<1x1x128x128xbf16>
    %345 = vector.shape_cast %344 : vector<1x1x128x128xbf16> to vector<128x128xbf16>
    %cst_216 = arith.constant dense<0.000000e+00> : vector<8x128xf32>
    %346 = tpu.matmul %343, %345, %cst_216 {dimension_numbers = #tpu.dot_dimension_numbers<[1], [0], [0], [1], [0, 0, 1, 1], [], []>} : vector<8x128xbf16>, vector<128x128xbf16>, vector<8x128xf32> -> vector<8x128xf32>
    %c0_217 = arith.constant 0 : index
    %c1_218 = arith.constant 1 : index
    %c0_219 = arith.constant 0 : index
    %c0_220 = arith.constant 0 : index
    %347 = vector.load %arg15[%c0_217, %c1_218, %c0_219, %c0_220] : memref<2x2x1x128xf32, #tpu.memory_space<vmem>>, vector<1x1x1x128xf32>
    %348 = vector.shape_cast %347 : vector<1x1x1x128xf32> to vector<1x128xf32>
    %349 = vector.broadcast %348 : vector<1x128xf32> to vector<8x128xf32>
    %350 = arith.addf %346, %349 : vector<8x128xf32>
    %351 = math.tanh %350 : vector<8x128xf32>
    %352 = vector.shape_cast %351 : vector<8x128xf32> to vector<1x8x128xf32>
    %cst_221 = arith.constant dense<0.000000e+00> : vector<1x128xf32>
    %353 = vector.multi_reduction <add>, %352, %cst_221 [1] : vector<1x8x128xf32> to vector<1x128xf32>
    %cst_222 = arith.constant 8.000000e+00 : f32
    %354 = vector.broadcast %cst_222 : f32 to vector<1x128xf32>
    %355 = arith.divf %353, %354 : vector<1x128xf32>
    %c0_223 = arith.constant 0 : index
    %c1_224 = arith.constant 1 : index
    %c0_225 = arith.constant 0 : index
    %c0_226 = arith.constant 0 : index
    %356 = vector.load %arg13[%c0_223, %c1_224, %c0_225, %c0_226] : memref<2x2x1x128xf32, #tpu.memory_space<vmem>>, vector<1x1x1x128xf32>
    %357 = vector.shape_cast %356 : vector<1x1x1x128xf32> to vector<1x128xf32>
    %358 = arith.mulf %357, %355 : vector<1x128xf32>
    %cst_227 = arith.constant dense<0.000000e+00> : vector<1xf32>
    %359 = vector.multi_reduction <add>, %358, %cst_227 [1] : vector<1x128xf32> to vector<1xf32>
    %360 = vector.shape_cast %359 : vector<1xf32> to vector<1x1xf32>
    %361 = vector.shape_cast %269 : vector<1x8x128xf32> to vector<8x128xf32>
    %362 = arith.truncf %361 : vector<8x128xf32> to vector<8x128xbf16>
    %c0_228 = arith.constant 0 : index
    %c1_229 = arith.constant 1 : index
    %c0_230 = arith.constant 0 : index
    %c0_231 = arith.constant 0 : index
    %363 = vector.load %arg14[%c0_228, %c1_229, %c0_230, %c0_231] : memref<2x2x128x128xbf16, #tpu.memory_space<vmem>>, vector<1x1x128x128xbf16>
    %364 = vector.shape_cast %363 : vector<1x1x128x128xbf16> to vector<128x128xbf16>
    %cst_232 = arith.constant dense<0.000000e+00> : vector<8x128xf32>
    %365 = tpu.matmul %362, %364, %cst_232 {dimension_numbers = #tpu.dot_dimension_numbers<[1], [0], [0], [1], [0, 0, 1, 1], [], []>} : vector<8x128xbf16>, vector<128x128xbf16>, vector<8x128xf32> -> vector<8x128xf32>
    %c0_233 = arith.constant 0 : index
    %c1_234 = arith.constant 1 : index
    %c0_235 = arith.constant 0 : index
    %c0_236 = arith.constant 0 : index
    %366 = vector.load %arg15[%c0_233, %c1_234, %c0_235, %c0_236] : memref<2x2x1x128xf32, #tpu.memory_space<vmem>>, vector<1x1x1x128xf32>
    %367 = vector.shape_cast %366 : vector<1x1x1x128xf32> to vector<1x128xf32>
    %368 = vector.broadcast %367 : vector<1x128xf32> to vector<8x128xf32>
    %369 = arith.addf %365, %368 : vector<8x128xf32>
    %370 = math.tanh %369 : vector<8x128xf32>
    %371 = vector.shape_cast %370 : vector<8x128xf32> to vector<1x8x128xf32>
    %cst_237 = arith.constant dense<0.000000e+00> : vector<1x128xf32>
    %372 = vector.multi_reduction <add>, %371, %cst_237 [1] : vector<1x8x128xf32> to vector<1x128xf32>
    %cst_238 = arith.constant 8.000000e+00 : f32
    %373 = vector.broadcast %cst_238 : f32 to vector<1x128xf32>
    %374 = arith.divf %372, %373 : vector<1x128xf32>
    %c0_239 = arith.constant 0 : index
    %c1_240 = arith.constant 1 : index
    %c0_241 = arith.constant 0 : index
    %c0_242 = arith.constant 0 : index
    %375 = vector.load %arg13[%c0_239, %c1_240, %c0_241, %c0_242] : memref<2x2x1x128xf32, #tpu.memory_space<vmem>>, vector<1x1x1x128xf32>
    %376 = vector.shape_cast %375 : vector<1x1x1x128xf32> to vector<1x128xf32>
    %377 = arith.mulf %376, %374 : vector<1x128xf32>
    %cst_243 = arith.constant dense<0.000000e+00> : vector<1xf32>
    %378 = vector.multi_reduction <add>, %377, %cst_243 [1] : vector<1x128xf32> to vector<1xf32>
    %379 = vector.shape_cast %378 : vector<1xf32> to vector<1x1xf32>
    %380 = arith.maximumf %360, %379 : vector<1x1xf32>
    %381 = arith.subf %360, %380 : vector<1x1xf32>
    %382 = math.exp %381 : vector<1x1xf32>
    %383 = arith.subf %379, %380 : vector<1x1xf32>
    %384 = math.exp %383 : vector<1x1xf32>
    %385 = arith.addf %382, %384 : vector<1x1xf32>
    %386 = tpu.reciprocal %385 {approx = true} : vector<1x1xf32> -> vector<1x1xf32>
    %387 = arith.mulf %382, %386 : vector<1x1xf32>
    %388 = vector.shape_cast %387 : vector<1x1xf32> to vector<1x1x1xf32>
    %389 = vector.broadcast %388 : vector<1x1x1xf32> to vector<1x8x128xf32>
    %390 = arith.mulf %389, %251 : vector<1x8x128xf32>
    %391 = arith.mulf %384, %386 : vector<1x1xf32>
    %392 = vector.shape_cast %391 : vector<1x1xf32> to vector<1x1x1xf32>
    %393 = vector.broadcast %392 : vector<1x1x1xf32> to vector<1x8x128xf32>
    %394 = arith.mulf %393, %269 : vector<1x8x128xf32>
    %395 = arith.addf %390, %394 : vector<1x8x128xf32>
    %396 = tpu.concatenate %341, %395 in 1 : vector<1x8x128xf32>, vector<1x8x128xf32> -> vector<1x16x128xf32>
    %397 = vector.extract_strided_slice %396 {offsets = [0, 0, 0], sizes = [1, 8, 128], strides = [1, 1, 1]} : vector<1x16x128xf32> to vector<1x8x128xf32>
    %398 = vector.shape_cast %397 : vector<1x8x128xf32> to vector<8x128xf32>
    %399 = arith.truncf %398 : vector<8x128xf32> to vector<8x128xbf16>
    %400 = vector.extract_strided_slice %396 {offsets = [0, 8, 0], sizes = [1, 8, 128], strides = [1, 1, 1]} : vector<1x16x128xf32> to vector<1x8x128xf32>
    %401 = vector.shape_cast %400 : vector<1x8x128xf32> to vector<8x128xf32>
    %402 = arith.truncf %401 : vector<8x128xf32> to vector<8x128xbf16>
    %c1_244 = arith.constant 1 : index
    %c0_245 = arith.constant 0 : index
    %c0_246 = arith.constant 0 : index
    %c0_247 = arith.constant 0 : index
    %403 = vector.load %arg4[%c1_244, %c0_245, %c0_246, %c0_247] : memref<2x2x128x128xbf16, #tpu.memory_space<vmem>>, vector<1x1x128x128xbf16>
    %404 = vector.shape_cast %403 : vector<1x1x128x128xbf16> to vector<128x128xbf16>
    %cst_248 = arith.constant dense<0.000000e+00> : vector<8x128xf32>
    %405 = tpu.matmul %399, %404, %cst_248 {dimension_numbers = #tpu.dot_dimension_numbers<[1], [0], [0], [1], [0, 0, 1, 1], [], []>} : vector<8x128xbf16>, vector<128x128xbf16>, vector<8x128xf32> -> vector<8x128xf32>
    %c1_249 = arith.constant 1 : index
    %c0_250 = arith.constant 0 : index
    %c0_251 = arith.constant 0 : index
    %c0_252 = arith.constant 0 : index
    %406 = vector.load %arg5[%c1_249, %c0_250, %c0_251, %c0_252] : memref<2x2x1x128xf32, #tpu.memory_space<vmem>>, vector<1x1x1x128xf32>
    %407 = vector.shape_cast %406 : vector<1x1x1x128xf32> to vector<1x128xf32>
    %408 = vector.broadcast %407 : vector<1x128xf32> to vector<8x128xf32>
    %409 = arith.addf %405, %408 : vector<8x128xf32>
    %c1_253 = arith.constant 1 : index
    %c1_254 = arith.constant 1 : index
    %c0_255 = arith.constant 0 : index
    %c0_256 = arith.constant 0 : index
    %410 = vector.load %arg4[%c1_253, %c1_254, %c0_255, %c0_256] : memref<2x2x128x128xbf16, #tpu.memory_space<vmem>>, vector<1x1x128x128xbf16>
    %411 = vector.shape_cast %410 : vector<1x1x128x128xbf16> to vector<128x128xbf16>
    %cst_257 = arith.constant dense<0.000000e+00> : vector<8x128xf32>
    %412 = tpu.matmul %402, %411, %cst_257 {dimension_numbers = #tpu.dot_dimension_numbers<[1], [0], [0], [1], [0, 0, 1, 1], [], []>} : vector<8x128xbf16>, vector<128x128xbf16>, vector<8x128xf32> -> vector<8x128xf32>
    %c1_258 = arith.constant 1 : index
    %c1_259 = arith.constant 1 : index
    %c0_260 = arith.constant 0 : index
    %c0_261 = arith.constant 0 : index
    %413 = vector.load %arg5[%c1_258, %c1_259, %c0_260, %c0_261] : memref<2x2x1x128xf32, #tpu.memory_space<vmem>>, vector<1x1x1x128xf32>
    %414 = vector.shape_cast %413 : vector<1x1x1x128xf32> to vector<1x128xf32>
    %415 = vector.broadcast %414 : vector<1x128xf32> to vector<8x128xf32>
    %416 = arith.addf %412, %415 : vector<8x128xf32>
    %417 = vector.shape_cast %409 : vector<8x128xf32> to vector<1x8x128xf32>
    %418 = vector.shape_cast %416 : vector<8x128xf32> to vector<1x8x128xf32>
    %419 = tpu.concatenate %417, %418 in 1 : vector<1x8x128xf32>, vector<1x8x128xf32> -> vector<1x16x128xf32>
    %420 = arith.truncf %419 : vector<1x16x128xf32> to vector<1x16x128xbf16>
    %421 = vector.shape_cast %420 : vector<1x16x128xbf16> to vector<16x128xbf16>
    %c1_262 = arith.constant 1 : index
    %c0_263 = arith.constant 0 : index
    %c0_264 = arith.constant 0 : index
    %422 = vector.load %arg7[%c1_262, %c0_263, %c0_264] : memref<2x4x128xbf16, #tpu.memory_space<vmem>>, vector<1x4x128xbf16>
    %423 = vector.shape_cast %422 : vector<1x4x128xbf16> to vector<4x128xbf16>
    %cst_265 = arith.constant dense<0.000000e+00> : vector<16x4xf32>
    %424 = tpu.matmul %421, %423, %cst_265 {dimension_numbers = #tpu.dot_dimension_numbers<[1], [1], [0], [0], [0, 0, 1, 0], [], []>} : vector<16x128xbf16>, vector<4x128xbf16>, vector<16x4xf32> -> vector<16x4xf32>
    %c1_266 = arith.constant 1 : index
    %c0_267 = arith.constant 0 : index
    %c0_268 = arith.constant 0 : index
    %425 = vector.load %arg6[%c1_266, %c0_267, %c0_268] : memref<2x4x128xbf16, #tpu.memory_space<vmem>>, vector<1x4x128xbf16>
    %426 = vector.shape_cast %425 : vector<1x4x128xbf16> to vector<4x128xbf16>
    %cst_269 = arith.constant dense<0.000000e+00> : vector<4x16xf32>
    %427 = tpu.matmul %426, %421, %cst_269 {dimension_numbers = #tpu.dot_dimension_numbers<[1], [1], [0], [0], [0, 0, 1, 0], [], []>} : vector<4x128xbf16>, vector<16x128xbf16>, vector<4x16xf32> -> vector<4x16xf32>
    %c0_270 = arith.constant 0 : index
    %c0_271 = arith.constant 0 : index
    %c0_272 = arith.constant 0 : index
    %c0_273 = arith.constant 0 : index
    %428 = vector.load %arg3[%c0_270, %c0_271, %c0_272, %c0_273] : memref<1x4x16x16xbf16, #tpu.memory_space<vmem>>, vector<1x1x16x16xbf16>
    %429 = vector.shape_cast %428 : vector<1x1x16x16xbf16> to vector<16x16xbf16>
    %430 = arith.extf %429 : vector<16x16xbf16> to vector<16x16xf32>
    %c0_274 = arith.constant 0 : index
    %c0_275 = arith.constant 0 : index
    %c0_276 = arith.constant 0 : index
    %c0_277 = arith.constant 0 : index
    %431 = vector.load %arg2[%c0_274, %c0_275, %c0_276, %c0_277] : memref<1x4x16x16xbf16, #tpu.memory_space<vmem>>, vector<1x1x16x16xbf16>
    %432 = vector.shape_cast %431 : vector<1x1x16x16xbf16> to vector<16x16xbf16>
    %433 = arith.extf %432 : vector<16x16xbf16> to vector<16x16xf32>
    %434 = vector.extract_strided_slice %424 {offsets = [0, 0], sizes = [8, 1], strides = [1, 1]} : vector<16x4xf32> to vector<8x1xf32>
    %435 = vector.extract_strided_slice %427 {offsets = [0, 0], sizes = [1, 16], strides = [1, 1]} : vector<4x16xf32> to vector<1x16xf32>
    %436 = vector.broadcast %434 : vector<8x1xf32> to vector<8x16xf32>
    %437 = vector.broadcast %435 : vector<1x16xf32> to vector<8x16xf32>
    %438 = arith.addf %436, %437 : vector<8x16xf32>
    %c1_278 = arith.constant 1 : index
    %c0_279 = arith.constant 0 : index
    %c0_280 = arith.constant 0 : index
    %c0_281 = arith.constant 0 : index
    %439 = vector.load %arg8[%c1_278, %c0_279, %c0_280, %c0_281] : memref<2x4x1x1xf32, #tpu.memory_space<vmem>>, vector<1x1x1x1xf32>
    %440 = vector.shape_cast %439 : vector<1x1x1x1xf32> to vector<1x1xf32>
    %441 = vector.extract_strided_slice %430 {offsets = [0, 0], sizes = [8, 16], strides = [1, 1]} : vector<16x16xf32> to vector<8x16xf32>
    %442 = vector.broadcast %440 : vector<1x1xf32> to vector<8x16xf32>
    %443 = arith.mulf %442, %441 : vector<8x16xf32>
    %444 = arith.addf %438, %443 : vector<8x16xf32>
    %c1_282 = arith.constant 1 : index
    %c0_283 = arith.constant 0 : index
    %c0_284 = arith.constant 0 : index
    %c0_285 = arith.constant 0 : index
    %445 = vector.load %arg9[%c1_282, %c0_283, %c0_284, %c0_285] : memref<2x4x1x1xf32, #tpu.memory_space<vmem>>, vector<1x1x1x1xf32>
    %446 = vector.shape_cast %445 : vector<1x1x1x1xf32> to vector<1x1xf32>
    %447 = vector.broadcast %446 : vector<1x1xf32> to vector<8x16xf32>
    %448 = arith.addf %444, %447 : vector<8x16xf32>
    %cst_286 = arith.constant 2.000000e-01 : f32
    %449 = vector.broadcast %cst_286 : f32 to vector<8x16xf32>
    %450 = arith.mulf %449, %448 : vector<8x16xf32>
    %451 = arith.maximumf %448, %450 : vector<8x16xf32>
    %452 = vector.extract_strided_slice %433 {offsets = [0, 0], sizes = [8, 16], strides = [1, 1]} : vector<16x16xf32> to vector<8x16xf32>
    %453 = arith.addf %451, %452 : vector<8x16xf32>
    %cst_287 = arith.constant dense<0xFF800000> : vector<8xf32>
    %454 = vector.multi_reduction <maximumf>, %453, %cst_287 [1] : vector<8x16xf32> to vector<8xf32>
    %455 = vector.shape_cast %454 : vector<8xf32> to vector<8x1xf32>
    %cst_288 = arith.constant -1.000000e+29 : f32
    %456 = vector.broadcast %cst_288 : f32 to vector<8x1xf32>
    %457 = arith.cmpf ogt, %455, %456 : vector<8x1xf32>
    %cst_289 = arith.constant 0.000000e+00 : f32
    %458 = vector.broadcast %cst_289 : f32 to vector<8x1xf32>
    %459 = arith.select %457, %455, %458 : vector<8x1xi1>, vector<8x1xf32>
    %460 = vector.broadcast %459 : vector<8x1xf32> to vector<8x16xf32>
    %461 = arith.subf %453, %460 : vector<8x16xf32>
    %462 = math.exp %461 : vector<8x16xf32>
    %cst_290 = arith.constant dense<0.000000e+00> : vector<8xf32>
    %463 = vector.multi_reduction <add>, %462, %cst_290 [1] : vector<8x16xf32> to vector<8xf32>
    %464 = vector.shape_cast %463 : vector<8xf32> to vector<8x1xf32>
    %cst_291 = arith.constant 0.000000e+00 : f32
    %465 = vector.broadcast %cst_291 : f32 to vector<8x1xf32>
    %466 = arith.cmpf ogt, %464, %465 : vector<8x1xf32>
    %cst_292 = arith.constant 1.000000e+00 : f32
    %467 = vector.broadcast %cst_292 : f32 to vector<8x1xf32>
    %468 = arith.select %466, %464, %467 : vector<8x1xi1>, vector<8x1xf32>
    %469 = tpu.reciprocal %468 {approx = true} : vector<8x1xf32> -> vector<8x1xf32>
    %470 = vector.broadcast %469 : vector<8x1xf32> to vector<8x16xf32>
    %471 = arith.mulf %462, %470 : vector<8x16xf32>
    %472 = arith.truncf %471 : vector<8x16xf32> to vector<8x16xbf16>
    %cst_293 = arith.constant dense<0.000000e+00> : vector<8x128xf32>
    %473 = tpu.matmul %472, %421, %cst_293 {dimension_numbers = #tpu.dot_dimension_numbers<[1], [0], [0], [1], [0, 0, 1, 1], [], []>} : vector<8x16xbf16>, vector<16x128xbf16>, vector<8x128xf32> -> vector<8x128xf32>
    %c0_294 = arith.constant 0 : index
    %c1_295 = arith.constant 1 : index
    %c0_296 = arith.constant 0 : index
    %c0_297 = arith.constant 0 : index
    %474 = vector.load %arg3[%c0_294, %c1_295, %c0_296, %c0_297] : memref<1x4x16x16xbf16, #tpu.memory_space<vmem>>, vector<1x1x16x16xbf16>
    %475 = vector.shape_cast %474 : vector<1x1x16x16xbf16> to vector<16x16xbf16>
    %476 = arith.extf %475 : vector<16x16xbf16> to vector<16x16xf32>
    %c0_298 = arith.constant 0 : index
    %c1_299 = arith.constant 1 : index
    %c0_300 = arith.constant 0 : index
    %c0_301 = arith.constant 0 : index
    %477 = vector.load %arg2[%c0_298, %c1_299, %c0_300, %c0_301] : memref<1x4x16x16xbf16, #tpu.memory_space<vmem>>, vector<1x1x16x16xbf16>
    %478 = vector.shape_cast %477 : vector<1x1x16x16xbf16> to vector<16x16xbf16>
    %479 = arith.extf %478 : vector<16x16xbf16> to vector<16x16xf32>
    %480 = vector.extract_strided_slice %424 {offsets = [8, 1], sizes = [8, 1], strides = [1, 1]} : vector<16x4xf32> to vector<8x1xf32>
    %481 = vector.extract_strided_slice %427 {offsets = [1, 0], sizes = [1, 16], strides = [1, 1]} : vector<4x16xf32> to vector<1x16xf32>
    %482 = vector.broadcast %480 : vector<8x1xf32> to vector<8x16xf32>
    %483 = vector.broadcast %481 : vector<1x16xf32> to vector<8x16xf32>
    %484 = arith.addf %482, %483 : vector<8x16xf32>
    %c1_302 = arith.constant 1 : index
    %c1_303 = arith.constant 1 : index
    %c0_304 = arith.constant 0 : index
    %c0_305 = arith.constant 0 : index
    %485 = vector.load %arg8[%c1_302, %c1_303, %c0_304, %c0_305] : memref<2x4x1x1xf32, #tpu.memory_space<vmem>>, vector<1x1x1x1xf32>
    %486 = vector.shape_cast %485 : vector<1x1x1x1xf32> to vector<1x1xf32>
    %487 = vector.extract_strided_slice %476 {offsets = [8, 0], sizes = [8, 16], strides = [1, 1]} : vector<16x16xf32> to vector<8x16xf32>
    %488 = vector.broadcast %486 : vector<1x1xf32> to vector<8x16xf32>
    %489 = arith.mulf %488, %487 : vector<8x16xf32>
    %490 = arith.addf %484, %489 : vector<8x16xf32>
    %c1_306 = arith.constant 1 : index
    %c1_307 = arith.constant 1 : index
    %c0_308 = arith.constant 0 : index
    %c0_309 = arith.constant 0 : index
    %491 = vector.load %arg9[%c1_306, %c1_307, %c0_308, %c0_309] : memref<2x4x1x1xf32, #tpu.memory_space<vmem>>, vector<1x1x1x1xf32>
    %492 = vector.shape_cast %491 : vector<1x1x1x1xf32> to vector<1x1xf32>
    %493 = vector.broadcast %492 : vector<1x1xf32> to vector<8x16xf32>
    %494 = arith.addf %490, %493 : vector<8x16xf32>
    %cst_310 = arith.constant 2.000000e-01 : f32
    %495 = vector.broadcast %cst_310 : f32 to vector<8x16xf32>
    %496 = arith.mulf %495, %494 : vector<8x16xf32>
    %497 = arith.maximumf %494, %496 : vector<8x16xf32>
    %498 = vector.extract_strided_slice %479 {offsets = [8, 0], sizes = [8, 16], strides = [1, 1]} : vector<16x16xf32> to vector<8x16xf32>
    %499 = arith.addf %497, %498 : vector<8x16xf32>
    %cst_311 = arith.constant dense<0xFF800000> : vector<8xf32>
    %500 = vector.multi_reduction <maximumf>, %499, %cst_311 [1] : vector<8x16xf32> to vector<8xf32>
    %501 = vector.shape_cast %500 : vector<8xf32> to vector<8x1xf32>
    %cst_312 = arith.constant -1.000000e+29 : f32
    %502 = vector.broadcast %cst_312 : f32 to vector<8x1xf32>
    %503 = arith.cmpf ogt, %501, %502 : vector<8x1xf32>
    %cst_313 = arith.constant 0.000000e+00 : f32
    %504 = vector.broadcast %cst_313 : f32 to vector<8x1xf32>
    %505 = arith.select %503, %501, %504 : vector<8x1xi1>, vector<8x1xf32>
    %506 = vector.broadcast %505 : vector<8x1xf32> to vector<8x16xf32>
    %507 = arith.subf %499, %506 : vector<8x16xf32>
    %508 = math.exp %507 : vector<8x16xf32>
    %cst_314 = arith.constant dense<0.000000e+00> : vector<8xf32>
    %509 = vector.multi_reduction <add>, %508, %cst_314 [1] : vector<8x16xf32> to vector<8xf32>
    %510 = vector.shape_cast %509 : vector<8xf32> to vector<8x1xf32>
    %cst_315 = arith.constant 0.000000e+00 : f32
    %511 = vector.broadcast %cst_315 : f32 to vector<8x1xf32>
    %512 = arith.cmpf ogt, %510, %511 : vector<8x1xf32>
    %cst_316 = arith.constant 1.000000e+00 : f32
    %513 = vector.broadcast %cst_316 : f32 to vector<8x1xf32>
    %514 = arith.select %512, %510, %513 : vector<8x1xi1>, vector<8x1xf32>
    %515 = tpu.reciprocal %514 {approx = true} : vector<8x1xf32> -> vector<8x1xf32>
    %516 = vector.broadcast %515 : vector<8x1xf32> to vector<8x16xf32>
    %517 = arith.mulf %508, %516 : vector<8x16xf32>
    %518 = arith.truncf %517 : vector<8x16xf32> to vector<8x16xbf16>
    %cst_317 = arith.constant dense<0.000000e+00> : vector<8x128xf32>
    %519 = tpu.matmul %518, %421, %cst_317 {dimension_numbers = #tpu.dot_dimension_numbers<[1], [0], [0], [1], [0, 0, 1, 1], [], []>} : vector<8x16xbf16>, vector<16x128xbf16>, vector<8x128xf32> -> vector<8x128xf32>
    %c0_318 = arith.constant 0 : index
    %c2_319 = arith.constant 2 : index
    %c0_320 = arith.constant 0 : index
    %c0_321 = arith.constant 0 : index
    %520 = vector.load %arg3[%c0_318, %c2_319, %c0_320, %c0_321] : memref<1x4x16x16xbf16, #tpu.memory_space<vmem>>, vector<1x1x16x16xbf16>
    %521 = vector.shape_cast %520 : vector<1x1x16x16xbf16> to vector<16x16xbf16>
    %522 = arith.extf %521 : vector<16x16xbf16> to vector<16x16xf32>
    %c0_322 = arith.constant 0 : index
    %c2_323 = arith.constant 2 : index
    %c0_324 = arith.constant 0 : index
    %c0_325 = arith.constant 0 : index
    %523 = vector.load %arg2[%c0_322, %c2_323, %c0_324, %c0_325] : memref<1x4x16x16xbf16, #tpu.memory_space<vmem>>, vector<1x1x16x16xbf16>
    %524 = vector.shape_cast %523 : vector<1x1x16x16xbf16> to vector<16x16xbf16>
    %525 = arith.extf %524 : vector<16x16xbf16> to vector<16x16xf32>
    %526 = vector.extract_strided_slice %424 {offsets = [8, 2], sizes = [8, 1], strides = [1, 1]} : vector<16x4xf32> to vector<8x1xf32>
    %527 = vector.extract_strided_slice %427 {offsets = [2, 0], sizes = [1, 16], strides = [1, 1]} : vector<4x16xf32> to vector<1x16xf32>
    %528 = vector.broadcast %526 : vector<8x1xf32> to vector<8x16xf32>
    %529 = vector.broadcast %527 : vector<1x16xf32> to vector<8x16xf32>
    %530 = arith.addf %528, %529 : vector<8x16xf32>
    %c1_326 = arith.constant 1 : index
    %c2_327 = arith.constant 2 : index
    %c0_328 = arith.constant 0 : index
    %c0_329 = arith.constant 0 : index
    %531 = vector.load %arg8[%c1_326, %c2_327, %c0_328, %c0_329] : memref<2x4x1x1xf32, #tpu.memory_space<vmem>>, vector<1x1x1x1xf32>
    %532 = vector.shape_cast %531 : vector<1x1x1x1xf32> to vector<1x1xf32>
    %533 = vector.extract_strided_slice %522 {offsets = [8, 0], sizes = [8, 16], strides = [1, 1]} : vector<16x16xf32> to vector<8x16xf32>
    %534 = vector.broadcast %532 : vector<1x1xf32> to vector<8x16xf32>
    %535 = arith.mulf %534, %533 : vector<8x16xf32>
    %536 = arith.addf %530, %535 : vector<8x16xf32>
    %c1_330 = arith.constant 1 : index
    %c2_331 = arith.constant 2 : index
    %c0_332 = arith.constant 0 : index
    %c0_333 = arith.constant 0 : index
    %537 = vector.load %arg9[%c1_330, %c2_331, %c0_332, %c0_333] : memref<2x4x1x1xf32, #tpu.memory_space<vmem>>, vector<1x1x1x1xf32>
    %538 = vector.shape_cast %537 : vector<1x1x1x1xf32> to vector<1x1xf32>
    %539 = vector.broadcast %538 : vector<1x1xf32> to vector<8x16xf32>
    %540 = arith.addf %536, %539 : vector<8x16xf32>
    %cst_334 = arith.constant 2.000000e-01 : f32
    %541 = vector.broadcast %cst_334 : f32 to vector<8x16xf32>
    %542 = arith.mulf %541, %540 : vector<8x16xf32>
    %543 = arith.maximumf %540, %542 : vector<8x16xf32>
    %544 = vector.extract_strided_slice %525 {offsets = [8, 0], sizes = [8, 16], strides = [1, 1]} : vector<16x16xf32> to vector<8x16xf32>
    %545 = arith.addf %543, %544 : vector<8x16xf32>
    %cst_335 = arith.constant dense<0xFF800000> : vector<8xf32>
    %546 = vector.multi_reduction <maximumf>, %545, %cst_335 [1] : vector<8x16xf32> to vector<8xf32>
    %547 = vector.shape_cast %546 : vector<8xf32> to vector<8x1xf32>
    %cst_336 = arith.constant -1.000000e+29 : f32
    %548 = vector.broadcast %cst_336 : f32 to vector<8x1xf32>
    %549 = arith.cmpf ogt, %547, %548 : vector<8x1xf32>
    %cst_337 = arith.constant 0.000000e+00 : f32
    %550 = vector.broadcast %cst_337 : f32 to vector<8x1xf32>
    %551 = arith.select %549, %547, %550 : vector<8x1xi1>, vector<8x1xf32>
    %552 = vector.broadcast %551 : vector<8x1xf32> to vector<8x16xf32>
    %553 = arith.subf %545, %552 : vector<8x16xf32>
    %554 = math.exp %553 : vector<8x16xf32>
    %cst_338 = arith.constant dense<0.000000e+00> : vector<8xf32>
    %555 = vector.multi_reduction <add>, %554, %cst_338 [1] : vector<8x16xf32> to vector<8xf32>
    %556 = vector.shape_cast %555 : vector<8xf32> to vector<8x1xf32>
    %cst_339 = arith.constant 0.000000e+00 : f32
    %557 = vector.broadcast %cst_339 : f32 to vector<8x1xf32>
    %558 = arith.cmpf ogt, %556, %557 : vector<8x1xf32>
    %cst_340 = arith.constant 1.000000e+00 : f32
    %559 = vector.broadcast %cst_340 : f32 to vector<8x1xf32>
    %560 = arith.select %558, %556, %559 : vector<8x1xi1>, vector<8x1xf32>
    %561 = tpu.reciprocal %560 {approx = true} : vector<8x1xf32> -> vector<8x1xf32>
    %562 = vector.broadcast %561 : vector<8x1xf32> to vector<8x16xf32>
    %563 = arith.mulf %554, %562 : vector<8x16xf32>
    %564 = arith.truncf %563 : vector<8x16xf32> to vector<8x16xbf16>
    %cst_341 = arith.constant dense<0.000000e+00> : vector<8x128xf32>
    %565 = tpu.matmul %564, %421, %cst_341 {dimension_numbers = #tpu.dot_dimension_numbers<[1], [0], [0], [1], [0, 0, 1, 1], [], []>} : vector<8x16xbf16>, vector<16x128xbf16>, vector<8x128xf32> -> vector<8x128xf32>
    %c0_342 = arith.constant 0 : index
    %c3_343 = arith.constant 3 : index
    %c0_344 = arith.constant 0 : index
    %c0_345 = arith.constant 0 : index
    %566 = vector.load %arg3[%c0_342, %c3_343, %c0_344, %c0_345] : memref<1x4x16x16xbf16, #tpu.memory_space<vmem>>, vector<1x1x16x16xbf16>
    %567 = vector.shape_cast %566 : vector<1x1x16x16xbf16> to vector<16x16xbf16>
    %568 = arith.extf %567 : vector<16x16xbf16> to vector<16x16xf32>
    %c0_346 = arith.constant 0 : index
    %c3_347 = arith.constant 3 : index
    %c0_348 = arith.constant 0 : index
    %c0_349 = arith.constant 0 : index
    %569 = vector.load %arg2[%c0_346, %c3_347, %c0_348, %c0_349] : memref<1x4x16x16xbf16, #tpu.memory_space<vmem>>, vector<1x1x16x16xbf16>
    %570 = vector.shape_cast %569 : vector<1x1x16x16xbf16> to vector<16x16xbf16>
    %571 = arith.extf %570 : vector<16x16xbf16> to vector<16x16xf32>
    %572 = vector.extract_strided_slice %424 {offsets = [0, 3], sizes = [8, 1], strides = [1, 1]} : vector<16x4xf32> to vector<8x1xf32>
    %573 = vector.extract_strided_slice %427 {offsets = [3, 0], sizes = [1, 16], strides = [1, 1]} : vector<4x16xf32> to vector<1x16xf32>
    %574 = vector.broadcast %572 : vector<8x1xf32> to vector<8x16xf32>
    %575 = vector.broadcast %573 : vector<1x16xf32> to vector<8x16xf32>
    %576 = arith.addf %574, %575 : vector<8x16xf32>
    %c1_350 = arith.constant 1 : index
    %c3_351 = arith.constant 3 : index
    %c0_352 = arith.constant 0 : index
    %c0_353 = arith.constant 0 : index
    %577 = vector.load %arg8[%c1_350, %c3_351, %c0_352, %c0_353] : memref<2x4x1x1xf32, #tpu.memory_space<vmem>>, vector<1x1x1x1xf32>
    %578 = vector.shape_cast %577 : vector<1x1x1x1xf32> to vector<1x1xf32>
    %579 = vector.extract_strided_slice %568 {offsets = [0, 0], sizes = [8, 16], strides = [1, 1]} : vector<16x16xf32> to vector<8x16xf32>
    %580 = vector.broadcast %578 : vector<1x1xf32> to vector<8x16xf32>
    %581 = arith.mulf %580, %579 : vector<8x16xf32>
    %582 = arith.addf %576, %581 : vector<8x16xf32>
    %c1_354 = arith.constant 1 : index
    %c3_355 = arith.constant 3 : index
    %c0_356 = arith.constant 0 : index
    %c0_357 = arith.constant 0 : index
    %583 = vector.load %arg9[%c1_354, %c3_355, %c0_356, %c0_357] : memref<2x4x1x1xf32, #tpu.memory_space<vmem>>, vector<1x1x1x1xf32>
    %584 = vector.shape_cast %583 : vector<1x1x1x1xf32> to vector<1x1xf32>
    %585 = vector.broadcast %584 : vector<1x1xf32> to vector<8x16xf32>
    %586 = arith.addf %582, %585 : vector<8x16xf32>
    %cst_358 = arith.constant 2.000000e-01 : f32
    %587 = vector.broadcast %cst_358 : f32 to vector<8x16xf32>
    %588 = arith.mulf %587, %586 : vector<8x16xf32>
    %589 = arith.maximumf %586, %588 : vector<8x16xf32>
    %590 = vector.extract_strided_slice %571 {offsets = [0, 0], sizes = [8, 16], strides = [1, 1]} : vector<16x16xf32> to vector<8x16xf32>
    %591 = arith.addf %589, %590 : vector<8x16xf32>
    %cst_359 = arith.constant dense<0xFF800000> : vector<8xf32>
    %592 = vector.multi_reduction <maximumf>, %591, %cst_359 [1] : vector<8x16xf32> to vector<8xf32>
    %593 = vector.shape_cast %592 : vector<8xf32> to vector<8x1xf32>
    %cst_360 = arith.constant -1.000000e+29 : f32
    %594 = vector.broadcast %cst_360 : f32 to vector<8x1xf32>
    %595 = arith.cmpf ogt, %593, %594 : vector<8x1xf32>
    %cst_361 = arith.constant 0.000000e+00 : f32
    %596 = vector.broadcast %cst_361 : f32 to vector<8x1xf32>
    %597 = arith.select %595, %593, %596 : vector<8x1xi1>, vector<8x1xf32>
    %598 = vector.broadcast %597 : vector<8x1xf32> to vector<8x16xf32>
    %599 = arith.subf %591, %598 : vector<8x16xf32>
    %600 = math.exp %599 : vector<8x16xf32>
    %cst_362 = arith.constant dense<0.000000e+00> : vector<8xf32>
    %601 = vector.multi_reduction <add>, %600, %cst_362 [1] : vector<8x16xf32> to vector<8xf32>
    %602 = vector.shape_cast %601 : vector<8xf32> to vector<8x1xf32>
    %cst_363 = arith.constant 0.000000e+00 : f32
    %603 = vector.broadcast %cst_363 : f32 to vector<8x1xf32>
    %604 = arith.cmpf ogt, %602, %603 : vector<8x1xf32>
    %cst_364 = arith.constant 1.000000e+00 : f32
    %605 = vector.broadcast %cst_364 : f32 to vector<8x1xf32>
    %606 = arith.select %604, %602, %605 : vector<8x1xi1>, vector<8x1xf32>
    %607 = tpu.reciprocal %606 {approx = true} : vector<8x1xf32> -> vector<8x1xf32>
    %608 = vector.broadcast %607 : vector<8x1xf32> to vector<8x16xf32>
    %609 = arith.mulf %600, %608 : vector<8x16xf32>
    %610 = arith.truncf %609 : vector<8x16xf32> to vector<8x16xbf16>
    %cst_365 = arith.constant dense<0.000000e+00> : vector<8x128xf32>
    %611 = tpu.matmul %610, %421, %cst_365 {dimension_numbers = #tpu.dot_dimension_numbers<[1], [0], [0], [1], [0, 0, 1, 1], [], []>} : vector<8x16xbf16>, vector<16x128xbf16>, vector<8x128xf32> -> vector<8x128xf32>
    %612 = arith.truncf %473 : vector<8x128xf32> to vector<8x128xbf16>
    %613 = vector.extract_strided_slice %419 {offsets = [0, 0, 0], sizes = [1, 8, 128], strides = [1, 1, 1]} : vector<1x16x128xf32> to vector<1x8x128xf32>
    %614 = vector.shape_cast %613 : vector<1x8x128xf32> to vector<8x128xf32>
    %615 = arith.truncf %614 : vector<8x128xf32> to vector<8x128xbf16>
    %c1_366 = arith.constant 1 : index
    %c0_367 = arith.constant 0 : index
    %c0_368 = arith.constant 0 : index
    %c0_369 = arith.constant 0 : index
    %616 = vector.load %arg10[%c1_366, %c0_367, %c0_368, %c0_369] : memref<2x4x128x128xbf16, #tpu.memory_space<vmem>>, vector<1x1x128x128xbf16>
    %617 = vector.shape_cast %616 : vector<1x1x128x128xbf16> to vector<128x128xbf16>
    %cst_370 = arith.constant dense<0.000000e+00> : vector<8x128xf32>
    %618 = tpu.matmul %612, %617, %cst_370 {dimension_numbers = #tpu.dot_dimension_numbers<[1], [0], [0], [1], [0, 0, 1, 1], [], []>} : vector<8x128xbf16>, vector<128x128xbf16>, vector<8x128xf32> -> vector<8x128xf32>
    %c1_371 = arith.constant 1 : index
    %c0_372 = arith.constant 0 : index
    %c0_373 = arith.constant 0 : index
    %c0_374 = arith.constant 0 : index
    %619 = vector.load %arg11[%c1_371, %c0_372, %c0_373, %c0_374] : memref<2x4x128x128xbf16, #tpu.memory_space<vmem>>, vector<1x1x128x128xbf16>
    %620 = vector.shape_cast %619 : vector<1x1x128x128xbf16> to vector<128x128xbf16>
    %cst_375 = arith.constant dense<0.000000e+00> : vector<8x128xf32>
    %621 = tpu.matmul %615, %620, %cst_375 {dimension_numbers = #tpu.dot_dimension_numbers<[1], [0], [0], [1], [0, 0, 1, 1], [], []>} : vector<8x128xbf16>, vector<128x128xbf16>, vector<8x128xf32> -> vector<8x128xf32>
    %622 = arith.addf %618, %621 : vector<8x128xf32>
    %c1_376 = arith.constant 1 : index
    %c0_377 = arith.constant 0 : index
    %c0_378 = arith.constant 0 : index
    %c0_379 = arith.constant 0 : index
    %623 = vector.load %arg12[%c1_376, %c0_377, %c0_378, %c0_379] : memref<2x4x1x128xf32, #tpu.memory_space<vmem>>, vector<1x1x1x128xf32>
    %624 = vector.shape_cast %623 : vector<1x1x1x128xf32> to vector<1x128xf32>
    %625 = vector.broadcast %624 : vector<1x128xf32> to vector<8x128xf32>
    %626 = arith.addf %622, %625 : vector<8x128xf32>
    %cst_380 = arith.constant 0.000000e+00 : f32
    %627 = vector.broadcast %cst_380 : f32 to vector<8x128xf32>
    %628 = arith.maximumf %626, %627 : vector<8x128xf32>
    %629 = vector.shape_cast %628 : vector<8x128xf32> to vector<1x8x128xf32>
    %630 = arith.truncf %519 : vector<8x128xf32> to vector<8x128xbf16>
    %631 = vector.extract_strided_slice %419 {offsets = [0, 8, 0], sizes = [1, 8, 128], strides = [1, 1, 1]} : vector<1x16x128xf32> to vector<1x8x128xf32>
    %632 = vector.shape_cast %631 : vector<1x8x128xf32> to vector<8x128xf32>
    %633 = arith.truncf %632 : vector<8x128xf32> to vector<8x128xbf16>
    %c1_381 = arith.constant 1 : index
    %c1_382 = arith.constant 1 : index
    %c0_383 = arith.constant 0 : index
    %c0_384 = arith.constant 0 : index
    %634 = vector.load %arg10[%c1_381, %c1_382, %c0_383, %c0_384] : memref<2x4x128x128xbf16, #tpu.memory_space<vmem>>, vector<1x1x128x128xbf16>
    %635 = vector.shape_cast %634 : vector<1x1x128x128xbf16> to vector<128x128xbf16>
    %cst_385 = arith.constant dense<0.000000e+00> : vector<8x128xf32>
    %636 = tpu.matmul %630, %635, %cst_385 {dimension_numbers = #tpu.dot_dimension_numbers<[1], [0], [0], [1], [0, 0, 1, 1], [], []>} : vector<8x128xbf16>, vector<128x128xbf16>, vector<8x128xf32> -> vector<8x128xf32>
    %c1_386 = arith.constant 1 : index
    %c1_387 = arith.constant 1 : index
    %c0_388 = arith.constant 0 : index
    %c0_389 = arith.constant 0 : index
    %637 = vector.load %arg11[%c1_386, %c1_387, %c0_388, %c0_389] : memref<2x4x128x128xbf16, #tpu.memory_space<vmem>>, vector<1x1x128x128xbf16>
    %638 = vector.shape_cast %637 : vector<1x1x128x128xbf16> to vector<128x128xbf16>
    %cst_390 = arith.constant dense<0.000000e+00> : vector<8x128xf32>
    %639 = tpu.matmul %633, %638, %cst_390 {dimension_numbers = #tpu.dot_dimension_numbers<[1], [0], [0], [1], [0, 0, 1, 1], [], []>} : vector<8x128xbf16>, vector<128x128xbf16>, vector<8x128xf32> -> vector<8x128xf32>
    %640 = arith.addf %636, %639 : vector<8x128xf32>
    %c1_391 = arith.constant 1 : index
    %c1_392 = arith.constant 1 : index
    %c0_393 = arith.constant 0 : index
    %c0_394 = arith.constant 0 : index
    %641 = vector.load %arg12[%c1_391, %c1_392, %c0_393, %c0_394] : memref<2x4x1x128xf32, #tpu.memory_space<vmem>>, vector<1x1x1x128xf32>
    %642 = vector.shape_cast %641 : vector<1x1x1x128xf32> to vector<1x128xf32>
    %643 = vector.broadcast %642 : vector<1x128xf32> to vector<8x128xf32>
    %644 = arith.addf %640, %643 : vector<8x128xf32>
    %cst_395 = arith.constant 0.000000e+00 : f32
    %645 = vector.broadcast %cst_395 : f32 to vector<8x128xf32>
    %646 = arith.maximumf %644, %645 : vector<8x128xf32>
    %647 = vector.shape_cast %646 : vector<8x128xf32> to vector<1x8x128xf32>
    %648 = arith.truncf %565 : vector<8x128xf32> to vector<8x128xbf16>
    %649 = vector.extract_strided_slice %419 {offsets = [0, 8, 0], sizes = [1, 8, 128], strides = [1, 1, 1]} : vector<1x16x128xf32> to vector<1x8x128xf32>
    %650 = vector.shape_cast %649 : vector<1x8x128xf32> to vector<8x128xf32>
    %651 = arith.truncf %650 : vector<8x128xf32> to vector<8x128xbf16>
    %c1_396 = arith.constant 1 : index
    %c2_397 = arith.constant 2 : index
    %c0_398 = arith.constant 0 : index
    %c0_399 = arith.constant 0 : index
    %652 = vector.load %arg10[%c1_396, %c2_397, %c0_398, %c0_399] : memref<2x4x128x128xbf16, #tpu.memory_space<vmem>>, vector<1x1x128x128xbf16>
    %653 = vector.shape_cast %652 : vector<1x1x128x128xbf16> to vector<128x128xbf16>
    %cst_400 = arith.constant dense<0.000000e+00> : vector<8x128xf32>
    %654 = tpu.matmul %648, %653, %cst_400 {dimension_numbers = #tpu.dot_dimension_numbers<[1], [0], [0], [1], [0, 0, 1, 1], [], []>} : vector<8x128xbf16>, vector<128x128xbf16>, vector<8x128xf32> -> vector<8x128xf32>
    %c1_401 = arith.constant 1 : index
    %c2_402 = arith.constant 2 : index
    %c0_403 = arith.constant 0 : index
    %c0_404 = arith.constant 0 : index
    %655 = vector.load %arg11[%c1_401, %c2_402, %c0_403, %c0_404] : memref<2x4x128x128xbf16, #tpu.memory_space<vmem>>, vector<1x1x128x128xbf16>
    %656 = vector.shape_cast %655 : vector<1x1x128x128xbf16> to vector<128x128xbf16>
    %cst_405 = arith.constant dense<0.000000e+00> : vector<8x128xf32>
    %657 = tpu.matmul %651, %656, %cst_405 {dimension_numbers = #tpu.dot_dimension_numbers<[1], [0], [0], [1], [0, 0, 1, 1], [], []>} : vector<8x128xbf16>, vector<128x128xbf16>, vector<8x128xf32> -> vector<8x128xf32>
    %658 = arith.addf %654, %657 : vector<8x128xf32>
    %c1_406 = arith.constant 1 : index
    %c2_407 = arith.constant 2 : index
    %c0_408 = arith.constant 0 : index
    %c0_409 = arith.constant 0 : index
    %659 = vector.load %arg12[%c1_406, %c2_407, %c0_408, %c0_409] : memref<2x4x1x128xf32, #tpu.memory_space<vmem>>, vector<1x1x1x128xf32>
    %660 = vector.shape_cast %659 : vector<1x1x1x128xf32> to vector<1x128xf32>
    %661 = vector.broadcast %660 : vector<1x128xf32> to vector<8x128xf32>
    %662 = arith.addf %658, %661 : vector<8x128xf32>
    %cst_410 = arith.constant 0.000000e+00 : f32
    %663 = vector.broadcast %cst_410 : f32 to vector<8x128xf32>
    %664 = arith.maximumf %662, %663 : vector<8x128xf32>
    %665 = vector.shape_cast %664 : vector<8x128xf32> to vector<1x8x128xf32>
    %666 = arith.truncf %611 : vector<8x128xf32> to vector<8x128xbf16>
    %667 = vector.extract_strided_slice %419 {offsets = [0, 0, 0], sizes = [1, 8, 128], strides = [1, 1, 1]} : vector<1x16x128xf32> to vector<1x8x128xf32>
    %668 = vector.shape_cast %667 : vector<1x8x128xf32> to vector<8x128xf32>
    %669 = arith.truncf %668 : vector<8x128xf32> to vector<8x128xbf16>
    %c1_411 = arith.constant 1 : index
    %c3_412 = arith.constant 3 : index
    %c0_413 = arith.constant 0 : index
    %c0_414 = arith.constant 0 : index
    %670 = vector.load %arg10[%c1_411, %c3_412, %c0_413, %c0_414] : memref<2x4x128x128xbf16, #tpu.memory_space<vmem>>, vector<1x1x128x128xbf16>
    %671 = vector.shape_cast %670 : vector<1x1x128x128xbf16> to vector<128x128xbf16>
    %cst_415 = arith.constant dense<0.000000e+00> : vector<8x128xf32>
    %672 = tpu.matmul %666, %671, %cst_415 {dimension_numbers = #tpu.dot_dimension_numbers<[1], [0], [0], [1], [0, 0, 1, 1], [], []>} : vector<8x128xbf16>, vector<128x128xbf16>, vector<8x128xf32> -> vector<8x128xf32>
    %c1_416 = arith.constant 1 : index
    %c3_417 = arith.constant 3 : index
    %c0_418 = arith.constant 0 : index
    %c0_419 = arith.constant 0 : index
    %673 = vector.load %arg11[%c1_416, %c3_417, %c0_418, %c0_419] : memref<2x4x128x128xbf16, #tpu.memory_space<vmem>>, vector<1x1x128x128xbf16>
    %674 = vector.shape_cast %673 : vector<1x1x128x128xbf16> to vector<128x128xbf16>
    %cst_420 = arith.constant dense<0.000000e+00> : vector<8x128xf32>
    %675 = tpu.matmul %669, %674, %cst_420 {dimension_numbers = #tpu.dot_dimension_numbers<[1], [0], [0], [1], [0, 0, 1, 1], [], []>} : vector<8x128xbf16>, vector<128x128xbf16>, vector<8x128xf32> -> vector<8x128xf32>
    %676 = arith.addf %672, %675 : vector<8x128xf32>
    %c1_421 = arith.constant 1 : index
    %c3_422 = arith.constant 3 : index
    %c0_423 = arith.constant 0 : index
    %c0_424 = arith.constant 0 : index
    %677 = vector.load %arg12[%c1_421, %c3_422, %c0_423, %c0_424] : memref<2x4x1x128xf32, #tpu.memory_space<vmem>>, vector<1x1x1x128xf32>
    %678 = vector.shape_cast %677 : vector<1x1x1x128xf32> to vector<1x128xf32>
    %679 = vector.broadcast %678 : vector<1x128xf32> to vector<8x128xf32>
    %680 = arith.addf %676, %679 : vector<8x128xf32>
    %cst_425 = arith.constant 0.000000e+00 : f32
    %681 = vector.broadcast %cst_425 : f32 to vector<8x128xf32>
    %682 = arith.maximumf %680, %681 : vector<8x128xf32>
    %683 = vector.shape_cast %682 : vector<8x128xf32> to vector<1x8x128xf32>
    %684 = vector.shape_cast %629 : vector<1x8x128xf32> to vector<8x128xf32>
    %685 = arith.truncf %684 : vector<8x128xf32> to vector<8x128xbf16>
    %c1_426 = arith.constant 1 : index
    %c0_427 = arith.constant 0 : index
    %c0_428 = arith.constant 0 : index
    %c0_429 = arith.constant 0 : index
    %686 = vector.load %arg14[%c1_426, %c0_427, %c0_428, %c0_429] : memref<2x2x128x128xbf16, #tpu.memory_space<vmem>>, vector<1x1x128x128xbf16>
    %687 = vector.shape_cast %686 : vector<1x1x128x128xbf16> to vector<128x128xbf16>
    %cst_430 = arith.constant dense<0.000000e+00> : vector<8x128xf32>
    %688 = tpu.matmul %685, %687, %cst_430 {dimension_numbers = #tpu.dot_dimension_numbers<[1], [0], [0], [1], [0, 0, 1, 1], [], []>} : vector<8x128xbf16>, vector<128x128xbf16>, vector<8x128xf32> -> vector<8x128xf32>
    %c1_431 = arith.constant 1 : index
    %c0_432 = arith.constant 0 : index
    %c0_433 = arith.constant 0 : index
    %c0_434 = arith.constant 0 : index
    %689 = vector.load %arg15[%c1_431, %c0_432, %c0_433, %c0_434] : memref<2x2x1x128xf32, #tpu.memory_space<vmem>>, vector<1x1x1x128xf32>
    %690 = vector.shape_cast %689 : vector<1x1x1x128xf32> to vector<1x128xf32>
    %691 = vector.broadcast %690 : vector<1x128xf32> to vector<8x128xf32>
    %692 = arith.addf %688, %691 : vector<8x128xf32>
    %693 = math.tanh %692 : vector<8x128xf32>
    %694 = vector.shape_cast %693 : vector<8x128xf32> to vector<1x8x128xf32>
    %cst_435 = arith.constant dense<0.000000e+00> : vector<1x128xf32>
    %695 = vector.multi_reduction <add>, %694, %cst_435 [1] : vector<1x8x128xf32> to vector<1x128xf32>
    %cst_436 = arith.constant 8.000000e+00 : f32
    %696 = vector.broadcast %cst_436 : f32 to vector<1x128xf32>
    %697 = arith.divf %695, %696 : vector<1x128xf32>
    %c1_437 = arith.constant 1 : index
    %c0_438 = arith.constant 0 : index
    %c0_439 = arith.constant 0 : index
    %c0_440 = arith.constant 0 : index
    %698 = vector.load %arg13[%c1_437, %c0_438, %c0_439, %c0_440] : memref<2x2x1x128xf32, #tpu.memory_space<vmem>>, vector<1x1x1x128xf32>
    %699 = vector.shape_cast %698 : vector<1x1x1x128xf32> to vector<1x128xf32>
    %700 = arith.mulf %699, %697 : vector<1x128xf32>
    %cst_441 = arith.constant dense<0.000000e+00> : vector<1xf32>
    %701 = vector.multi_reduction <add>, %700, %cst_441 [1] : vector<1x128xf32> to vector<1xf32>
    %702 = vector.shape_cast %701 : vector<1xf32> to vector<1x1xf32>
    %703 = vector.shape_cast %683 : vector<1x8x128xf32> to vector<8x128xf32>
    %704 = arith.truncf %703 : vector<8x128xf32> to vector<8x128xbf16>
    %c1_442 = arith.constant 1 : index
    %c0_443 = arith.constant 0 : index
    %c0_444 = arith.constant 0 : index
    %c0_445 = arith.constant 0 : index
    %705 = vector.load %arg14[%c1_442, %c0_443, %c0_444, %c0_445] : memref<2x2x128x128xbf16, #tpu.memory_space<vmem>>, vector<1x1x128x128xbf16>
    %706 = vector.shape_cast %705 : vector<1x1x128x128xbf16> to vector<128x128xbf16>
    %cst_446 = arith.constant dense<0.000000e+00> : vector<8x128xf32>
    %707 = tpu.matmul %704, %706, %cst_446 {dimension_numbers = #tpu.dot_dimension_numbers<[1], [0], [0], [1], [0, 0, 1, 1], [], []>} : vector<8x128xbf16>, vector<128x128xbf16>, vector<8x128xf32> -> vector<8x128xf32>
    %c1_447 = arith.constant 1 : index
    %c0_448 = arith.constant 0 : index
    %c0_449 = arith.constant 0 : index
    %c0_450 = arith.constant 0 : index
    %708 = vector.load %arg15[%c1_447, %c0_448, %c0_449, %c0_450] : memref<2x2x1x128xf32, #tpu.memory_space<vmem>>, vector<1x1x1x128xf32>
    %709 = vector.shape_cast %708 : vector<1x1x1x128xf32> to vector<1x128xf32>
    %710 = vector.broadcast %709 : vector<1x128xf32> to vector<8x128xf32>
    %711 = arith.addf %707, %710 : vector<8x128xf32>
    %712 = math.tanh %711 : vector<8x128xf32>
    %713 = vector.shape_cast %712 : vector<8x128xf32> to vector<1x8x128xf32>
    %cst_451 = arith.constant dense<0.000000e+00> : vector<1x128xf32>
    %714 = vector.multi_reduction <add>, %713, %cst_451 [1] : vector<1x8x128xf32> to vector<1x128xf32>
    %cst_452 = arith.constant 8.000000e+00 : f32
    %715 = vector.broadcast %cst_452 : f32 to vector<1x128xf32>
    %716 = arith.divf %714, %715 : vector<1x128xf32>
    %c1_453 = arith.constant 1 : index
    %c0_454 = arith.constant 0 : index
    %c0_455 = arith.constant 0 : index
    %c0_456 = arith.constant 0 : index
    %717 = vector.load %arg13[%c1_453, %c0_454, %c0_455, %c0_456] : memref<2x2x1x128xf32, #tpu.memory_space<vmem>>, vector<1x1x1x128xf32>
    %718 = vector.shape_cast %717 : vector<1x1x1x128xf32> to vector<1x128xf32>
    %719 = arith.mulf %718, %716 : vector<1x128xf32>
    %cst_457 = arith.constant dense<0.000000e+00> : vector<1xf32>
    %720 = vector.multi_reduction <add>, %719, %cst_457 [1] : vector<1x128xf32> to vector<1xf32>
    %721 = vector.shape_cast %720 : vector<1xf32> to vector<1x1xf32>
    %722 = arith.maximumf %702, %721 : vector<1x1xf32>
    %723 = arith.subf %702, %722 : vector<1x1xf32>
    %724 = math.exp %723 : vector<1x1xf32>
    %725 = arith.subf %721, %722 : vector<1x1xf32>
    %726 = math.exp %725 : vector<1x1xf32>
    %727 = arith.addf %724, %726 : vector<1x1xf32>
    %728 = tpu.reciprocal %727 {approx = true} : vector<1x1xf32> -> vector<1x1xf32>
    %729 = arith.mulf %724, %728 : vector<1x1xf32>
    %730 = vector.shape_cast %729 : vector<1x1xf32> to vector<1x1x1xf32>
    %731 = vector.broadcast %730 : vector<1x1x1xf32> to vector<1x8x128xf32>
    %732 = arith.mulf %731, %629 : vector<1x8x128xf32>
    %733 = arith.mulf %726, %728 : vector<1x1xf32>
    %734 = vector.shape_cast %733 : vector<1x1xf32> to vector<1x1x1xf32>
    %735 = vector.broadcast %734 : vector<1x1x1xf32> to vector<1x8x128xf32>
    %736 = arith.mulf %735, %683 : vector<1x8x128xf32>
    %737 = arith.addf %732, %736 : vector<1x8x128xf32>
    %738 = vector.shape_cast %647 : vector<1x8x128xf32> to vector<8x128xf32>
    %739 = arith.truncf %738 : vector<8x128xf32> to vector<8x128xbf16>
    %c1_458 = arith.constant 1 : index
    %c1_459 = arith.constant 1 : index
    %c0_460 = arith.constant 0 : index
    %c0_461 = arith.constant 0 : index
    %740 = vector.load %arg14[%c1_458, %c1_459, %c0_460, %c0_461] : memref<2x2x128x128xbf16, #tpu.memory_space<vmem>>, vector<1x1x128x128xbf16>
    %741 = vector.shape_cast %740 : vector<1x1x128x128xbf16> to vector<128x128xbf16>
    %cst_462 = arith.constant dense<0.000000e+00> : vector<8x128xf32>
    %742 = tpu.matmul %739, %741, %cst_462 {dimension_numbers = #tpu.dot_dimension_numbers<[1], [0], [0], [1], [0, 0, 1, 1], [], []>} : vector<8x128xbf16>, vector<128x128xbf16>, vector<8x128xf32> -> vector<8x128xf32>
    %c1_463 = arith.constant 1 : index
    %c1_464 = arith.constant 1 : index
    %c0_465 = arith.constant 0 : index
    %c0_466 = arith.constant 0 : index
    %743 = vector.load %arg15[%c1_463, %c1_464, %c0_465, %c0_466] : memref<2x2x1x128xf32, #tpu.memory_space<vmem>>, vector<1x1x1x128xf32>
    %744 = vector.shape_cast %743 : vector<1x1x1x128xf32> to vector<1x128xf32>
    %745 = vector.broadcast %744 : vector<1x128xf32> to vector<8x128xf32>
    %746 = arith.addf %742, %745 : vector<8x128xf32>
    %747 = math.tanh %746 : vector<8x128xf32>
    %748 = vector.shape_cast %747 : vector<8x128xf32> to vector<1x8x128xf32>
    %cst_467 = arith.constant dense<0.000000e+00> : vector<1x128xf32>
    %749 = vector.multi_reduction <add>, %748, %cst_467 [1] : vector<1x8x128xf32> to vector<1x128xf32>
    %cst_468 = arith.constant 8.000000e+00 : f32
    %750 = vector.broadcast %cst_468 : f32 to vector<1x128xf32>
    %751 = arith.divf %749, %750 : vector<1x128xf32>
    %c1_469 = arith.constant 1 : index
    %c1_470 = arith.constant 1 : index
    %c0_471 = arith.constant 0 : index
    %c0_472 = arith.constant 0 : index
    %752 = vector.load %arg13[%c1_469, %c1_470, %c0_471, %c0_472] : memref<2x2x1x128xf32, #tpu.memory_space<vmem>>, vector<1x1x1x128xf32>
    %753 = vector.shape_cast %752 : vector<1x1x1x128xf32> to vector<1x128xf32>
    %754 = arith.mulf %753, %751 : vector<1x128xf32>
    %cst_473 = arith.constant dense<0.000000e+00> : vector<1xf32>
    %755 = vector.multi_reduction <add>, %754, %cst_473 [1] : vector<1x128xf32> to vector<1xf32>
    %756 = vector.shape_cast %755 : vector<1xf32> to vector<1x1xf32>
    %757 = vector.shape_cast %665 : vector<1x8x128xf32> to vector<8x128xf32>
    %758 = arith.truncf %757 : vector<8x128xf32> to vector<8x128xbf16>
    %c1_474 = arith.constant 1 : index
    %c1_475 = arith.constant 1 : index
    %c0_476 = arith.constant 0 : index
    %c0_477 = arith.constant 0 : index
    %759 = vector.load %arg14[%c1_474, %c1_475, %c0_476, %c0_477] : memref<2x2x128x128xbf16, #tpu.memory_space<vmem>>, vector<1x1x128x128xbf16>
    %760 = vector.shape_cast %759 : vector<1x1x128x128xbf16> to vector<128x128xbf16>
    %cst_478 = arith.constant dense<0.000000e+00> : vector<8x128xf32>
    %761 = tpu.matmul %758, %760, %cst_478 {dimension_numbers = #tpu.dot_dimension_numbers<[1], [0], [0], [1], [0, 0, 1, 1], [], []>} : vector<8x128xbf16>, vector<128x128xbf16>, vector<8x128xf32> -> vector<8x128xf32>
    %c1_479 = arith.constant 1 : index
    %c1_480 = arith.constant 1 : index
    %c0_481 = arith.constant 0 : index
    %c0_482 = arith.constant 0 : index
    %762 = vector.load %arg15[%c1_479, %c1_480, %c0_481, %c0_482] : memref<2x2x1x128xf32, #tpu.memory_space<vmem>>, vector<1x1x1x128xf32>
    %763 = vector.shape_cast %762 : vector<1x1x1x128xf32> to vector<1x128xf32>
    %764 = vector.broadcast %763 : vector<1x128xf32> to vector<8x128xf32>
    %765 = arith.addf %761, %764 : vector<8x128xf32>
    %766 = math.tanh %765 : vector<8x128xf32>
    %767 = vector.shape_cast %766 : vector<8x128xf32> to vector<1x8x128xf32>
    %cst_483 = arith.constant dense<0.000000e+00> : vector<1x128xf32>
    %768 = vector.multi_reduction <add>, %767, %cst_483 [1] : vector<1x8x128xf32> to vector<1x128xf32>
    %cst_484 = arith.constant 8.000000e+00 : f32
    %769 = vector.broadcast %cst_484 : f32 to vector<1x128xf32>
    %770 = arith.divf %768, %769 : vector<1x128xf32>
    %c1_485 = arith.constant 1 : index
    %c1_486 = arith.constant 1 : index
    %c0_487 = arith.constant 0 : index
    %c0_488 = arith.constant 0 : index
    %771 = vector.load %arg13[%c1_485, %c1_486, %c0_487, %c0_488] : memref<2x2x1x128xf32, #tpu.memory_space<vmem>>, vector<1x1x1x128xf32>
    %772 = vector.shape_cast %771 : vector<1x1x1x128xf32> to vector<1x128xf32>
    %773 = arith.mulf %772, %770 : vector<1x128xf32>
    %cst_489 = arith.constant dense<0.000000e+00> : vector<1xf32>
    %774 = vector.multi_reduction <add>, %773, %cst_489 [1] : vector<1x128xf32> to vector<1xf32>
    %775 = vector.shape_cast %774 : vector<1xf32> to vector<1x1xf32>
    %776 = arith.maximumf %756, %775 : vector<1x1xf32>
    %777 = arith.subf %756, %776 : vector<1x1xf32>
    %778 = math.exp %777 : vector<1x1xf32>
    %779 = arith.subf %775, %776 : vector<1x1xf32>
    %780 = math.exp %779 : vector<1x1xf32>
    %781 = arith.addf %778, %780 : vector<1x1xf32>
    %782 = tpu.reciprocal %781 {approx = true} : vector<1x1xf32> -> vector<1x1xf32>
    %783 = arith.mulf %778, %782 : vector<1x1xf32>
    %784 = vector.shape_cast %783 : vector<1x1xf32> to vector<1x1x1xf32>
    %785 = vector.broadcast %784 : vector<1x1x1xf32> to vector<1x8x128xf32>
    %786 = arith.mulf %785, %647 : vector<1x8x128xf32>
    %787 = arith.mulf %780, %782 : vector<1x1xf32>
    %788 = vector.shape_cast %787 : vector<1x1xf32> to vector<1x1x1xf32>
    %789 = vector.broadcast %788 : vector<1x1x1xf32> to vector<1x8x128xf32>
    %790 = arith.mulf %789, %665 : vector<1x8x128xf32>
    %791 = arith.addf %786, %790 : vector<1x8x128xf32>
    %792 = tpu.concatenate %737, %791 in 1 : vector<1x8x128xf32>, vector<1x8x128xf32> -> vector<1x16x128xf32>
    %c0_490 = arith.constant 0 : index
    %c0_491 = arith.constant 0 : index
    %c0_492 = arith.constant 0 : index
    %793 = vector.load %arg16[%c0_490, %c0_491, %c0_492] : memref<1x16x128xf32, #tpu.memory_space<vmem>>, vector<1x16x128xf32>
    tpu.vector_store %arg16[%c0_490, %c0_491, %c0_492], %792 {strides = array<i32>} : memref<1x16x128xf32, #tpu.memory_space<vmem>>, vector<1x16x128xf32>,
    return
  }
  func.func @transform_0(%arg0: i32) -> (i32, i32, i32) {
    %c0_i32 = arith.constant 0 : i32
    %c0_i32_0 = arith.constant 0 : i32
    %c0_i32_1 = arith.constant 0 : i32
    return %arg0, %c0_i32, %c0_i32_0 : i32, i32, i32
  }
  func.func @transform_1(%arg0: i32) -> (i32, i32, i32, i32) {
    %c0_i32 = arith.constant 0 : i32
    %c0_i32_0 = arith.constant 0 : i32
    %c0_i32_1 = arith.constant 0 : i32
    %c0_i32_2 = arith.constant 0 : i32
    return %arg0, %c0_i32, %c0_i32_0, %c0_i32_1 : i32, i32, i32, i32
  }
  func.func @transform_2(%arg0: i32) -> (i32, i32, i32, i32) {
    %c0_i32 = arith.constant 0 : i32
    %c0_i32_0 = arith.constant 0 : i32
    %c0_i32_1 = arith.constant 0 : i32
    %c0_i32_2 = arith.constant 0 : i32
    return %arg0, %c0_i32, %c0_i32_0, %c0_i32_1 : i32, i32, i32, i32
  }
  func.func @transform_3(%arg0: i32) -> (i32, i32, i32, i32) {
    %c0_i32 = arith.constant 0 : i32
    %c0_i32_0 = arith.constant 0 : i32
    %c0_i32_1 = arith.constant 0 : i32
    %c0_i32_2 = arith.constant 0 : i32
    %c0_i32_3 = arith.constant 0 : i32
    return %c0_i32, %c0_i32_0, %c0_i32_1, %c0_i32_2 : i32, i32, i32, i32
  }
  func.func @transform_4(%arg0: i32) -> (i32, i32, i32, i32) {
    %c0_i32 = arith.constant 0 : i32
    %c0_i32_0 = arith.constant 0 : i32
    %c0_i32_1 = arith.constant 0 : i32
    %c0_i32_2 = arith.constant 0 : i32
    %c0_i32_3 = arith.constant 0 : i32
    return %c0_i32, %c0_i32_0, %c0_i32_1, %c0_i32_2 : i32, i32, i32, i32
  }
  func.func @transform_5(%arg0: i32) -> (i32, i32, i32) {
    %c0_i32 = arith.constant 0 : i32
    %c0_i32_0 = arith.constant 0 : i32
    %c0_i32_1 = arith.constant 0 : i32
    %c0_i32_2 = arith.constant 0 : i32
    return %c0_i32, %c0_i32_0, %c0_i32_1 : i32, i32, i32
  }
  func.func @transform_6(%arg0: i32) -> (i32, i32, i32) {
    %c0_i32 = arith.constant 0 : i32
    %c0_i32_0 = arith.constant 0 : i32
    %c0_i32_1 = arith.constant 0 : i32
    %c0_i32_2 = arith.constant 0 : i32
    return %c0_i32, %c0_i32_0, %c0_i32_1 : i32, i32, i32
  }
  func.func @transform_7(%arg0: i32) -> (i32, i32, i32, i32) {
    %c0_i32 = arith.constant 0 : i32
    %c0_i32_0 = arith.constant 0 : i32
    %c0_i32_1 = arith.constant 0 : i32
    %c0_i32_2 = arith.constant 0 : i32
    %c0_i32_3 = arith.constant 0 : i32
    return %c0_i32, %c0_i32_0, %c0_i32_1, %c0_i32_2 : i32, i32, i32, i32
  }
  func.func @transform_8(%arg0: i32) -> (i32, i32, i32, i32) {
    %c0_i32 = arith.constant 0 : i32
    %c0_i32_0 = arith.constant 0 : i32
    %c0_i32_1 = arith.constant 0 : i32
    %c0_i32_2 = arith.constant 0 : i32
    %c0_i32_3 = arith.constant 0 : i32
    return %c0_i32, %c0_i32_0, %c0_i32_1, %c0_i32_2 : i32, i32, i32, i32
  }
  func.func @transform_9(%arg0: i32) -> (i32, i32, i32, i32) {
    %c0_i32 = arith.constant 0 : i32
    %c0_i32_0 = arith.constant 0 : i32
    %c0_i32_1 = arith.constant 0 : i32
    %c0_i32_2 = arith.constant 0 : i32
    %c0_i32_3 = arith.constant 0 : i32
    return %c0_i32, %c0_i32_0, %c0_i32_1, %c0_i32_2 : i32, i32, i32, i32
  }
  func.func @transform_10(%arg0: i32) -> (i32, i32, i32, i32) {
    %c0_i32 = arith.constant 0 : i32
    %c0_i32_0 = arith.constant 0 : i32
    %c0_i32_1 = arith.constant 0 : i32
    %c0_i32_2 = arith.constant 0 : i32
    %c0_i32_3 = arith.constant 0 : i32
    return %c0_i32, %c0_i32_0, %c0_i32_1, %c0_i32_2 : i32, i32, i32, i32
  }
  func.func @transform_11(%arg0: i32) -> (i32, i32, i32, i32) {
    %c0_i32 = arith.constant 0 : i32
    %c0_i32_0 = arith.constant 0 : i32
    %c0_i32_1 = arith.constant 0 : i32
    %c0_i32_2 = arith.constant 0 : i32
    %c0_i32_3 = arith.constant 0 : i32
    return %c0_i32, %c0_i32_0, %c0_i32_1, %c0_i32_2 : i32, i32, i32, i32
  }
  func.func @transform_12(%arg0: i32) -> (i32, i32, i32, i32) {
    %c0_i32 = arith.constant 0 : i32
    %c0_i32_0 = arith.constant 0 : i32
    %c0_i32_1 = arith.constant 0 : i32
    %c0_i32_2 = arith.constant 0 : i32
    %c0_i32_3 = arith.constant 0 : i32
    return %c0_i32, %c0_i32_0, %c0_i32_1, %c0_i32_2 : i32, i32, i32, i32
  }
  func.func @transform_13(%arg0: i32) -> (i32, i32, i32, i32) {
    %c0_i32 = arith.constant 0 : i32
    %c0_i32_0 = arith.constant 0 : i32
    %c0_i32_1 = arith.constant 0 : i32
    %c0_i32_2 = arith.constant 0 : i32
    %c0_i32_3 = arith.constant 0 : i32
    return %c0_i32, %c0_i32_0, %c0_i32_1, %c0_i32_2 : i32, i32, i32, i32
  }
  func.func @transform_14(%arg0: i32) -> (i32, i32, i32, i32) {
    %c0_i32 = arith.constant 0 : i32
    %c0_i32_0 = arith.constant 0 : i32
    %c0_i32_1 = arith.constant 0 : i32
    %c0_i32_2 = arith.constant 0 : i32
    %c0_i32_3 = arith.constant 0 : i32
    return %c0_i32, %c0_i32_0, %c0_i32_1, %c0_i32_2 : i32, i32, i32, i32
  }
  func.func @transform_15(%arg0: i32) -> (i32, i32, i32) {
    %c0_i32 = arith.constant 0 : i32
    %c0_i32_0 = arith.constant 0 : i32
    %c0_i32_1 = arith.constant 0 : i32
    return %arg0, %c0_i32, %c0_i32_0 : i32, i32, i32
  }
}

</mosaic_0001>

<llo_original>
// kernel: hstg_attn_forward.1
$region0: #{hstg_attn_forward.1}
  #allocation0 [shape = 'u32[]', space=smem, size = 0x4, offset = 0x4, fixed_abs, tag = 'smem constant byte address 0x4 - core index']
  #allocation1 [shape = 'u32[72,128]{1,0:T(1,128)}', space=vmem, size = 0x9000, scoped, tag = 'internal scratch']
  %s0 = inlined_call_operand.vmem [shape: f32[2,16,128], index: 0, kind: input, shape index: {}]
  %s1 = inlined_call_operand.vmem [shape: bf16[2,4,16,16], index: 1, kind: input, shape index: {}]
  %s2 = inlined_call_operand.hbm [shape: bf16[2,4,16,16], index: 2, kind: input, shape index: {}]
  %s3 = inlined_call_operand.hbm [shape: bf16[2,2,128,128], index: 3, kind: input, shape index: {}]
  %s4 = inlined_call_operand.vmem [shape: f32[2,2,1,128], index: 4, kind: input, shape index: {}]
  %s5 = inlined_call_operand.vmem [shape: bf16[2,4,128], index: 5, kind: input, shape index: {}]
  %s6 = inlined_call_operand.vmem [shape: bf16[2,4,128], index: 6, kind: input, shape index: {}]
  %s7 = inlined_call_operand.vmem [shape: f32[2,4,1,1], index: 7, kind: input, shape index: {}]
  %s8 = inlined_call_operand.vmem [shape: f32[2,4,1,1], index: 8, kind: input, shape index: {}]
  %s9 = inlined_call_operand.hbm [shape: bf16[2,4,128,128], index: 9, kind: input, shape index: {}]
  %s10 = inlined_call_operand.hbm [shape: bf16[2,4,128,128], index: 10, kind: input, shape index: {}]
  %s11 = inlined_call_operand.vmem [shape: f32[2,4,1,128], index: 11, kind: input, shape index: {}]
  %s12 = inlined_call_operand.vmem [shape: f32[2,2,1,128], index: 12, kind: input, shape index: {}]
  %s13 = inlined_call_operand.hbm [shape: bf16[2,2,128,128], index: 13, kind: input, shape index: {}]
  %s14 = inlined_call_operand.vmem [shape: f32[2,2,1,128], index: 14, kind: input, shape index: {}]
  %s15 = inlined_call_operand.hbm [shape: f32[2,16,128], index: 15, kind: output, shape index: {}]
  %s16 = sld [smem:[#allocation0]]
  $region113: #{hstg_attn_forward.1} parent=0
    _
  %s18 = ssub.s32 1, %s16
  %s19 = scalar_select 0, %s18, %s16
  $region1: #{hstg_attn_forward.1} parent=0
    #allocation2 [shape = 'u8[32768]{0}', space=vmem, size = 0x8000, scoped, tag = 'input window, operand 2']
    #allocation3 [shape = 's32[2]{0}', space=sflag, size = 0x8, scoped, tag = 'scoped memory for hstg_attn_forward.1']
    #allocation4 [shape = 's32[2]{0}', space=sflag, size = 0x8, scoped, tag = 'scoped memory for hstg_attn_forward.1']
    #allocation5 [shape = 'u8[131072]{0}', space=vmem, size = 0x20000, scoped, tag = 'input window, operand 3, single buffered']
    #allocation6 [shape = 's32[1]{0}', space=sflag, size = 0x4, scoped, tag = 'scoped memory for hstg_attn_forward.1']
    #allocation7 [shape = 'u8[262144]{0}', space=vmem, size = 0x40000, scoped, tag = 'input window, operand 9, single buffered']
    #allocation8 [shape = 'u8[262144]{0}', space=vmem, size = 0x40000, scoped, tag = 'input window, operand 10, single buffered']
    #allocation9 [shape = 's32[1]{0}', space=sflag, size = 0x4, scoped, tag = 'scoped memory for hstg_attn_forward.1']
    #allocation10 [shape = 'u8[131072]{0}', space=vmem, size = 0x20000, scoped, tag = 'input window, operand 13, single buffered']
    #allocation11 [shape = 'u8[16384]{0}', space=vmem, size = 0x4000, scoped, tag = 'output window, operand 0']
    %20 = vsyncpa [#allocation3], 0
    %s21 = scalar_lea.sflag [#allocation3], 1
    %22 = vsyncpa %s21, 0
    %23 = vsyncpa [#allocation6], 0
    %24 = vsyncpa [#allocation9], 0
    %25 = vsyncpa [#allocation4], 0
    %s26 = scalar_lea.sflag [#allocation4], 1
    %27 = vsyncpa %s26, 0
    loop: start=0, step=1, limit=4
    $region2: #{hstg_attn_forward.1} parent=1 // loop_pre_header
      _
    $region3: #{hstg_attn_forward.1} parent=1 // loop_header
      %s29 = sphi 0, %s33
      %p30 = scmp.ge.s32.totalorder %s29, 4
      %s39 = sphi 0, %s41
      %s42 = sphi 0, %s39
      %s43 = sphi 0, %s42
      %s59 = sphi 0, %s43
      %s65 = sphi 0, %s67
      %s68 = sphi 0, %s65
      %s69 = sphi 0, %s68
      %s85 = sphi 0, %s69
      %s91 = sphi 0, %s93
      %s94 = sphi 0, %s91
      %s95 = sphi 0, %s94
      %s111 = sphi 0, %s95
      %s115 = sphi 0, %s115
      %s117 = sphi 0, %s115
      %s118 = sphi 0, %s117
      %s132 = sphi 0, %s118
      %s136 = sphi 0, %s136
      %s138 = sphi 0, %s136
      %s139 = sphi 0, %s138
      %s153 = sphi 0, %s139
      %s157 = sphi 0, %s157
      %s159 = sphi 0, %s157
      %s160 = sphi 0, %s159
      %s174 = sphi 0, %s160
      %s178 = sphi 0, %s178
      %s180 = sphi 0, %s178
      %s181 = sphi 0, %s180
      %s195 = sphi 0, %s181
      %s199 = sphi 0, %s199
      %s201 = sphi 0, %s199
      %s202 = sphi 0, %s201
      %s216 = sphi 0, %s202
      %s220 = sphi 0, %s220
      %s222 = sphi 0, %s220
      %s223 = sphi 0, %s222
      %s237 = sphi 0, %s223
      %s241 = sphi 0, %s241
      %s243 = sphi 0, %s241
      %s244 = sphi 0, %s243
      %s258 = sphi 0, %s244
      %s262 = sphi 0, %s262
      %s264 = sphi 0, %s262
      %s265 = sphi 0, %s264
      %s279 = sphi 0, %s265
      %s283 = sphi 0, %s283
      %s285 = sphi 0, %s283
      %s286 = sphi 0, %s285
      %s300 = sphi 0, %s286
      %s304 = sphi 0, %s304
      %s306 = sphi 0, %s304
      %s307 = sphi 0, %s306
      %s321 = sphi 0, %s307
      %s325 = sphi 0, %s325
      %s327 = sphi 0, %s325
      %s328 = sphi 0, %s327
      %s342 = sphi 0, %s328
      %s346 = sphi 0, %s346
      %s348 = sphi 0, %s346
      %s349 = sphi 0, %s348
      %s363 = sphi 0, %s349
      %s369 = sphi 0, %s371
      %s372 = sphi 0, %s369
      %s373 = sphi 0, %s372
      %s389 = sphi 0, %s373
    $region4: #{hstg_attn_forward.1} parent=1 // loop_header_branch
      %32 = sbr.rel (%p30) target = $region8
    $region5: #{hstg_attn_forward.1} parent=1 // loop_body
      %s34 = ssub.s32 %s29, 1
      %s35 = ssub.s32 %s29, 2
      %s36 = sadd.s32 %s29, 1
      %s37 = ssub.s32 %s29, %s36
      %p38 = scmp.eq.s32.totalorder %s37, 0
      %s40 = sadd.s32 %s39, 1
      %s41 = scalar_select %p38, %s39, %s40
      %p44 = pneg %p38
      %p45 = scmp.eq.s32.totalorder %s29, 1
      %p46 = por %p44, %p45
      %p47 = scmp.ne.s32.totalorder %s39, %s42
      %p48 = scmp.eq.s32.totalorder %s29, 0
      %p49 = por %p47, %p48
      %p50 = scmp.ne.s32.totalorder %s39, %s42
      %p51 = scmp.eq.s32.totalorder %s34, 1
      %p52 = por %p50, %p51
      %p53 = scmp.ne.s32.totalorder %s42, %s43
      %p54 = scmp.eq.s32.totalorder %s34, 0
      %p55 = por %p53, %p54
      %p56 = scmp.ne.s32.totalorder %s42, %s43
      %p57 = scmp.eq.s32.totalorder %s35, 1
      %p58 = por %p56, %p57
      %p60 = scmp.ne.s32.totalorder %s43, %s59
      %p61 = scmp.eq.s32.totalorder %s35, 0
      %p62 = por %p60, %p61
      %s63 = ssub.s32 %s29, %s36
      %p64 = scmp.eq.s32.totalorder %s63, 0
      %s66 = sadd.s32 %s65, 1
      %s67 = scalar_select %p64, %s65, %s66
      %p70 = pneg %p64
      %p71 = scmp.eq.s32.totalorder %s29, 1
      %p72 = por %p70, %p71
      %p73 = scmp.ne.s32.totalorder %s65, %s68
      %p74 = scmp.eq.s32.totalorder %s29, 0
      %p75 = por %p73, %p74
      %p76 = scmp.ne.s32.totalorder %s65, %s68
      %p77 = scmp.eq.s32.totalorder %s34, 1
      %p78 = por %p76, %p77
      %p79 = scmp.ne.s32.totalorder %s68, %s69
      %p80 = scmp.eq.s32.totalorder %s34, 0
      %p81 = por %p79, %p80
      %p82 = scmp.ne.s32.totalorder %s68, %s69
      %p83 = scmp.eq.s32.totalorder %s35, 1
      %p84 = por %p82, %p83
      %p86 = scmp.ne.s32.totalorder %s69, %s85
      %p87 = scmp.eq.s32.totalorder %s35, 0
      %p88 = por %p86, %p87
      %s89 = ssub.s32 %s29, %s36
      %p90 = scmp.eq.s32.totalorder %s89, 0
      %s92 = sadd.s32 %s91, 1
      %s93 = scalar_select %p90, %s91, %s92
      %p96 = pneg %p90
      %p97 = scmp.eq.s32.totalorder %s29, 1
      %p98 = por %p96, %p97
      %p99 = scmp.ne.s32.totalorder %s91, %s94
      %p100 = scmp.eq.s32.totalorder %s29, 0
      %p101 = por %p99, %p100
      %p102 = scmp.ne.s32.totalorder %s91, %s94
      %p103 = scmp.eq.s32.totalorder %s34, 1
      %p104 = por %p102, %p103
      %p105 = scmp.ne.s32.totalorder %s94, %s95
      %p106 = scmp.eq.s32.totalorder %s34, 0
      %p107 = por %p105, %p106
      %p108 = scmp.ne.s32.totalorder %s94, %s95
      %p109 = scmp.eq.s32.totalorder %s35, 1
      %p110 = por %p108, %p109
      %p112 = scmp.ne.s32.totalorder %s95, %s111
      %p113 = scmp.eq.s32.totalorder %s35, 0
      %p114 = por %p112, %p113
      %s116 = sadd.s32 %s115, 1
      %p119 = scmp.eq.s32.totalorder %s29, 1
      %p120 = scmp.ne.s32.totalorder %s115, %s117
      %p121 = scmp.eq.s32.totalorder %s29, 0
      %p122 = por %p120, %p121
      %p123 = scmp.ne.s32.totalorder %s115, %s117
      %p124 = scmp.eq.s32.totalorder %s34, 1
      %p125 = por %p123, %p124
      %p126 = scmp.ne.s32.totalorder %s117, %s118
      %p127 = scmp.eq.s32.totalorder %s34, 0
      %p128 = por %p126, %p127
      %p129 = scmp.ne.s32.totalorder %s117, %s118
      %p130 = scmp.eq.s32.totalorder %s35, 1
      %p131 = por %p129, %p130
      %p133 = scmp.ne.s32.totalorder %s118, %s132
      %p134 = scmp.eq.s32.totalorder %s35, 0
      %p135 = por %p133, %p134
      %s137 = sadd.s32 %s136, 1
      %p140 = scmp.eq.s32.totalorder %s29, 1
      %p141 = scmp.ne.s32.totalorder %s136, %s138
      %p142 = scmp.eq.s32.totalorder %s29, 0
      %p143 = por %p141, %p142
      %p144 = scmp.ne.s32.totalorder %s136, %s138
      %p145 = scmp.eq.s32.totalorder %s34, 1
      %p146 = por %p144, %p145
      %p147 = scmp.ne.s32.totalorder %s138, %s139
      %p148 = scmp.eq.s32.totalorder %s34, 0
      %p149 = por %p147, %p148
      %p150 = scmp.ne.s32.totalorder %s138, %s139
      %p151 = scmp.eq.s32.totalorder %s35, 1
      %p152 = por %p150, %p151
      %p154 = scmp.ne.s32.totalorder %s139, %s153
      %p155 = scmp.eq.s32.totalorder %s35, 0
      %p156 = por %p154, %p155
      %s158 = sadd.s32 %s157, 1
      %p161 = scmp.eq.s32.totalorder %s29, 1
      %p162 = scmp.ne.s32.totalorder %s157, %s159
      %p163 = scmp.eq.s32.totalorder %s29, 0
      %p164 = por %p162, %p163
      %p165 = scmp.ne.s32.totalorder %s157, %s159
      %p166 = scmp.eq.s32.totalorder %s34, 1
      %p167 = por %p165, %p166
      %p168 = scmp.ne.s32.totalorder %s159, %s160
      %p169 = scmp.eq.s32.totalorder %s34, 0
      %p170 = por %p168, %p169
      %p171 = scmp.ne.s32.totalorder %s159, %s160
      %p172 = scmp.eq.s32.totalorder %s35, 1
      %p173 = por %p171, %p172
      %p175 = scmp.ne.s32.totalorder %s160, %s174
      %p176 = scmp.eq.s32.totalorder %s35, 0
      %p177 = por %p175, %p176
      %s179 = sadd.s32 %s178, 1
      %p182 = scmp.eq.s32.totalorder %s29, 1
      %p183 = scmp.ne.s32.totalorder %s178, %s180
      %p184 = scmp.eq.s32.totalorder %s29, 0
      %p185 = por %p183, %p184
      %p186 = scmp.ne.s32.totalorder %s178, %s180
      %p187 = scmp.eq.s32.totalorder %s34, 1
      %p188 = por %p186, %p187
      %p189 = scmp.ne.s32.totalorder %s180, %s181
      %p190 = scmp.eq.s32.totalorder %s34, 0
      %p191 = por %p189, %p190
      %p192 = scmp.ne.s32.totalorder %s180, %s181
      %p193 = scmp.eq.s32.totalorder %s35, 1
      %p194 = por %p192, %p193
      %p196 = scmp.ne.s32.totalorder %s181, %s195
      %p197 = scmp.eq.s32.totalorder %s35, 0
      %p198 = por %p196, %p197
      %s200 = sadd.s32 %s199, 1
      %p203 = scmp.eq.s32.totalorder %s29, 1
      %p204 = scmp.ne.s32.totalorder %s199, %s201
      %p205 = scmp.eq.s32.totalorder %s29, 0
      %p206 = por %p204, %p205
      %p207 = scmp.ne.s32.totalorder %s199, %s201
      %p208 = scmp.eq.s32.totalorder %s34, 1
      %p209 = por %p207, %p208
      %p210 = scmp.ne.s32.totalorder %s201, %s202
      %p211 = scmp.eq.s32.totalorder %s34, 0
      %p212 = por %p210, %p211
      %p213 = scmp.ne.s32.totalorder %s201, %s202
      %p214 = scmp.eq.s32.totalorder %s35, 1
      %p215 = por %p213, %p214
      %p217 = scmp.ne.s32.totalorder %s202, %s216
      %p218 = scmp.eq.s32.totalorder %s35, 0
      %p219 = por %p217, %p218
      %s221 = sadd.s32 %s220, 1
      %p224 = scmp.eq.s32.totalorder %s29, 1
      %p225 = scmp.ne.s32.totalorder %s220, %s222
      %p226 = scmp.eq.s32.totalorder %s29, 0
      %p227 = por %p225, %p226
      %p228 = scmp.ne.s32.totalorder %s220, %s222
      %p229 = scmp.eq.s32.totalorder %s34, 1
      %p230 = por %p228, %p229
      %p231 = scmp.ne.s32.totalorder %s222, %s223
      %p232 = scmp.eq.s32.totalorder %s34, 0
      %p233 = por %p231, %p232
      %p234 = scmp.ne.s32.totalorder %s222, %s223
      %p235 = scmp.eq.s32.totalorder %s35, 1
      %p236 = por %p234, %p235
      %p238 = scmp.ne.s32.totalorder %s223, %s237
      %p239 = scmp.eq.s32.totalorder %s35, 0
      %p240 = por %p238, %p239
      %s242 = sadd.s32 %s241, 1
      %p245 = scmp.eq.s32.totalorder %s29, 1
      %p246 = scmp.ne.s32.totalorder %s241, %s243
      %p247 = scmp.eq.s32.totalorder %s29, 0
      %p248 = por %p246, %p247
      %p249 = scmp.ne.s32.totalorder %s241, %s243
      %p250 = scmp.eq.s32.totalorder %s34, 1
      %p251 = por %p249, %p250
      %p252 = scmp.ne.s32.totalorder %s243, %s244
      %p253 = scmp.eq.s32.totalorder %s34, 0
      %p254 = por %p252, %p253
      %p255 = scmp.ne.s32.totalorder %s243, %s244
      %p256 = scmp.eq.s32.totalorder %s35, 1
      %p257 = por %p255, %p256
      %p259 = scmp.ne.s32.totalorder %s244, %s258
      %p260 = scmp.eq.s32.totalorder %s35, 0
      %p261 = por %p259, %p260
      %s263 = sadd.s32 %s262, 1
      %p266 = scmp.eq.s32.totalorder %s29, 1
      %p267 = scmp.ne.s32.totalorder %s262, %s264
      %p268 = scmp.eq.s32.totalorder %s29, 0
      %p269 = por %p267, %p268
      %p270 = scmp.ne.s32.totalorder %s262, %s264
      %p271 = scmp.eq.s32.totalorder %s34, 1
      %p272 = por %p270, %p271
      %p273 = scmp.ne.s32.totalorder %s264, %s265
      %p274 = scmp.eq.s32.totalorder %s34, 0
      %p275 = por %p273, %p274
      %p276 = scmp.ne.s32.totalorder %s264, %s265
      %p277 = scmp.eq.s32.totalorder %s35, 1
      %p278 = por %p276, %p277
      %p280 = scmp.ne.s32.totalorder %s265, %s279
      %p281 = scmp.eq.s32.totalorder %s35, 0
      %p282 = por %p280, %p281
      %s284 = sadd.s32 %s283, 1
      %p287 = scmp.eq.s32.totalorder %s29, 1
      %p288 = scmp.ne.s32.totalorder %s283, %s285
      %p289 = scmp.eq.s32.totalorder %s29, 0
      %p290 = por %p288, %p289
      %p291 = scmp.ne.s32.totalorder %s283, %s285
      %p292 = scmp.eq.s32.totalorder %s34, 1
      %p293 = por %p291, %p292
      %p294 = scmp.ne.s32.totalorder %s285, %s286
      %p295 = scmp.eq.s32.totalorder %s34, 0
      %p296 = por %p294, %p295
      %p297 = scmp.ne.s32.totalorder %s285, %s286
      %p298 = scmp.eq.s32.totalorder %s35, 1
      %p299 = por %p297, %p298
      %p301 = scmp.ne.s32.totalorder %s286, %s300
      %p302 = scmp.eq.s32.totalorder %s35, 0
      %p303 = por %p301, %p302
      %s305 = sadd.s32 %s304, 1
      %p308 = scmp.eq.s32.totalorder %s29, 1
      %p309 = scmp.ne.s32.totalorder %s304, %s306
      %p310 = scmp.eq.s32.totalorder %s29, 0
      %p311 = por %p309, %p310
      %p312 = scmp.ne.s32.totalorder %s304, %s306
      %p313 = scmp.eq.s32.totalorder %s34, 1
      %p314 = por %p312, %p313
      %p315 = scmp.ne.s32.totalorder %s306, %s307
      %p316 = scmp.eq.s32.totalorder %s34, 0
      %p317 = por %p315, %p316
      %p318 = scmp.ne.s32.totalorder %s306, %s307
      %p319 = scmp.eq.s32.totalorder %s35, 1
      %p320 = por %p318, %p319
      %p322 = scmp.ne.s32.totalorder %s307, %s321
      %p323 = scmp.eq.s32.totalorder %s35, 0
      %p324 = por %p322, %p323
      %s326 = sadd.s32 %s325, 1
      %p329 = scmp.eq.s32.totalorder %s29, 1
      %p330 = scmp.ne.s32.totalorder %s325, %s327
      %p331 = scmp.eq.s32.totalorder %s29, 0
      %p332 = por %p330, %p331
      %p333 = scmp.ne.s32.totalorder %s325, %s327
      %p334 = scmp.eq.s32.totalorder %s34, 1
      %p335 = por %p333, %p334
      %p336 = scmp.ne.s32.totalorder %s327, %s328
      %p337 = scmp.eq.s32.totalorder %s34, 0
      %p338 = por %p336, %p337
      %p339 = scmp.ne.s32.totalorder %s327, %s328
      %p340 = scmp.eq.s32.totalorder %s35, 1
      %p341 = por %p339, %p340
      %p343 = scmp.ne.s32.totalorder %s328, %s342
      %p344 = scmp.eq.s32.totalorder %s35, 0
      %p345 = por %p343, %p344
      %s347 = sadd.s32 %s346, 1
      %p350 = scmp.eq.s32.totalorder %s29, 1
      %p351 = scmp.ne.s32.totalorder %s346, %s348
      %p352 = scmp.eq.s32.totalorder %s29, 0
      %p353 = por %p351, %p352
      %p354 = scmp.ne.s32.totalorder %s346, %s348
      %p355 = scmp.eq.s32.totalorder %s34, 1
      %p356 = por %p354, %p355
      %p357 = scmp.ne.s32.totalorder %s348, %s349
      %p358 = scmp.eq.s32.totalorder %s34, 0
      %p359 = por %p357, %p358
      %p360 = scmp.ne.s32.totalorder %s348, %s349
      %p361 = scmp.eq.s32.totalorder %s35, 1
      %p362 = por %p360, %p361
      %p364 = scmp.ne.s32.totalorder %s349, %s363
      %p365 = scmp.eq.s32.totalorder %s35, 0
      %p366 = por %p364, %p365
      %s367 = ssub.s32 %s29, %s36
      %p368 = scmp.eq.s32.totalorder %s367, 0
      %s370 = sadd.s32 %s369, 1
      %s371 = scalar_select %p368, %s369, %s370
      %p374 = pneg %p368
      %p375 = scmp.eq.s32.totalorder %s29, 1
      %p376 = por %p374, %p375
      %p377 = scmp.ne.s32.totalorder %s369, %s372
      %p378 = scmp.eq.s32.totalorder %s29, 0
      %p379 = por %p377, %p378
      %p380 = scmp.ne.s32.totalorder %s369, %s372
      %p381 = scmp.eq.s32.totalorder %s34, 1
      %p382 = por %p380, %p381
      %p383 = scmp.ne.s32.totalorder %s372, %s373
      %p384 = scmp.eq.s32.totalorder %s34, 0
      %p385 = por %p383, %p384
      %p386 = scmp.ne.s32.totalorder %s372, %s373
      %p387 = scmp.eq.s32.totalorder %s35, 1
      %p388 = por %p386, %p387
      %p390 = scmp.ne.s32.totalorder %s373, %s389
      %p391 = scmp.eq.s32.totalorder %s35, 0
      %p392 = por %p390, %p391
      %p393 = scmp.le.s32.totalorder 1, %s29
      %p394 = scmp.lt.s32.totalorder %s29, 3
      %p395 = pnand %p393, %p394
      %p396 = pneg %p395
      // Predicated region
      $region9: #{hstg_attn_forward.1} parent=5 // pred_check
        _
      $region10: #{hstg_attn_forward.1} parent=5 // pred_check_branch
        %398 = sbr.rel (%p395) target = $region12
      $region11: #{hstg_attn_forward.1} parent=5 // pred_region
        %s399 = ssub.s32 %s29, 1
        // Predicated region
        $region13: #{hstg_attn_forward.1} parent=11 // pred_check
          %p400 = pneg %p128
        $region14: #{hstg_attn_forward.1} parent=11 // pred_check_branch
          %402 = sbr.rel (%p400) target = $region16
        $region15: #{hstg_attn_forward.1} parent=11 // pred_region
          %404 = vsyncadd [#allocation6], 0
          %s405 = sshll.u32 %s3, 4
          %s406 = int_to_ptr.hbm [resolvable:$true] %s405
          %s407 = sshll.u32 [#allocation5], 4
          %s408 = int_to_ptr.vmem [resolvable:$true] %s407
          %413 = dma.hbm_to_vmem [thread:$0]  %s406, 4096, %s408, [#allocation6], 64, 64, 4
        $region16: #{hstg_attn_forward.1} parent=11 // pred_fallthru
          _
        // Predicated region
        $region17: #{hstg_attn_forward.1} parent=11 // pred_check
          %p414 = pneg %p149
        $region18: #{hstg_attn_forward.1} parent=11 // pred_check_branch
          %416 = sbr.rel (%p414) target = $region20
        $region19: #{hstg_attn_forward.1} parent=11 // pred_region
          _
        $region20: #{hstg_attn_forward.1} parent=11 // pred_fallthru
          _
        // Predicated region
        $region21: #{hstg_attn_forward.1} parent=11 // pred_check
          %p417 = pneg %p170
        $region22: #{hstg_attn_forward.1} parent=11 // pred_check_branch
          %419 = sbr.rel (%p417) target = $region24
        $region23: #{hstg_attn_forward.1} parent=11 // pred_region
          _
        $region24: #{hstg_attn_forward.1} parent=11 // pred_fallthru
          _
        // Predicated region
        $region25: #{hstg_attn_forward.1} parent=11 // pred_check
          %p420 = pneg %p191
        $region26: #{hstg_attn_forward.1} parent=11 // pred_check_branch
          %422 = sbr.rel (%p420) target = $region28
        $region27: #{hstg_attn_forward.1} parent=11 // pred_region
          _
        $region28: #{hstg_attn_forward.1} parent=11 // pred_fallthru
          _
        // Predicated region
        $region29: #{hstg_attn_forward.1} parent=11 // pred_check
          %p423 = pneg %p212
        $region30: #{hstg_attn_forward.1} parent=11 // pred_check_branch
          %425 = sbr.rel (%p423) target = $region32
        $region31: #{hstg_attn_forward.1} parent=11 // pred_region
          _
        $region32: #{hstg_attn_forward.1} parent=11 // pred_fallthru
          _
        // Predicated region
        $region33: #{hstg_attn_forward.1} parent=11 // pred_check
          %p426 = pneg %p233
        $region34: #{hstg_attn_forward.1} parent=11 // pred_check_branch
          %428 = sbr.rel (%p426) target = $region36
        $region35: #{hstg_attn_forward.1} parent=11 // pred_region
          _
        $region36: #{hstg_attn_forward.1} parent=11 // pred_fallthru
          _
        // Predicated region
        $region37: #{hstg_attn_forward.1} parent=11 // pred_check
          %p429 = pneg %p254
        $region38: #{hstg_attn_forward.1} parent=11 // pred_check_branch
          %431 = sbr.rel (%p429) target = $region40
        $region39: #{hstg_attn_forward.1} parent=11 // pred_region
          %433 = vsyncadd [#allocation6], 0
          %s434 = sshll.u32 %s9, 4
          %s435 = int_to_ptr.hbm [resolvable:$true] %s434
          %s436 = sshll.u32 [#allocation7], 4
          %s437 = int_to_ptr.vmem [resolvable:$true] %s436
          %442 = dma.hbm_to_vmem [thread:$0]  %s435, 8192, %s437, [#allocation6], 64, 64, 4
        $region40: #{hstg_attn_forward.1} parent=11 // pred_fallthru
          _
        // Predicated region
        $region41: #{hstg_attn_forward.1} parent=11 // pred_check
          %p443 = pneg %p275
        $region42: #{hstg_attn_forward.1} parent=11 // pred_check_branch
          %445 = sbr.rel (%p443) target = $region44
        $region43: #{hstg_attn_forward.1} parent=11 // pred_region
          %447 = vsyncadd [#allocation9], 0
          %s448 = sshll.u32 %s10, 4
          %s449 = int_to_ptr.hbm [resolvable:$true] %s448
          %s450 = sshll.u32 [#allocation8], 4
          %s451 = int_to_ptr.vmem [resolvable:$true] %s450
          %456 = dma.hbm_to_vmem [thread:$0]  %s449, 8192, %s451, [#allocation9], 64, 64, 4
        $region44: #{hstg_attn_forward.1} parent=11 // pred_fallthru
          _
        // Predicated region
        $region45: #{hstg_attn_forward.1} parent=11 // pred_check
          %p457 = pneg %p296
        $region46: #{hstg_attn_forward.1} parent=11 // pred_check_branch
          %459 = sbr.rel (%p457) target = $region48
        $region47: #{hstg_attn_forward.1} parent=11 // pred_region
          _
        $region48: #{hstg_attn_forward.1} parent=11 // pred_fallthru
          _
        // Predicated region
        $region49: #{hstg_attn_forward.1} parent=11 // pred_check
          %p460 = pneg %p317
        $region50: #{hstg_attn_forward.1} parent=11 // pred_check_branch
          %462 = sbr.rel (%p460) target = $region52
        $region51: #{hstg_attn_forward.1} parent=11 // pred_region
          _
        $region52: #{hstg_attn_forward.1} parent=11 // pred_fallthru
          _
        // Predicated region
        $region53: #{hstg_attn_forward.1} parent=11 // pred_check
          %p463 = pneg %p338
        $region54: #{hstg_attn_forward.1} parent=11 // pred_check_branch
          %465 = sbr.rel (%p463) target = $region56
        $region55: #{hstg_attn_forward.1} parent=11 // pred_region
          %467 = vsyncadd [#allocation9], 0
          %s468 = sshll.u32 %s13, 4
          %s469 = int_to_ptr.hbm [resolvable:$true] %s468
          %s470 = sshll.u32 [#allocation10], 4
          %s471 = int_to_ptr.vmem [resolvable:$true] %s470
          %476 = dma.hbm_to_vmem [thread:$0]  %s469, 4096, %s471, [#allocation9], 64, 64, 4
        $region56: #{hstg_attn_forward.1} parent=11 // pred_fallthru
          _
        // Predicated region
        $region57: #{hstg_attn_forward.1} parent=11 // pred_check
          %p477 = pneg %p359
        $region58: #{hstg_attn_forward.1} parent=11 // pred_check_branch
          %479 = sbr.rel (%p477) target = $region60
        $region59: #{hstg_attn_forward.1} parent=11 // pred_region
          _
        $region60: #{hstg_attn_forward.1} parent=11 // pred_fallthru
          _
      $region12: #{hstg_attn_forward.1} parent=5 // pred_fallthru
        _
      %p480 = scmp.lt.s32.totalorder %s29, 2
      // Predicated region
      $region61: #{hstg_attn_forward.1} parent=5 // pred_check
        %p481 = pneg %p480
      $region62: #{hstg_attn_forward.1} parent=5 // pred_check_branch
        %483 = sbr.rel (%p481) target = $region64
      $region63: #{hstg_attn_forward.1} parent=5 // pred_region
        // Predicated region
        $region65: #{hstg_attn_forward.1} parent=63 // pred_check
          %p484 = pneg %p49
        $region66: #{hstg_attn_forward.1} parent=63 // pred_check_branch
          %486 = sbr.rel (%p484) target = $region68
        $region67: #{hstg_attn_forward.1} parent=63 // pred_region
          %p487 = scmp.lt.s32.totalorder %s29, 1
          %s488 = scalar_select %p487, %s29, 1
          %s489 = smul.addr %s488, 2
          %s490 = smul.addr %s489, 8
          %s491 = scalar_lea.vmem %s0, %s490
        $region68: #{hstg_attn_forward.1} parent=63 // pred_fallthru
          _
        // Predicated region
        $region69: #{hstg_attn_forward.1} parent=63 // pred_check
          %p492 = pneg %p75
        $region70: #{hstg_attn_forward.1} parent=63 // pred_check_branch
          %494 = sbr.rel (%p492) target = $region72
        $region71: #{hstg_attn_forward.1} parent=63 // pred_region
          %p495 = scmp.lt.s32.totalorder %s29, 1
          %s496 = scalar_select %p495, %s29, 1
          %s497 = smul.addr %s496, 8
          %s498 = smul.addr %s497, 4
          %s499 = scalar_lea.vmem %s1, %s498
        $region72: #{hstg_attn_forward.1} parent=63 // pred_fallthru
          _
        // Predicated region
        $region73: #{hstg_attn_forward.1} parent=63 // pred_check
          %p500 = pneg %p101
        $region74: #{hstg_attn_forward.1} parent=63 // pred_check_branch
          %502 = sbr.rel (%p500) target = $region76
        $region75: #{hstg_attn_forward.1} parent=63 // pred_region
          %s503 = sand.u32 %s91, 1
          %s504 = scalar_lea.sflag [#allocation3], %s503
          %s505 = sand.u32 %s91, 1
          %s506 = smul.addr %s505, 32
          %s507 = scalar_lea.vmem [#allocation2], %s506
          %509 = vsyncadd %s504, 0
          %s510 = smul.addr %s29, 8
          %s511 = smul.addr %s510, 4
          %s512 = scalar_lea.hbm %s2, %s511
          %s513 = sshll.u32 %s512, 4
          %s514 = int_to_ptr.hbm [resolvable:$true] %s513
          %s515 = sshll.u32 %s507, 4
          %s516 = int_to_ptr.vmem [resolvable:$true] %s515
          %521 = dma.hbm_to_vmem [thread:$0]  %s514, 512, %s516, %s504, 64, 64, 4
        $region76: #{hstg_attn_forward.1} parent=63 // pred_fallthru
          _
      $region64: #{hstg_attn_forward.1} parent=5 // pred_fallthru
        _
      %p522 = scmp.le.s32.totalorder 1, %s29
      %p523 = scmp.lt.s32.totalorder %s29, 3
      %p524 = pnand %p522, %p523
      %p525 = pneg %p524
      // Predicated region
      $region77: #{hstg_attn_forward.1} parent=5 // pred_check
        _
      $region78: #{hstg_attn_forward.1} parent=5 // pred_check_branch
        %527 = sbr.rel (%p524) target = $region80
      $region79: #{hstg_attn_forward.1} parent=5 // pred_region
        %s528 = ssub.s32 %s29, 1
        %s529 = sand.u32 %s94, 1
        %s530 = scalar_lea.sflag [#allocation3], %s529
        %s531 = sand.u32 %s94, 1
        %s532 = smul.addr %s531, 32
        %s533 = scalar_lea.vmem [#allocation2], %s532
        // Predicated region
        $region81: #{hstg_attn_forward.1} parent=79 // pred_check
          %p534 = pneg %p107
        $region82: #{hstg_attn_forward.1} parent=79 // pred_check_branch
          %536 = sbr.rel (%p534) target = $region84
        $region83: #{hstg_attn_forward.1} parent=79 // pred_region
          %538 = dma.done %s530, 512
        $region84: #{hstg_attn_forward.1} parent=79 // pred_fallthru
          _
        // Predicated region
        $region85: #{hstg_attn_forward.1} parent=79 // pred_check
          %p539 = pneg %p128
        $region86: #{hstg_attn_forward.1} parent=79 // pred_check_branch
          %541 = sbr.rel (%p539) target = $region88
        $region87: #{hstg_attn_forward.1} parent=79 // pred_region
          %543 = dma.done [#allocation6], 4096
        $region88: #{hstg_attn_forward.1} parent=79 // pred_fallthru
          _
        // Predicated region
        $region89: #{hstg_attn_forward.1} parent=79 // pred_check
          %p544 = pneg %p254
        $region90: #{hstg_attn_forward.1} parent=79 // pred_check_branch
          %546 = sbr.rel (%p544) target = $region92
        $region91: #{hstg_attn_forward.1} parent=79 // pred_region
          %548 = dma.done [#allocation6], 8192
        $region92: #{hstg_attn_forward.1} parent=79 // pred_fallthru
          _
        // Predicated region
        $region93: #{hstg_attn_forward.1} parent=79 // pred_check
          %p549 = pneg %p275
        $region94: #{hstg_attn_forward.1} parent=79 // pred_check_branch
          %551 = sbr.rel (%p549) target = $region96
        $region95: #{hstg_attn_forward.1} parent=79 // pred_region
          %553 = dma.done [#allocation9], 8192
        $region96: #{hstg_attn_forward.1} parent=79 // pred_fallthru
          _
        // Predicated region
        $region97: #{hstg_attn_forward.1} parent=79 // pred_check
          %p554 = pneg %p338
        $region98: #{hstg_attn_forward.1} parent=79 // pred_check_branch
          %556 = sbr.rel (%p554) target = $region100
        $region99: #{hstg_attn_forward.1} parent=79 // pred_region
          %558 = dma.done [#allocation9], 4096
        $region100: #{hstg_attn_forward.1} parent=79 // pred_fallthru
          _
        %p559 = scmp.lt.s32.totalorder %s34, 1
        %s560 = scalar_select %p559, %s34, 1
        %s561 = smul.addr %s560, 2
        %s562 = smul.addr %s561, 8
        %s563 = scalar_lea.vmem %s0, %s562
        %p564 = pneg %p55
        %p565 = pneg %p52
        %p566 = scmp.lt.s32.totalorder %s34, 1
        %s567 = scalar_select %p566, %s34, 1
        %s568 = smul.addr %s567, 8
        %s569 = smul.addr %s568, 4
        %s570 = scalar_lea.vmem %s1, %s569
        %p571 = pneg %p81
        %p572 = pneg %p78
        %s573 = sand.u32 %s94, 1
        %s574 = scalar_lea.sflag [#allocation3], %s573
        %s575 = sand.u32 %s94, 1
        %s576 = smul.addr %s575, 32
        %s577 = scalar_lea.vmem [#allocation2], %s576
        %p578 = pneg %p107
        %p579 = pneg %p104
        %p580 = pneg %p128
        %p581 = pneg %p125
        %p582 = pneg %p149
        %p583 = pneg %p146
        %p584 = pneg %p170
        %p585 = pneg %p167
        %p586 = pneg %p191
        %p587 = pneg %p188
        %p588 = pneg %p212
        %p589 = pneg %p209
        %p590 = pneg %p233
        %p591 = pneg %p230
        %p592 = pneg %p254
        %p593 = pneg %p251
        %p594 = pneg %p275
        %p595 = pneg %p272
        %p596 = pneg %p296
        %p597 = pneg %p293
        %p598 = pneg %p317
        %p599 = pneg %p314
        %p600 = pneg %p338
        %p601 = pneg %p335
        %p602 = pneg %p359
        %p603 = pneg %p356
        %p604 = pneg %p385
        %p605 = pneg %p382
        %s606 = sand.u32 %s372, 1
        %s607 = scalar_lea.sflag [#allocation4], %s606
        %s608 = sand.u32 %s372, 1
        %s609 = smul.addr %s608, 16
        %s610 = scalar_lea.vmem [#allocation11], %s609
        %p611 = scmp.lt.s32.totalorder %s34, 1
        %s612 = scalar_select %p611, %s34, 1
        %s613 = smul.addr %s612, 2
        %s614 = smul.addr %s613, 8
        %s615 = scalar_lea.vmem %s0, %s614
        %p616 = scmp.lt.s32.totalorder %s34, 1
        %s617 = scalar_select %p616, %s34, 1
        %s618 = smul.addr %s617, 8
        %s619 = smul.addr %s618, 4
        %s620 = scalar_lea.vmem %s1, %s619
        %v622 = vld [vmem:[%s615] sm:$0xff]
        %v623 = vld [vmem:[%s615 + $0x8] sm:$0xff]
        %v624 = vpack.c.bf16 %v622, %v622
        %v625 = vpack.c.bf16 %v623, %v623
        %v626 = vld [vmem:[#allocation5] sm:$0xf]
        %v627 = vld [vmem:[#allocation5 + $0x4] sm:$0xf]
        %v628 = vld [vmem:[#allocation5 + $0x8] sm:$0xf]
        %v629 = vld [vmem:[#allocation5 + $0xc] sm:$0xf]
        %v630 = vld [vmem:[#allocation5 + $0x10] sm:$0xf]
        %v631 = vld [vmem:[#allocation5 + $0x14] sm:$0xf]
        %v632 = vld [vmem:[#allocation5 + $0x18] sm:$0xf]
        %v633 = vld [vmem:[#allocation5 + $0x1c] sm:$0xf]
        %v634 = vld [vmem:[#allocation5 + $0x20] sm:$0xf]
        %v635 = vld [vmem:[#allocation5 + $0x24] sm:$0xf]
        %v636 = vld [vmem:[#allocation5 + $0x28] sm:$0xf]
        %v637 = vld [vmem:[#allocation5 + $0x2c] sm:$0xf]
        %v638 = vld [vmem:[#allocation5 + $0x30] sm:$0xf]
        %v639 = vld [vmem:[#allocation5 + $0x34] sm:$0xf]
        %v640 = vld [vmem:[#allocation5 + $0x38] sm:$0xf]
        %v641 = vld [vmem:[#allocation5 + $0x3c] sm:$0xf]
        %v642 = vld [vmem:[%s4] sm:$0x1]
        %v644 = vperm.slane %v642, 0
        %v662 = vunpack.c.l.b16 %v626
        %v663 = vunpack.c.l.b16 %v627
        %v664 = vunpack.c.l.b16 %v628
        %v665 = vunpack.c.l.b16 %v629
        %v666 = vunpack.c.l.b16 %v630
        %v667 = vunpack.c.l.b16 %v631
        %v668 = vunpack.c.l.b16 %v632
        %v669 = vunpack.c.l.b16 %v633
        %v670 = vunpack.c.l.b16 %v634
        %v671 = vunpack.c.l.b16 %v635
        %v672 = vunpack.c.l.b16 %v636
        %v673 = vunpack.c.l.b16 %v637
        %v674 = vunpack.c.l.b16 %v638
        %v675 = vunpack.c.l.b16 %v639
        %v676 = vunpack.c.l.b16 %v640
        %v677 = vunpack.c.l.b16 %v641
        %v678 = vpack.c.b16 %v663, %v662
        %v679 = vpack.c.b16 %v665, %v664
        %v680 = vpack.c.b16 %v667, %v666
        %v681 = vpack.c.b16 %v669, %v668
        %v682 = vpack.c.b16 %v671, %v670
        %v683 = vpack.c.b16 %v673, %v672
        %v684 = vpack.c.b16 %v675, %v674
        %v685 = vpack.c.b16 %v677, %v676
        %694 = vmatpush.bf16.msra.mxu0 %v685
        %695 = vmatpush.bf16.msra.mxu0 %v684
        %696 = vmatpush.bf16.msra.mxu0 %v683
        %697 = vmatpush.bf16.msra.mxu0 %v682
        %698 = vmatpush.bf16.msra.mxu0 %v681
        %699 = vmatpush.bf16.msra.mxu0 %v680
        %700 = vmatpush.bf16.msra.mxu0 %v679
        %701 = vmatpush.bf16.msra.mxu0 %v678
        %702 = vmatmul.bf16.gmra.mxu0 %v624
        %v703 = vpop.f32.mrf.mxu0
        %v704 = vadd.f32 %v644, %v703
        %v705 = vpop.f32.mrf.mxu0
        %706 = vdwg.mxu0
        %s707 = scalar_lea.vmem [#allocation5], 64
        %v708 = vld [vmem:[%s707] sm:$0xf]
        %v709 = vld [vmem:[%s707 + $0x4] sm:$0xf]
        %v710 = vld [vmem:[%s707 + $0x8] sm:$0xf]
        %v711 = vld [vmem:[%s707 + $0xc] sm:$0xf]
        %v712 = vld [vmem:[%s707 + $0x10] sm:$0xf]
        %v713 = vld [vmem:[%s707 + $0x14] sm:$0xf]
        %v714 = vld [vmem:[%s707 + $0x18] sm:$0xf]
        %v715 = vld [vmem:[%s707 + $0x1c] sm:$0xf]
        %v716 = vld [vmem:[%s707 + $0x20] sm:$0xf]
        %v717 = vld [vmem:[%s707 + $0x24] sm:$0xf]
        %v718 = vld [vmem:[%s707 + $0x28] sm:$0xf]
        %v719 = vld [vmem:[%s707 + $0x2c] sm:$0xf]
        %v720 = vld [vmem:[%s707 + $0x30] sm:$0xf]
        %v721 = vld [vmem:[%s707 + $0x34] sm:$0xf]
        %v722 = vld [vmem:[%s707 + $0x38] sm:$0xf]
        %v723 = vld [vmem:[%s707 + $0x3c] sm:$0xf]
        %s724 = scalar_lea.vmem %s4, 1
        %v725 = vld [vmem:[%s724] sm:$0x1]
        %v727 = vperm.slane %v725, 0
        %v745 = vunpack.c.l.b16 %v708
        %v746 = vunpack.c.l.b16 %v709
        %v747 = vunpack.c.l.b16 %v710
        %v748 = vunpack.c.l.b16 %v711
        %v749 = vunpack.c.l.b16 %v712
        %v750 = vunpack.c.l.b16 %v713
        %v751 = vunpack.c.l.b16 %v714
        %v752 = vunpack.c.l.b16 %v715
        %v753 = vunpack.c.l.b16 %v716
        %v754 = vunpack.c.l.b16 %v717
        %v755 = vunpack.c.l.b16 %v718
        %v756 = vunpack.c.l.b16 %v719
        %v757 = vunpack.c.l.b16 %v720
        %v758 = vunpack.c.l.b16 %v721
        %v759 = vunpack.c.l.b16 %v722
        %v760 = vunpack.c.l.b16 %v723
        %v761 = vpack.c.b16 %v746, %v745
        %v762 = vpack.c.b16 %v748, %v747
        %v763 = vpack.c.b16 %v750, %v749
        %v764 = vpack.c.b16 %v752, %v751
        %v765 = vpack.c.b16 %v754, %v753
        %v766 = vpack.c.b16 %v756, %v755
        %v767 = vpack.c.b16 %v758, %v757
        %v768 = vpack.c.b16 %v760, %v759
        %777 = vmatpush.bf16.msra.mxu0 %v768
        %778 = vmatpush.bf16.msra.mxu0 %v767
        %779 = vmatpush.bf16.msra.mxu0 %v766
        %780 = vmatpush.bf16.msra.mxu0 %v765
        %781 = vmatpush.bf16.msra.mxu0 %v764
        %782 = vmatpush.bf16.msra.mxu0 %v763
        %783 = vmatpush.bf16.msra.mxu0 %v762
        %784 = vmatpush.bf16.msra.mxu0 %v761
        %785 = vmatmul.bf16.gmra.mxu0 %v625
        %v786 = vpop.f32.mrf.mxu0
        %v787 = vadd.f32 %v727, %v786
        %v788 = vpop.f32.mrf.mxu0
        %789 = vdwg.mxu0
        %v790 = vpack.c.bf16 %v704, %v704
        %v791 = vpack.c.bf16 %v787, %v787
        %v792 = vld [vmem:[%s6] sm:$0x3]
        %v795 = vunpack.c.l.b16 %v790
        %v796 = vunpack.c.l.b16 %v791
        %v797 = vpack.c.b16 %v796, %v795
        %799 = vmatpush.bf16.xpose.msra.mxu0 0
        %800 = vmatpush.bf16.xpose.msra.mxu0 0
        %801 = vmatpush.bf16.xpose.msra.mxu0 0
        %802 = vmatpush.bf16.xpose.msra.mxu0 0
        %803 = vmatpush.bf16.xpose.msra.mxu0 0
        %804 = vmatpush.bf16.xpose.msra.mxu0 0
        %805 = vmatpush.bf16.xpose.msra.mxu0 0
        %806 = vmatpush.bf16.xpose.msra.mxu0 %v792
        %807 = vmatmul.bf16.gmra.mxu0 %v797
        %v808 = vpop.f32.mrf.mxu0
        %v809 = vadd.f32 0.0, %v808
        %v810 = vpop.f32.mrf.mxu0
        %v811 = vadd.f32 0.0, %v810
        %812 = vdwg.mxu0
        %v813 = vld [vmem:[%s5] sm:$0x3]
        %814 = vmatpush.bf16.xpose.msra.mxu0 0
        %815 = vmatpush.bf16.xpose.msra.mxu0 0
        %816 = vmatpush.bf16.xpose.msra.mxu0 0
        %817 = vmatpush.bf16.xpose.msra.mxu0 0
        %818 = vmatpush.bf16.xpose.msra.mxu0 0
        %819 = vmatpush.bf16.xpose.msra.mxu0 0
        %820 = vmatpush.bf16.xpose.msra.mxu0 0
        %821 = vmatpush.bf16.xpose.msra.mxu0 %v797
        %822 = vmatmul.bf16.gmra.mxu0 %v813
        %v823 = vpop.f32.mrf.mxu0
        %v824 = vadd.f32 0.0, %v823
        %v825 = vpop.f32.mrf.mxu0
        %826 = vdwg.mxu0
        %v827 = vld [vmem:[%s533] sm:$0xf]
        %v828 = vunpack.c.l.bf16 %v827
        %v829 = vld [vmem:[%s620] sm:$0xf]
        %v830 = vunpack.c.l.bf16 %v829
        %832 = vset.pattern.permute.xlu0 0
        %833 = vperm.xlu0 %832, %v809
        %v834 = vpop.permute.xlu0 %833
        %v836 = vperm.slane %v824, 0
        %v837 = vadd.f32 %v834, %v836
        %v838 = vld [vmem:[%s7] sm:$0x1]
        %v840 = vperm.slane %v838, 0
        %841 = vset.pattern.permute.xlu0 0
        %842 = vperm.xlu0 %841, %v840
        %v843 = vpop.permute.xlu0 %842
        %v845 = vmul.f32 %v843, %v828
        %v846 = vadd.f32 %v837, %v845
        %v847 = vld [vmem:[%s8] sm:$0x1]
        %v849 = vperm.slane %v847, 0
        %850 = vset.pattern.permute.xlu0 0
        %851 = vperm.xlu0 %850, %v849
        %v852 = vpop.permute.xlu0 %851
        %v854 = vadd.f32 %v846, %v852
        %v855 = vmul.f32 %v854, 0.2
        %v856 = vmax.f32 %v854, %v855
        %v857 = vadd.f32 %v856, %v830
        %vm858 = vcmask 130048
        %v859 = vsel %vm858, %v857, -inf
        %860 = vmax.xlane.f32.xlu0 %v859
        %v861 = vpop.xlane.xlu0 %860
        %vm862 = vcmp.gt.f32.partialorder %v861, -1e+29
        %v863 = vsel %vm862, %v861, 0.0
        %v864 = vsub.f32 %v857, %v863
        %v865 = vmul.f32 %v864, 1.442695
        %v866 = vpow.pop %v865
        %v867 = vsel %vm858, %v866, 0.0
        %868 = vadd.xlane.f32.xlu0 %v867
        %v869 = vpop.xlane.xlu0 %868
        %vm870 = vcmp.gt.f32.partialorder %v869, 0.0
        %v871 = vsel %vm870, %v869, 1.0
        %v872 = vrcp.pop %v871
        %v873 = vmul.f32 %v866, %v872
        %v874 = vpack.c.bf16 %v873, %v873
        %v876 = vsel %vm858, %v874, 0
        %878 = vmatpush.bf16.msra.mxu0 0
        %879 = vmatpush.bf16.msra.mxu0 0
        %880 = vmatpush.bf16.msra.mxu0 0
        %881 = vmatpush.bf16.msra.mxu0 0
        %882 = vmatpush.bf16.msra.mxu0 0
        %883 = vmatpush.bf16.msra.mxu0 0
        %884 = vmatpush.bf16.msra.mxu0 0
        %885 = vmatpush.bf16.msra.mxu0 %v797
        %886 = vmatmul.bf16.gmra.mxu0 %v876
        %v887 = vpop.f32.mrf.mxu0
        %v888 = vadd.f32 0.0, %v887
        %v889 = vpop.f32.mrf.mxu0
        %890 = vdwg.mxu0
        %s891 = scalar_lea.vmem %s533, 8 [#allocation2]
        %v892 = vld [vmem:[%s891 + $0x4] sm:$0xf]
        %v893 = vunpack.c.l.bf16 %v892
        %s894 = scalar_lea.vmem %s620, 8
        %v895 = vld [vmem:[%s894 + $0x4] sm:$0xf]
        %v896 = vunpack.c.l.bf16 %v895
        %898 = vset.pattern.permute.xlu0 1
        %899 = vperm.xlu0 %898, %v811
        %v900 = vpop.permute.xlu0 %899
        %v902 = vperm.slane %v824, 1
        %v903 = vadd.f32 %v900, %v902
        %s904 = scalar_lea.vmem %s7, 1
        %v905 = vld [vmem:[%s904] sm:$0x1]
        %v907 = vperm.slane %v905, 0
        %908 = vset.pattern.permute.xlu0 0
        %909 = vperm.xlu0 %908, %v907
        %v910 = vpop.permute.xlu0 %909
        %v912 = vmul.f32 %v910, %v893
        %v913 = vadd.f32 %v903, %v912
        %s914 = scalar_lea.vmem %s8, 1
        %v915 = vld [vmem:[%s914] sm:$0x1]
        %v917 = vperm.slane %v915, 0
        %918 = vset.pattern.permute.xlu0 0
        %919 = vperm.xlu0 %918, %v917
        %v920 = vpop.permute.xlu0 %919
        %v922 = vadd.f32 %v913, %v920
        %v923 = vmul.f32 %v922, 0.2
        %v924 = vmax.f32 %v922, %v923
        %v925 = vadd.f32 %v924, %v896
        %v926 = vsel %vm858, %v925, -inf
        %927 = vmax.xlane.f32.xlu0 %v926
        %v928 = vpop.xlane.xlu0 %927
        %vm929 = vcmp.gt.f32.partialorder %v928, -1e+29
        %v930 = vsel %vm929, %v928, 0.0
        %v931 = vsub.f32 %v925, %v930
        %v932 = vmul.f32 %v931, 1.442695
        %v933 = vpow.pop %v932
        %v934 = vsel %vm858, %v933, 0.0
        %935 = vadd.xlane.f32.xlu0 %v934
        %v936 = vpop.xlane.xlu0 %935
        %vm937 = vcmp.gt.f32.partialorder %v936, 0.0
        %v938 = vsel %vm937, %v936, 1.0
        %v939 = vrcp.pop %v938
        %v940 = vmul.f32 %v933, %v939
        %v941 = vpack.c.bf16 %v940, %v940
        %v943 = vsel %vm858, %v941, 0
        %945 = vmatpush.bf16.msra.mxu0 0
        %946 = vmatpush.bf16.msra.mxu0 0
        %947 = vmatpush.bf16.msra.mxu0 0
        %948 = vmatpush.bf16.msra.mxu0 0
        %949 = vmatpush.bf16.msra.mxu0 0
        %950 = vmatpush.bf16.msra.mxu0 0
        %951 = vmatpush.bf16.msra.mxu0 0
        %952 = vmatpush.bf16.msra.mxu0 %v797
        %953 = vmatmul.bf16.gmra.mxu0 %v943
        %v954 = vpop.f32.mrf.mxu0
        %v955 = vadd.f32 0.0, %v954
        %v956 = vpop.f32.mrf.mxu0
        %957 = vdwg.mxu0
        %s958 = scalar_lea.vmem %s533, 16 [#allocation2]
        %v959 = vld [vmem:[%s958 + $0x4] sm:$0xf]
        %v960 = vunpack.c.l.bf16 %v959
        %s961 = scalar_lea.vmem %s620, 16
        %v962 = vld [vmem:[%s961 + $0x4] sm:$0xf]
        %v963 = vunpack.c.l.bf16 %v962
        %964 = vset.pattern.permute.xlu0 2
        %965 = vperm.xlu0 %964, %v811
        %v966 = vpop.permute.xlu0 %965
        %v968 = vperm.slane %v824, 2
        %v969 = vadd.f32 %v966, %v968
        %s970 = scalar_lea.vmem %s7, 2
        %v971 = vld [vmem:[%s970] sm:$0x1]
        %v973 = vperm.slane %v971, 0
        %974 = vset.pattern.permute.xlu0 0
        %975 = vperm.xlu0 %974, %v973
        %v976 = vpop.permute.xlu0 %975
        %v978 = vmul.f32 %v976, %v960
        %v979 = vadd.f32 %v969, %v978
        %s980 = scalar_lea.vmem %s8, 2
        %v981 = vld [vmem:[%s980] sm:$0x1]
        %v983 = vperm.slane %v981, 0
        %984 = vset.pattern.permute.xlu0 0
        %985 = vperm.xlu0 %984, %v983
        %v986 = vpop.permute.xlu0 %985
        %v988 = vadd.f32 %v979, %v986
        %v989 = vmul.f32 %v988, 0.2
        %v990 = vmax.f32 %v988, %v989
        %v991 = vadd.f32 %v990, %v963
        %v992 = vsel %vm858, %v991, -inf
        %993 = vmax.xlane.f32.xlu0 %v992
        %v994 = vpop.xlane.xlu0 %993
        %vm995 = vcmp.gt.f32.partialorder %v994, -1e+29
        %v996 = vsel %vm995, %v994, 0.0
        %v997 = vsub.f32 %v991, %v996
        %v998 = vmul.f32 %v997, 1.442695
        %v999 = vpow.pop %v998
        %v1000 = vsel %vm858, %v999, 0.0
        %1001 = vadd.xlane.f32.xlu0 %v1000
        %v1002 = vpop.xlane.xlu0 %1001
        %vm1003 = vcmp.gt.f32.partialorder %v1002, 0.0
        %v1004 = vsel %vm1003, %v1002, 1.0
        %v1005 = vrcp.pop %v1004
        %v1006 = vmul.f32 %v999, %v1005
        %v1007 = vpack.c.bf16 %v1006, %v1006
        %v1009 = vsel %vm858, %v1007, 0
        %1011 = vmatpush.bf16.msra.mxu0 0
        %1012 = vmatpush.bf16.msra.mxu0 0
        %1013 = vmatpush.bf16.msra.mxu0 0
        %1014 = vmatpush.bf16.msra.mxu0 0
        %1015 = vmatpush.bf16.msra.mxu0 0
        %1016 = vmatpush.bf16.msra.mxu0 0
        %1017 = vmatpush.bf16.msra.mxu0 0
        %1018 = vmatpush.bf16.msra.mxu0 %v797
        %1019 = vmatmul.bf16.gmra.mxu0 %v1009
        %v1020 = vpop.f32.mrf.mxu0
        %v1021 = vadd.f32 0.0, %v1020
        %v1022 = vpop.f32.mrf.mxu0
        %1023 = vdwg.mxu0
        %s1024 = scalar_lea.vmem %s533, 24 [#allocation2]
        %v1025 = vld [vmem:[%s1024] sm:$0xf]
        %v1026 = vunpack.c.l.bf16 %v1025
        %s1027 = scalar_lea.vmem %s620, 24
        %v1028 = vld [vmem:[%s1027] sm:$0xf]
        %v1029 = vunpack.c.l.bf16 %v1028
        %1030 = vset.pattern.permute.xlu0 3
        %1031 = vperm.xlu0 %1030, %v809
        %v1032 = vpop.permute.xlu0 %1031
        %v1034 = vperm.slane %v824, 3
        %v1035 = vadd.f32 %v1032, %v1034
        %s1036 = scalar_lea.vmem %s7, 3
        %v1037 = vld [vmem:[%s1036] sm:$0x1]
        %v1039 = vperm.slane %v1037, 0
        %1040 = vset.pattern.permute.xlu0 0
        %1041 = vperm.xlu0 %1040, %v1039
        %v1042 = vpop.permute.xlu0 %1041
        %v1044 = vmul.f32 %v1042, %v1026
        %v1045 = vadd.f32 %v1035, %v1044
        %s1046 = scalar_lea.vmem %s8, 3
        %v1047 = vld [vmem:[%s1046] sm:$0x1]
        %v1049 = vperm.slane %v1047, 0
        %1050 = vset.pattern.permute.xlu0 0
        %1051 = vperm.xlu0 %1050, %v1049
        %v1052 = vpop.permute.xlu0 %1051
        %v1054 = vadd.f32 %v1045, %v1052
        %v1055 = vmul.f32 %v1054, 0.2
        %v1056 = vmax.f32 %v1054, %v1055
        %v1057 = vadd.f32 %v1056, %v1029
        %v1058 = vsel %vm858, %v1057, -inf
        %1059 = vmax.xlane.f32.xlu0 %v1058
        %v1060 = vpop.xlane.xlu0 %1059
        %vm1061 = vcmp.gt.f32.partialorder %v1060, -1e+29
        %v1062 = vsel %vm1061, %v1060, 0.0
        %v1063 = vsub.f32 %v1057, %v1062
        %v1064 = vmul.f32 %v1063, 1.442695
        %v1065 = vpow.pop %v1064
        %v1066 = vsel %vm858, %v1065, 0.0
        %1067 = vadd.xlane.f32.xlu0 %v1066
        %v1068 = vpop.xlane.xlu0 %1067
        %vm1069 = vcmp.gt.f32.partialorder %v1068, 0.0
        %v1070 = vsel %vm1069, %v1068, 1.0
        %v1071 = vrcp.pop %v1070
        %v1072 = vmul.f32 %v1065, %v1071
        %v1073 = vpack.c.bf16 %v1072, %v1072
        %v1075 = vsel %vm858, %v1073, 0
        %1077 = vmatpush.bf16.msra.mxu0 0
        %1078 = vmatpush.bf16.msra.mxu0 0
        %1079 = vmatpush.bf16.msra.mxu0 0
        %1080 = vmatpush.bf16.msra.mxu0 0
        %1081 = vmatpush.bf16.msra.mxu0 0
        %1082 = vmatpush.bf16.msra.mxu0 0
        %1083 = vmatpush.bf16.msra.mxu0 0
        %1084 = vmatpush.bf16.msra.mxu0 %v797
        %1085 = vmatmul.bf16.gmra.mxu0 %v1075
        %v1086 = vpop.f32.mrf.mxu0
        %v1087 = vadd.f32 0.0, %v1086
        %v1088 = vpop.f32.mrf.mxu0
        %1089 = vdwg.mxu0
        %v1090 = vpack.c.bf16 %v888, %v888
        %v1091 = vld [vmem:[#allocation7] sm:$0xf]
        %v1092 = vld [vmem:[#allocation7 + $0x4] sm:$0xf]
        %v1093 = vld [vmem:[#allocation7 + $0x8] sm:$0xf]
        %v1094 = vld [vmem:[#allocation7 + $0xc] sm:$0xf]
        %v1095 = vld [vmem:[#allocation7 + $0x10] sm:$0xf]
        %v1096 = vld [vmem:[#allocation7 + $0x14] sm:$0xf]
        %v1097 = vld [vmem:[#allocation7 + $0x18] sm:$0xf]
        %v1098 = vld [vmem:[#allocation7 + $0x1c] sm:$0xf]
        %v1099 = vld [vmem:[#allocation7 + $0x20] sm:$0xf]
        %v1100 = vld [vmem:[#allocation7 + $0x24] sm:$0xf]
        %v1101 = vld [vmem:[#allocation7 + $0x28] sm:$0xf]
        %v1102 = vld [vmem:[#allocation7 + $0x2c] sm:$0xf]
        %v1103 = vld [vmem:[#allocation7 + $0x30] sm:$0xf]
        %v1104 = vld [vmem:[#allocation7 + $0x34] sm:$0xf]
        %v1105 = vld [vmem:[#allocation7 + $0x38] sm:$0xf]
        %v1106 = vld [vmem:[#allocation7 + $0x3c] sm:$0xf]
        %v1107 = vld [vmem:[#allocation8] sm:$0xf]
        %v1108 = vld [vmem:[#allocation8 + $0x4] sm:$0xf]
        %v1109 = vld [vmem:[#allocation8 + $0x8] sm:$0xf]
        %v1110 = vld [vmem:[#allocation8 + $0xc] sm:$0xf]
        %v1111 = vld [vmem:[#allocation8 + $0x10] sm:$0xf]
        %v1112 = vld [vmem:[#allocation8 + $0x14] sm:$0xf]
        %v1113 = vld [vmem:[#allocation8 + $0x18] sm:$0xf]
        %v1114 = vld [vmem:[#allocation8 + $0x1c] sm:$0xf]
        %v1115 = vld [vmem:[#allocation8 + $0x20] sm:$0xf]
        %v1116 = vld [vmem:[#allocation8 + $0x24] sm:$0xf]
        %v1117 = vld [vmem:[#allocation8 + $0x28] sm:$0xf]
        %v1118 = vld [vmem:[#allocation8 + $0x2c] sm:$0xf]
        %v1119 = vld [vmem:[#allocation8 + $0x30] sm:$0xf]
        %v1120 = vld [vmem:[#allocation8 + $0x34] sm:$0xf]
        %v1121 = vld [vmem:[#allocation8 + $0x38] sm:$0xf]
        %v1122 = vld [vmem:[#allocation8 + $0x3c] sm:$0xf]
        %v1139 = vunpack.c.l.b16 %v1107
        %v1140 = vunpack.c.l.b16 %v1108
        %v1141 = vunpack.c.l.b16 %v1109
        %v1142 = vunpack.c.l.b16 %v1110
        %v1143 = vunpack.c.l.b16 %v1111
        %v1144 = vunpack.c.l.b16 %v1112
        %v1145 = vunpack.c.l.b16 %v1113
        %v1146 = vunpack.c.l.b16 %v1114
        %v1147 = vunpack.c.l.b16 %v1115
        %v1148 = vunpack.c.l.b16 %v1116
        %v1149 = vunpack.c.l.b16 %v1117
        %v1150 = vunpack.c.l.b16 %v1118
        %v1151 = vunpack.c.l.b16 %v1119
        %v1152 = vunpack.c.l.b16 %v1120
        %v1153 = vunpack.c.l.b16 %v1121
        %v1154 = vunpack.c.l.b16 %v1122
        %v1155 = vpack.c.b16 %v1140, %v1139
        %v1156 = vpack.c.b16 %v1142, %v1141
        %v1157 = vpack.c.b16 %v1144, %v1143
        %v1158 = vpack.c.b16 %v1146, %v1145
        %v1159 = vpack.c.b16 %v1148, %v1147
        %v1160 = vpack.c.b16 %v1150, %v1149
        %v1161 = vpack.c.b16 %v1152, %v1151
        %v1162 = vpack.c.b16 %v1154, %v1153
        %1171 = vmatpush.bf16.msra.mxu0 %v1162
        %1172 = vmatpush.bf16.msra.mxu0 %v1161
        %1173 = vmatpush.bf16.msra.mxu0 %v1160
        %1174 = vmatpush.bf16.msra.mxu0 %v1159
        %1175 = vmatpush.bf16.msra.mxu0 %v1158
        %1176 = vmatpush.bf16.msra.mxu0 %v1157
        %1177 = vmatpush.bf16.msra.mxu0 %v1156
        %1178 = vmatpush.bf16.msra.mxu0 %v1155
        %1179 = vmatmul.bf16.gmra.mxu0 %v790
        %v1180 = vpop.f32.mrf.mxu0
        %v1181 = vadd.f32 0.0, %v1180
        %v1182 = vpop.f32.mrf.mxu0
        %1183 = vdwg.mxu0
        %v1200 = vunpack.c.l.b16 %v1091
        %v1201 = vunpack.c.l.b16 %v1092
        %v1202 = vunpack.c.l.b16 %v1093
        %v1203 = vunpack.c.l.b16 %v1094
        %v1204 = vunpack.c.l.b16 %v1095
        %v1205 = vunpack.c.l.b16 %v1096
        %v1206 = vunpack.c.l.b16 %v1097
        %v1207 = vunpack.c.l.b16 %v1098
        %v1208 = vunpack.c.l.b16 %v1099
        %v1209 = vunpack.c.l.b16 %v1100
        %v1210 = vunpack.c.l.b16 %v1101
        %v1211 = vunpack.c.l.b16 %v1102
        %v1212 = vunpack.c.l.b16 %v1103
        %v1213 = vunpack.c.l.b16 %v1104
        %v1214 = vunpack.c.l.b16 %v1105
        %v1215 = vunpack.c.l.b16 %v1106
        %v1216 = vpack.c.b16 %v1201, %v1200
        %v1217 = vpack.c.b16 %v1203, %v1202
        %v1218 = vpack.c.b16 %v1205, %v1204
        %v1219 = vpack.c.b16 %v1207, %v1206
        %v1220 = vpack.c.b16 %v1209, %v1208
        %v1221 = vpack.c.b16 %v1211, %v1210
        %v1222 = vpack.c.b16 %v1213, %v1212
        %v1223 = vpack.c.b16 %v1215, %v1214
        %1232 = vmatpush.bf16.msra.mxu0 %v1223
        %1233 = vmatpush.bf16.msra.mxu0 %v1222
        %1234 = vmatpush.bf16.msra.mxu0 %v1221
        %1235 = vmatpush.bf16.msra.mxu0 %v1220
        %1236 = vmatpush.bf16.msra.mxu0 %v1219
        %1237 = vmatpush.bf16.msra.mxu0 %v1218
        %1238 = vmatpush.bf16.msra.mxu0 %v1217
        %1239 = vmatpush.bf16.msra.mxu0 %v1216
        %1240 = vmatmul.bf16.gmra.mxu0 %v1090
        %v1241 = vpop.f32.mrf.mxu0
        %v1242 = vadd.f32 %v1181, %v1241
        %v1243 = vpop.f32.mrf.mxu0
        %1244 = vdwg.mxu0
        %v1245 = vld [vmem:[%s11] sm:$0x1]
        %v1247 = vperm.slane %v1245, 0
        %v1249 = vadd.f32 %v1242, %v1247
        %v1250 = vmax.f32 %v1249, 0.0
        %v1251 = vpack.c.bf16 %v955, %v955
        %s1252 = scalar_lea.vmem [#allocation7], 64
        %v1253 = vld [vmem:[%s1252] sm:$0xf]
        %v1254 = vld [vmem:[%s1252 + $0x4] sm:$0xf]
        %v1255 = vld [vmem:[%s1252 + $0x8] sm:$0xf]
        %v1256 = vld [vmem:[%s1252 + $0xc] sm:$0xf]
        %v1257 = vld [vmem:[%s1252 + $0x10] sm:$0xf]
        %v1258 = vld [vmem:[%s1252 + $0x14] sm:$0xf]
        %v1259 = vld [vmem:[%s1252 + $0x18] sm:$0xf]
        %v1260 = vld [vmem:[%s1252 + $0x1c] sm:$0xf]
        %v1261 = vld [vmem:[%s1252 + $0x20] sm:$0xf]
        %v1262 = vld [vmem:[%s1252 + $0x24] sm:$0xf]
        %v1263 = vld [vmem:[%s1252 + $0x28] sm:$0xf]
        %v1264 = vld [vmem:[%s1252 + $0x2c] sm:$0xf]
        %v1265 = vld [vmem:[%s1252 + $0x30] sm:$0xf]
        %v1266 = vld [vmem:[%s1252 + $0x34] sm:$0xf]
        %v1267 = vld [vmem:[%s1252 + $0x38] sm:$0xf]
        %v1268 = vld [vmem:[%s1252 + $0x3c] sm:$0xf]
        %s1269 = scalar_lea.vmem [#allocation8], 64
        %v1270 = vld [vmem:[%s1269] sm:$0xf]
        %v1271 = vld [vmem:[%s1269 + $0x4] sm:$0xf]
        %v1272 = vld [vmem:[%s1269 + $0x8] sm:$0xf]
        %v1273 = vld [vmem:[%s1269 + $0xc] sm:$0xf]
        %v1274 = vld [vmem:[%s1269 + $0x10] sm:$0xf]
        %v1275 = vld [vmem:[%s1269 + $0x14] sm:$0xf]
        %v1276 = vld [vmem:[%s1269 + $0x18] sm:$0xf]
        %v1277 = vld [vmem:[%s1269 + $0x1c] sm:$0xf]
        %v1278 = vld [vmem:[%s1269 + $0x20] sm:$0xf]
        %v1279 = vld [vmem:[%s1269 + $0x24] sm:$0xf]
        %v1280 = vld [vmem:[%s1269 + $0x28] sm:$0xf]
        %v1281 = vld [vmem:[%s1269 + $0x2c] sm:$0xf]
        %v1282 = vld [vmem:[%s1269 + $0x30] sm:$0xf]
        %v1283 = vld [vmem:[%s1269 + $0x34] sm:$0xf]
        %v1284 = vld [vmem:[%s1269 + $0x38] sm:$0xf]
        %v1285 = vld [vmem:[%s1269 + $0x3c] sm:$0xf]
        %v1302 = vunpack.c.l.b16 %v1270
        %v1303 = vunpack.c.l.b16 %v1271
        %v1304 = vunpack.c.l.b16 %v1272
        %v1305 = vunpack.c.l.b16 %v1273
        %v1306 = vunpack.c.l.b16 %v1274
        %v1307 = vunpack.c.l.b16 %v1275
        %v1308 = vunpack.c.l.b16 %v1276
        %v1309 = vunpack.c.l.b16 %v1277
        %v1310 = vunpack.c.l.b16 %v1278
        %v1311 = vunpack.c.l.b16 %v1279
        %v1312 = vunpack.c.l.b16 %v1280
        %v1313 = vunpack.c.l.b16 %v1281
        %v1314 = vunpack.c.l.b16 %v1282
        %v1315 = vunpack.c.l.b16 %v1283
        %v1316 = vunpack.c.l.b16 %v1284
        %v1317 = vunpack.c.l.b16 %v1285
        %v1318 = vpack.c.b16 %v1303, %v1302
        %v1319 = vpack.c.b16 %v1305, %v1304
        %v1320 = vpack.c.b16 %v1307, %v1306
        %v1321 = vpack.c.b16 %v1309, %v1308
        %v1322 = vpack.c.b16 %v1311, %v1310
        %v1323 = vpack.c.b16 %v1313, %v1312
        %v1324 = vpack.c.b16 %v1315, %v1314
        %v1325 = vpack.c.b16 %v1317, %v1316
        %1334 = vmatpush.bf16.msra.mxu0 %v1325
        %1335 = vmatpush.bf16.msra.mxu0 %v1324
        %1336 = vmatpush.bf16.msra.mxu0 %v1323
        %1337 = vmatpush.bf16.msra.mxu0 %v1322
        %1338 = vmatpush.bf16.msra.mxu0 %v1321
        %1339 = vmatpush.bf16.msra.mxu0 %v1320
        %1340 = vmatpush.bf16.msra.mxu0 %v1319
        %1341 = vmatpush.bf16.msra.mxu0 %v1318
        %1342 = vmatmul.bf16.gmra.mxu0 %v791
        %v1343 = vpop.f32.mrf.mxu0
        %v1344 = vadd.f32 0.0, %v1343
        %v1345 = vpop.f32.mrf.mxu0
        %1346 = vdwg.mxu0
        %v1363 = vunpack.c.l.b16 %v1253
        %v1364 = vunpack.c.l.b16 %v1254
        %v1365 = vunpack.c.l.b16 %v1255
        %v1366 = vunpack.c.l.b16 %v1256
        %v1367 = vunpack.c.l.b16 %v1257
        %v1368 = vunpack.c.l.b16 %v1258
        %v1369 = vunpack.c.l.b16 %v1259
        %v1370 = vunpack.c.l.b16 %v1260
        %v1371 = vunpack.c.l.b16 %v1261
        %v1372 = vunpack.c.l.b16 %v1262
        %v1373 = vunpack.c.l.b16 %v1263
        %v1374 = vunpack.c.l.b16 %v1264
        %v1375 = vunpack.c.l.b16 %v1265
        %v1376 = vunpack.c.l.b16 %v1266
        %v1377 = vunpack.c.l.b16 %v1267
        %v1378 = vunpack.c.l.b16 %v1268
        %v1379 = vpack.c.b16 %v1364, %v1363
        %v1380 = vpack.c.b16 %v1366, %v1365
        %v1381 = vpack.c.b16 %v1368, %v1367
        %v1382 = vpack.c.b16 %v1370, %v1369
        %v1383 = vpack.c.b16 %v1372, %v1371
        %v1384 = vpack.c.b16 %v1374, %v1373
        %v1385 = vpack.c.b16 %v1376, %v1375
        %v1386 = vpack.c.b16 %v1378, %v1377
        %1395 = vmatpush.bf16.msra.mxu0 %v1386
        %1396 = vmatpush.bf16.msra.mxu0 %v1385
        %1397 = vmatpush.bf16.msra.mxu0 %v1384
        %1398 = vmatpush.bf16.msra.mxu0 %v1383
        %1399 = vmatpush.bf16.msra.mxu0 %v1382
        %1400 = vmatpush.bf16.msra.mxu0 %v1381
        %1401 = vmatpush.bf16.msra.mxu0 %v1380
        %1402 = vmatpush.bf16.msra.mxu0 %v1379
        %1403 = vmatmul.bf16.gmra.mxu0 %v1251
        %v1404 = vpop.f32.mrf.mxu0
        %v1405 = vadd.f32 %v1344, %v1404
        %v1406 = vpop.f32.mrf.mxu0
        %1407 = vdwg.mxu0
        %s1408 = scalar_lea.vmem %s11, 1
        %v1409 = vld [vmem:[%s1408] sm:$0x1]
        %v1411 = vperm.slane %v1409, 0
        %v1413 = vadd.f32 %v1405, %v1411
        %v1414 = vmax.f32 %v1413, 0.0
        %v1415 = vpack.c.bf16 %v1021, %v1021
        %s1416 = scalar_lea.vmem [#allocation7], 128
        %v1417 = vld [vmem:[%s1416] sm:$0xf]
        %v1418 = vld [vmem:[%s1416 + $0x4] sm:$0xf]
        %v1419 = vld [vmem:[%s1416 + $0x8] sm:$0xf]
        %v1420 = vld [vmem:[%s1416 + $0xc] sm:$0xf]
        %v1421 = vld [vmem:[%s1416 + $0x10] sm:$0xf]
        %v1422 = vld [vmem:[%s1416 + $0x14] sm:$0xf]
        %v1423 = vld [vmem:[%s1416 + $0x18] sm:$0xf]
        %v1424 = vld [vmem:[%s1416 + $0x1c] sm:$0xf]
        %v1425 = vld [vmem:[%s1416 + $0x20] sm:$0xf]
        %v1426 = vld [vmem:[%s1416 + $0x24] sm:$0xf]
        %v1427 = vld [vmem:[%s1416 + $0x28] sm:$0xf]
        %v1428 = vld [vmem:[%s1416 + $0x2c] sm:$0xf]
        %v1429 = vld [vmem:[%s1416 + $0x30] sm:$0xf]
        %v1430 = vld [vmem:[%s1416 + $0x34] sm:$0xf]
        %v1431 = vld [vmem:[%s1416 + $0x38] sm:$0xf]
        %v1432 = vld [vmem:[%s1416 + $0x3c] sm:$0xf]
        %s1433 = scalar_lea.vmem [#allocation8], 128
        %v1434 = vld [vmem:[%s1433] sm:$0xf]
        %v1435 = vld [vmem:[%s1433 + $0x4] sm:$0xf]
        %v1436 = vld [vmem:[%s1433 + $0x8] sm:$0xf]
        %v1437 = vld [vmem:[%s1433 + $0xc] sm:$0xf]
        %v1438 = vld [vmem:[%s1433 + $0x10] sm:$0xf]
        %v1439 = vld [vmem:[%s1433 + $0x14] sm:$0xf]
        %v1440 = vld [vmem:[%s1433 + $0x18] sm:$0xf]
        %v1441 = vld [vmem:[%s1433 + $0x1c] sm:$0xf]
        %v1442 = vld [vmem:[%s1433 + $0x20] sm:$0xf]
        %v1443 = vld [vmem:[%s1433 + $0x24] sm:$0xf]
        %v1444 = vld [vmem:[%s1433 + $0x28] sm:$0xf]
        %v1445 = vld [vmem:[%s1433 + $0x2c] sm:$0xf]
        %v1446 = vld [vmem:[%s1433 + $0x30] sm:$0xf]
        %v1447 = vld [vmem:[%s1433 + $0x34] sm:$0xf]
        %v1448 = vld [vmem:[%s1433 + $0x38] sm:$0xf]
        %v1449 = vld [vmem:[%s1433 + $0x3c] sm:$0xf]
        %v1466 = vunpack.c.l.b16 %v1434
        %v1467 = vunpack.c.l.b16 %v1435
        %v1468 = vunpack.c.l.b16 %v1436
        %v1469 = vunpack.c.l.b16 %v1437
        %v1470 = vunpack.c.l.b16 %v1438
        %v1471 = vunpack.c.l.b16 %v1439
        %v1472 = vunpack.c.l.b16 %v1440
        %v1473 = vunpack.c.l.b16 %v1441
        %v1474 = vunpack.c.l.b16 %v1442
        %v1475 = vunpack.c.l.b16 %v1443
        %v1476 = vunpack.c.l.b16 %v1444
        %v1477 = vunpack.c.l.b16 %v1445
        %v1478 = vunpack.c.l.b16 %v1446
        %v1479 = vunpack.c.l.b16 %v1447
        %v1480 = vunpack.c.l.b16 %v1448
        %v1481 = vunpack.c.l.b16 %v1449
        %v1482 = vpack.c.b16 %v1467, %v1466
        %v1483 = vpack.c.b16 %v1469, %v1468
        %v1484 = vpack.c.b16 %v1471, %v1470
        %v1485 = vpack.c.b16 %v1473, %v1472
        %v1486 = vpack.c.b16 %v1475, %v1474
        %v1487 = vpack.c.b16 %v1477, %v1476
        %v1488 = vpack.c.b16 %v1479, %v1478
        %v1489 = vpack.c.b16 %v1481, %v1480
        %1498 = vmatpush.bf16.msra.mxu0 %v1489
        %1499 = vmatpush.bf16.msra.mxu0 %v1488
        %1500 = vmatpush.bf16.msra.mxu0 %v1487
        %1501 = vmatpush.bf16.msra.mxu0 %v1486
        %1502 = vmatpush.bf16.msra.mxu0 %v1485
        %1503 = vmatpush.bf16.msra.mxu0 %v1484
        %1504 = vmatpush.bf16.msra.mxu0 %v1483
        %1505 = vmatpush.bf16.msra.mxu0 %v1482
        %1506 = vmatmul.bf16.gmra.mxu0 %v791
        %v1507 = vpop.f32.mrf.mxu0
        %v1508 = vadd.f32 0.0, %v1507
        %v1509 = vpop.f32.mrf.mxu0
        %1510 = vdwg.mxu0
        %v1527 = vunpack.c.l.b16 %v1417
        %v1528 = vunpack.c.l.b16 %v1418
        %v1529 = vunpack.c.l.b16 %v1419
        %v1530 = vunpack.c.l.b16 %v1420
        %v1531 = vunpack.c.l.b16 %v1421
        %v1532 = vunpack.c.l.b16 %v1422
        %v1533 = vunpack.c.l.b16 %v1423
        %v1534 = vunpack.c.l.b16 %v1424
        %v1535 = vunpack.c.l.b16 %v1425
        %v1536 = vunpack.c.l.b16 %v1426
        %v1537 = vunpack.c.l.b16 %v1427
        %v1538 = vunpack.c.l.b16 %v1428
        %v1539 = vunpack.c.l.b16 %v1429
        %v1540 = vunpack.c.l.b16 %v1430
        %v1541 = vunpack.c.l.b16 %v1431
        %v1542 = vunpack.c.l.b16 %v1432
        %v1543 = vpack.c.b16 %v1528, %v1527
        %v1544 = vpack.c.b16 %v1530, %v1529
        %v1545 = vpack.c.b16 %v1532, %v1531
        %v1546 = vpack.c.b16 %v1534, %v1533
        %v1547 = vpack.c.b16 %v1536, %v1535
        %v1548 = vpack.c.b16 %v1538, %v1537
        %v1549 = vpack.c.b16 %v1540, %v1539
        %v1550 = vpack.c.b16 %v1542, %v1541
        %1559 = vmatpush.bf16.msra.mxu0 %v1550
        %1560 = vmatpush.bf16.msra.mxu0 %v1549
        %1561 = vmatpush.bf16.msra.mxu0 %v1548
        %1562 = vmatpush.bf16.msra.mxu0 %v1547
        %1563 = vmatpush.bf16.msra.mxu0 %v1546
        %1564 = vmatpush.bf16.msra.mxu0 %v1545
        %1565 = vmatpush.bf16.msra.mxu0 %v1544
        %1566 = vmatpush.bf16.msra.mxu0 %v1543
        %1567 = vmatmul.bf16.gmra.mxu0 %v1415
        %v1568 = vpop.f32.mrf.mxu0
        %v1569 = vadd.f32 %v1508, %v1568
        %v1570 = vpop.f32.mrf.mxu0
        %1571 = vdwg.mxu0
        %s1572 = scalar_lea.vmem %s11, 2
        %v1573 = vld [vmem:[%s1572] sm:$0x1]
        %v1575 = vperm.slane %v1573, 0
        %v1577 = vadd.f32 %v1569, %v1575
        %v1578 = vmax.f32 %v1577, 0.0
        %v1579 = vpack.c.bf16 %v1087, %v1087
        %s1580 = scalar_lea.vmem [#allocation7], 192
        %v1581 = vld [vmem:[%s1580] sm:$0xf]
        %v1582 = vld [vmem:[%s1580 + $0x4] sm:$0xf]
        %v1583 = vld [vmem:[%s1580 + $0x8] sm:$0xf]
        %v1584 = vld [vmem:[%s1580 + $0xc] sm:$0xf]
        %v1585 = vld [vmem:[%s1580 + $0x10] sm:$0xf]
        %v1586 = vld [vmem:[%s1580 + $0x14] sm:$0xf]
        %v1587 = vld [vmem:[%s1580 + $0x18] sm:$0xf]
        %v1588 = vld [vmem:[%s1580 + $0x1c] sm:$0xf]
        %v1589 = vld [vmem:[%s1580 + $0x20] sm:$0xf]
        %v1590 = vld [vmem:[%s1580 + $0x24] sm:$0xf]
        %v1591 = vld [vmem:[%s1580 + $0x28] sm:$0xf]
        %v1592 = vld [vmem:[%s1580 + $0x2c] sm:$0xf]
        %v1593 = vld [vmem:[%s1580 + $0x30] sm:$0xf]
        %v1594 = vld [vmem:[%s1580 + $0x34] sm:$0xf]
        %v1595 = vld [vmem:[%s1580 + $0x38] sm:$0xf]
        %v1596 = vld [vmem:[%s1580 + $0x3c] sm:$0xf]
        %s1597 = scalar_lea.vmem [#allocation8], 192
        %v1598 = vld [vmem:[%s1597] sm:$0xf]
        %v1599 = vld [vmem:[%s1597 + $0x4] sm:$0xf]
        %v1600 = vld [vmem:[%s1597 + $0x8] sm:$0xf]
        %v1601 = vld [vmem:[%s1597 + $0xc] sm:$0xf]
        %v1602 = vld [vmem:[%s1597 + $0x10] sm:$0xf]
        %v1603 = vld [vmem:[%s1597 + $0x14] sm:$0xf]
        %v1604 = vld [vmem:[%s1597 + $0x18] sm:$0xf]
        %v1605 = vld [vmem:[%s1597 + $0x1c] sm:$0xf]
        %v1606 = vld [vmem:[%s1597 + $0x20] sm:$0xf]
        %v1607 = vld [vmem:[%s1597 + $0x24] sm:$0xf]
        %v1608 = vld [vmem:[%s1597 + $0x28] sm:$0xf]
        %v1609 = vld [vmem:[%s1597 + $0x2c] sm:$0xf]
        %v1610 = vld [vmem:[%s1597 + $0x30] sm:$0xf]
        %v1611 = vld [vmem:[%s1597 + $0x34] sm:$0xf]
        %v1612 = vld [vmem:[%s1597 + $0x38] sm:$0xf]
        %v1613 = vld [vmem:[%s1597 + $0x3c] sm:$0xf]
        %v1630 = vunpack.c.l.b16 %v1598
        %v1631 = vunpack.c.l.b16 %v1599
        %v1632 = vunpack.c.l.b16 %v1600
        %v1633 = vunpack.c.l.b16 %v1601
        %v1634 = vunpack.c.l.b16 %v1602
        %v1635 = vunpack.c.l.b16 %v1603
        %v1636 = vunpack.c.l.b16 %v1604
        %v1637 = vunpack.c.l.b16 %v1605
        %v1638 = vunpack.c.l.b16 %v1606
        %v1639 = vunpack.c.l.b16 %v1607
        %v1640 = vunpack.c.l.b16 %v1608
        %v1641 = vunpack.c.l.b16 %v1609
        %v1642 = vunpack.c.l.b16 %v1610
        %v1643 = vunpack.c.l.b16 %v1611
        %v1644 = vunpack.c.l.b16 %v1612
        %v1645 = vunpack.c.l.b16 %v1613
        %v1646 = vpack.c.b16 %v1631, %v1630
        %v1647 = vpack.c.b16 %v1633, %v1632
        %v1648 = vpack.c.b16 %v1635, %v1634
        %v1649 = vpack.c.b16 %v1637, %v1636
        %v1650 = vpack.c.b16 %v1639, %v1638
        %v1651 = vpack.c.b16 %v1641, %v1640
        %v1652 = vpack.c.b16 %v1643, %v1642
        %v1653 = vpack.c.b16 %v1645, %v1644
        %1662 = vmatpush.bf16.msra.mxu0 %v1653
        %1663 = vmatpush.bf16.msra.mxu0 %v1652
        %1664 = vmatpush.bf16.msra.mxu0 %v1651
        %1665 = vmatpush.bf16.msra.mxu0 %v1650
        %1666 = vmatpush.bf16.msra.mxu0 %v1649
        %1667 = vmatpush.bf16.msra.mxu0 %v1648
        %1668 = vmatpush.bf16.msra.mxu0 %v1647
        %1669 = vmatpush.bf16.msra.mxu0 %v1646
        %1670 = vmatmul.bf16.gmra.mxu0 %v790
        %v1671 = vpop.f32.mrf.mxu0
        %v1672 = vadd.f32 0.0, %v1671
        %v1673 = vpop.f32.mrf.mxu0
        %1674 = vdwg.mxu0
        %v1691 = vunpack.c.l.b16 %v1581
        %v1692 = vunpack.c.l.b16 %v1582
        %v1693 = vunpack.c.l.b16 %v1583
        %v1694 = vunpack.c.l.b16 %v1584
        %v1695 = vunpack.c.l.b16 %v1585
        %v1696 = vunpack.c.l.b16 %v1586
        %v1697 = vunpack.c.l.b16 %v1587
        %v1698 = vunpack.c.l.b16 %v1588
        %v1699 = vunpack.c.l.b16 %v1589
        %v1700 = vunpack.c.l.b16 %v1590
        %v1701 = vunpack.c.l.b16 %v1591
        %v1702 = vunpack.c.l.b16 %v1592
        %v1703 = vunpack.c.l.b16 %v1593
        %v1704 = vunpack.c.l.b16 %v1594
        %v1705 = vunpack.c.l.b16 %v1595
        %v1706 = vunpack.c.l.b16 %v1596
        %v1707 = vpack.c.b16 %v1692, %v1691
        %v1708 = vpack.c.b16 %v1694, %v1693
        %v1709 = vpack.c.b16 %v1696, %v1695
        %v1710 = vpack.c.b16 %v1698, %v1697
        %v1711 = vpack.c.b16 %v1700, %v1699
        %v1712 = vpack.c.b16 %v1702, %v1701
        %v1713 = vpack.c.b16 %v1704, %v1703
        %v1714 = vpack.c.b16 %v1706, %v1705
        %1723 = vmatpush.bf16.msra.mxu0 %v1714
        %1724 = vmatpush.bf16.msra.mxu0 %v1713
        %1725 = vmatpush.bf16.msra.mxu0 %v1712
        %1726 = vmatpush.bf16.msra.mxu0 %v1711
        %1727 = vmatpush.bf16.msra.mxu0 %v1710
        %1728 = vmatpush.bf16.msra.mxu0 %v1709
        %1729 = vmatpush.bf16.msra.mxu0 %v1708
        %1730 = vmatpush.bf16.msra.mxu0 %v1707
        %1731 = vmatmul.bf16.gmra.mxu0 %v1579
        %v1732 = vpop.f32.mrf.mxu0
        %v1733 = vadd.f32 %v1672, %v1732
        %v1734 = vpop.f32.mrf.mxu0
        %1735 = vdwg.mxu0
        %s1736 = scalar_lea.vmem %s11, 3
        %v1737 = vld [vmem:[%s1736] sm:$0x1]
        %v1739 = vperm.slane %v1737, 0
        %v1741 = vadd.f32 %v1733, %v1739
        %v1742 = vmax.f32 %v1741, 0.0
        %v1743 = vpack.c.bf16 %v1250, %v1250
        %v1744 = vld [vmem:[#allocation10] sm:$0xf]
        %v1745 = vld [vmem:[#allocation10 + $0x4] sm:$0xf]
        %v1746 = vld [vmem:[#allocation10 + $0x8] sm:$0xf]
        %v1747 = vld [vmem:[#allocation10 + $0xc] sm:$0xf]
        %v1748 = vld [vmem:[#allocation10 + $0x10] sm:$0xf]
        %v1749 = vld [vmem:[#allocation10 + $0x14] sm:$0xf]
        %v1750 = vld [vmem:[#allocation10 + $0x18] sm:$0xf]
        %v1751 = vld [vmem:[#allocation10 + $0x1c] sm:$0xf]
        %v1752 = vld [vmem:[#allocation10 + $0x20] sm:$0xf]
        %v1753 = vld [vmem:[#allocation10 + $0x24] sm:$0xf]
        %v1754 = vld [vmem:[#allocation10 + $0x28] sm:$0xf]
        %v1755 = vld [vmem:[#allocation10 + $0x2c] sm:$0xf]
        %v1756 = vld [vmem:[#allocation10 + $0x30] sm:$0xf]
        %v1757 = vld [vmem:[#allocation10 + $0x34] sm:$0xf]
        %v1758 = vld [vmem:[#allocation10 + $0x38] sm:$0xf]
        %v1759 = vld [vmem:[#allocation10 + $0x3c] sm:$0xf]
        %v1760 = vld [vmem:[%s14] sm:$0x1]
        %v1762 = vperm.slane %v1760, 0
        %v1780 = vunpack.c.l.b16 %v1744
        %v1781 = vunpack.c.l.b16 %v1745
        %v1782 = vunpack.c.l.b16 %v1746
        %v1783 = vunpack.c.l.b16 %v1747
        %v1784 = vunpack.c.l.b16 %v1748
        %v1785 = vunpack.c.l.b16 %v1749
        %v1786 = vunpack.c.l.b16 %v1750
        %v1787 = vunpack.c.l.b16 %v1751
        %v1788 = vunpack.c.l.b16 %v1752
        %v1789 = vunpack.c.l.b16 %v1753
        %v1790 = vunpack.c.l.b16 %v1754
        %v1791 = vunpack.c.l.b16 %v1755
        %v1792 = vunpack.c.l.b16 %v1756
        %v1793 = vunpack.c.l.b16 %v1757
        %v1794 = vunpack.c.l.b16 %v1758
        %v1795 = vunpack.c.l.b16 %v1759
        %v1796 = vpack.c.b16 %v1781, %v1780
        %v1797 = vpack.c.b16 %v1783, %v1782
        %v1798 = vpack.c.b16 %v1785, %v1784
        %v1799 = vpack.c.b16 %v1787, %v1786
        %v1800 = vpack.c.b16 %v1789, %v1788
        %v1801 = vpack.c.b16 %v1791, %v1790
        %v1802 = vpack.c.b16 %v1793, %v1792
        %v1803 = vpack.c.b16 %v1795, %v1794
        %1812 = vmatpush.bf16.msra.mxu0 %v1803
        %1813 = vmatpush.bf16.msra.mxu0 %v1802
        %1814 = vmatpush.bf16.msra.mxu0 %v1801
        %1815 = vmatpush.bf16.msra.mxu0 %v1800
        %1816 = vmatpush.bf16.msra.mxu0 %v1799
        %1817 = vmatpush.bf16.msra.mxu0 %v1798
        %1818 = vmatpush.bf16.msra.mxu0 %v1797
        %1819 = vmatpush.bf16.msra.mxu0 %v1796
        %1820 = vmatmul.bf16.gmra.mxu0 %v1743
        %v1821 = vpop.f32.mrf.mxu0
        %v1822 = vadd.f32 %v1762, %v1821
        %v1823 = vpop.f32.mrf.mxu0
        %1824 = vdwg.mxu0
        %v1825 = vtanh.pop %v1822
        %v1826 = vrot.slane %v1825, 4
        %v1827 = vadd.f32 %v1825, %v1826
        %v1828 = vrot.slane %v1827, 2
        %v1829 = vadd.f32 %v1827, %v1828
        %v1830 = vrot.slane %v1829, 1
        %v1831 = vadd.f32 %v1829, %v1830
        %v1832 = vrcp.pop 8.0
        %v1833 = vmul.f32 8.0, %v1832
        %v1834 = vsub.f32 1.0, %v1833
        %v1835 = vmul.f32 %v1832, %v1834
        %v1836 = vadd.f32 %v1832, %v1835
        %vm1837 = vweird.f32 %v1832
        %v1838 = vsel %vm1837, %v1832, %v1836
        %v1839 = vmul.f32 %v1831, %v1838
        %v1840 = vld [vmem:[%s12] sm:$0x1]
        %v1841 = vmul.f32 %v1840, %v1839
        %vm1842 = vcmask 1040384
        %v1843 = vsel %vm1842, %v1841, 0.0
        %1844 = vadd.xlane.f32.xlu0 %v1843
        %v1845 = vpop.xlane.xlu0 %1844
        %v1846 = vpack.c.bf16 %v1742, %v1742
        %1847 = vmatpush.bf16.msra.mxu0 %v1803
        %1848 = vmatpush.bf16.msra.mxu0 %v1802
        %1849 = vmatpush.bf16.msra.mxu0 %v1801
        %1850 = vmatpush.bf16.msra.mxu0 %v1800
        %1851 = vmatpush.bf16.msra.mxu0 %v1799
        %1852 = vmatpush.bf16.msra.mxu0 %v1798
        %1853 = vmatpush.bf16.msra.mxu0 %v1797
        %1854 = vmatpush.bf16.msra.mxu0 %v1796
        %1855 = vmatmul.bf16.gmra.mxu0 %v1846
        %v1856 = vpop.f32.mrf.mxu0
        %v1857 = vadd.f32 %v1762, %v1856
        %v1858 = vpop.f32.mrf.mxu0
        %1859 = vdwg.mxu0
        %v1860 = vtanh.pop %v1857
        %v1861 = vrot.slane %v1860, 4
        %v1862 = vadd.f32 %v1860, %v1861
        %v1863 = vrot.slane %v1862, 2
        %v1864 = vadd.f32 %v1862, %v1863
        %v1865 = vrot.slane %v1864, 1
        %v1866 = vadd.f32 %v1864, %v1865
        %v1867 = vmul.f32 %v1866, %v1838
        %v1868 = vmul.f32 %v1840, %v1867
        %v1869 = vsel %vm1842, %v1868, 0.0
        %1870 = vadd.xlane.f32.xlu0 %v1869
        %v1871 = vpop.xlane.xlu0 %1870
        %v1872 = vmax.f32 %v1845, %v1871
        %v1873 = vsub.f32 %v1845, %v1872
        %v1874 = vmul.f32 %v1873, 1.442695
        %v1875 = vpow.pop %v1874
        %v1876 = vsub.f32 %v1871, %v1872
        %v1877 = vmul.f32 %v1876, 1.442695
        %v1878 = vpow.pop %v1877
        %v1879 = vadd.f32 %v1875, %v1878
        %v1880 = vrcp.pop %v1879
        %v1881 = vmul.f32 %v1875, %v1880
        %v1882 = vperm.slane %v1881, 0
        %v1883 = vmul.f32 %v1882, %v1250
        %v1884 = vmul.f32 %v1878, %v1880
        %v1885 = vperm.slane %v1884, 0
        %v1886 = vmul.f32 %v1885, %v1742
        %v1887 = vadd.f32 %v1883, %v1886
        %v1888 = vpack.c.bf16 %v1414, %v1414
        %s1889 = scalar_lea.vmem [#allocation10], 64
        %v1890 = vld [vmem:[%s1889] sm:$0xf]
        %v1891 = vld [vmem:[%s1889 + $0x4] sm:$0xf]
        %v1892 = vld [vmem:[%s1889 + $0x8] sm:$0xf]
        %v1893 = vld [vmem:[%s1889 + $0xc] sm:$0xf]
        %v1894 = vld [vmem:[%s1889 + $0x10] sm:$0xf]
        %v1895 = vld [vmem:[%s1889 + $0x14] sm:$0xf]
        %v1896 = vld [vmem:[%s1889 + $0x18] sm:$0xf]
        %v1897 = vld [vmem:[%s1889 + $0x1c] sm:$0xf]
        %v1898 = vld [vmem:[%s1889 + $0x20] sm:$0xf]
        %v1899 = vld [vmem:[%s1889 + $0x24] sm:$0xf]
        %v1900 = vld [vmem:[%s1889 + $0x28] sm:$0xf]
        %v1901 = vld [vmem:[%s1889 + $0x2c] sm:$0xf]
        %v1902 = vld [vmem:[%s1889 + $0x30] sm:$0xf]
        %v1903 = vld [vmem:[%s1889 + $0x34] sm:$0xf]
        %v1904 = vld [vmem:[%s1889 + $0x38] sm:$0xf]
        %v1905 = vld [vmem:[%s1889 + $0x3c] sm:$0xf]
        %s1906 = scalar_lea.vmem %s14, 1
        %v1907 = vld [vmem:[%s1906] sm:$0x1]
        %v1909 = vperm.slane %v1907, 0
        %v1927 = vunpack.c.l.b16 %v1890
        %v1928 = vunpack.c.l.b16 %v1891
        %v1929 = vunpack.c.l.b16 %v1892
        %v1930 = vunpack.c.l.b16 %v1893
        %v1931 = vunpack.c.l.b16 %v1894
        %v1932 = vunpack.c.l.b16 %v1895
        %v1933 = vunpack.c.l.b16 %v1896
        %v1934 = vunpack.c.l.b16 %v1897
        %v1935 = vunpack.c.l.b16 %v1898
        %v1936 = vunpack.c.l.b16 %v1899
        %v1937 = vunpack.c.l.b16 %v1900
        %v1938 = vunpack.c.l.b16 %v1901
        %v1939 = vunpack.c.l.b16 %v1902
        %v1940 = vunpack.c.l.b16 %v1903
        %v1941 = vunpack.c.l.b16 %v1904
        %v1942 = vunpack.c.l.b16 %v1905
        %v1943 = vpack.c.b16 %v1928, %v1927
        %v1944 = vpack.c.b16 %v1930, %v1929
        %v1945 = vpack.c.b16 %v1932, %v1931
        %v1946 = vpack.c.b16 %v1934, %v1933
        %v1947 = vpack.c.b16 %v1936, %v1935
        %v1948 = vpack.c.b16 %v1938, %v1937
        %v1949 = vpack.c.b16 %v1940, %v1939
        %v1950 = vpack.c.b16 %v1942, %v1941
        %1959 = vmatpush.bf16.msra.mxu0 %v1950
        %1960 = vmatpush.bf16.msra.mxu0 %v1949
        %1961 = vmatpush.bf16.msra.mxu0 %v1948
        %1962 = vmatpush.bf16.msra.mxu0 %v1947
        %1963 = vmatpush.bf16.msra.mxu0 %v1946
        %1964 = vmatpush.bf16.msra.mxu0 %v1945
        %1965 = vmatpush.bf16.msra.mxu0 %v1944
        %1966 = vmatpush.bf16.msra.mxu0 %v1943
        %1967 = vmatmul.bf16.gmra.mxu0 %v1888
        %v1968 = vpop.f32.mrf.mxu0
        %v1969 = vadd.f32 %v1909, %v1968
        %v1970 = vpop.f32.mrf.mxu0
        %1971 = vdwg.mxu0
        %v1972 = vtanh.pop %v1969
        %v1973 = vrot.slane %v1972, 4
        %v1974 = vadd.f32 %v1972, %v1973
        %v1975 = vrot.slane %v1974, 2
        %v1976 = vadd.f32 %v1974, %v1975
        %v1977 = vrot.slane %v1976, 1
        %v1978 = vadd.f32 %v1976, %v1977
        %v1979 = vmul.f32 %v1978, %v1838
        %s1980 = scalar_lea.vmem %s12, 1
        %v1981 = vld [vmem:[%s1980] sm:$0x1]
        %v1982 = vmul.f32 %v1981, %v1979
        %v1983 = vsel %vm1842, %v1982, 0.0
        %1984 = vadd.xlane.f32.xlu0 %v1983
        %v1985 = vpop.xlane.xlu0 %1984
        %v1986 = vpack.c.bf16 %v1578, %v1578
        %1987 = vmatpush.bf16.msra.mxu0 %v1950
        %1988 = vmatpush.bf16.msra.mxu0 %v1949
        %1989 = vmatpush.bf16.msra.mxu0 %v1948
        %1990 = vmatpush.bf16.msra.mxu0 %v1947
        %1991 = vmatpush.bf16.msra.mxu0 %v1946
        %1992 = vmatpush.bf16.msra.mxu0 %v1945
        %1993 = vmatpush.bf16.msra.mxu0 %v1944
        %1994 = vmatpush.bf16.msra.mxu0 %v1943
        %1995 = vmatmul.bf16.gmra.mxu0 %v1986
        %v1996 = vpop.f32.mrf.mxu0
        %v1997 = vadd.f32 %v1909, %v1996
        %v1998 = vpop.f32.mrf.mxu0
        %1999 = vdwg.mxu0
        %v2000 = vtanh.pop %v1997
        %v2001 = vrot.slane %v2000, 4
        %v2002 = vadd.f32 %v2000, %v2001
        %v2003 = vrot.slane %v2002, 2
        %v2004 = vadd.f32 %v2002, %v2003
        %v2005 = vrot.slane %v2004, 1
        %v2006 = vadd.f32 %v2004, %v2005
        %v2007 = vmul.f32 %v2006, %v1838
        %v2008 = vmul.f32 %v1981, %v2007
        %v2009 = vsel %vm1842, %v2008, 0.0
        %2010 = vadd.xlane.f32.xlu0 %v2009
        %v2011 = vpop.xlane.xlu0 %2010
        %v2012 = vmax.f32 %v1985, %v2011
        %v2013 = vsub.f32 %v1985, %v2012
        %v2014 = vmul.f32 %v2013, 1.442695
        %v2015 = vpow.pop %v2014
        %v2016 = vsub.f32 %v2011, %v2012
        %v2017 = vmul.f32 %v2016, 1.442695
        %v2018 = vpow.pop %v2017
        %v2019 = vadd.f32 %v2015, %v2018
        %v2020 = vrcp.pop %v2019
        %v2021 = vmul.f32 %v2015, %v2020
        %v2022 = vperm.slane %v2021, 0
        %v2023 = vmul.f32 %v2022, %v1414
        %v2024 = vmul.f32 %v2018, %v2020
        %v2025 = vperm.slane %v2024, 0
        %v2026 = vmul.f32 %v2025, %v1578
        %v2027 = vadd.f32 %v2023, %v2026
        %v2028 = vpack.c.bf16 %v1887, %v1887
        %v2029 = vpack.c.bf16 %v2027, %v2027
        %s2030 = scalar_lea.vmem [#allocation5], 128
        %v2031 = vld [vmem:[%s2030] sm:$0xf]
        %v2032 = vld [vmem:[%s2030 + $0x4] sm:$0xf]
        %v2033 = vld [vmem:[%s2030 + $0x8] sm:$0xf]
        %v2034 = vld [vmem:[%s2030 + $0xc] sm:$0xf]
        %v2035 = vld [vmem:[%s2030 + $0x10] sm:$0xf]
        %v2036 = vld [vmem:[%s2030 + $0x14] sm:$0xf]
        %v2037 = vld [vmem:[%s2030 + $0x18] sm:$0xf]
        %v2038 = vld [vmem:[%s2030 + $0x1c] sm:$0xf]
        %v2039 = vld [vmem:[%s2030 + $0x20] sm:$0xf]
        %v2040 = vld [vmem:[%s2030 + $0x24] sm:$0xf]
        %v2041 = vld [vmem:[%s2030 + $0x28] sm:$0xf]
        %v2042 = vld [vmem:[%s2030 + $0x2c] sm:$0xf]
        %v2043 = vld [vmem:[%s2030 + $0x30] sm:$0xf]
        %v2044 = vld [vmem:[%s2030 + $0x34] sm:$0xf]
        %v2045 = vld [vmem:[%s2030 + $0x38] sm:$0xf]
        %v2046 = vld [vmem:[%s2030 + $0x3c] sm:$0xf]
        %s2047 = scalar_lea.vmem %s4, 2
        %v2048 = vld [vmem:[%s2047] sm:$0x1]
        %v2050 = vperm.slane %v2048, 0
        %v2068 = vunpack.c.l.b16 %v2031
        %v2069 = vunpack.c.l.b16 %v2032
        %v2070 = vunpack.c.l.b16 %v2033
        %v2071 = vunpack.c.l.b16 %v2034
        %v2072 = vunpack.c.l.b16 %v2035
        %v2073 = vunpack.c.l.b16 %v2036
        %v2074 = vunpack.c.l.b16 %v2037
        %v2075 = vunpack.c.l.b16 %v2038
        %v2076 = vunpack.c.l.b16 %v2039
        %v2077 = vunpack.c.l.b16 %v2040
        %v2078 = vunpack.c.l.b16 %v2041
        %v2079 = vunpack.c.l.b16 %v2042
        %v2080 = vunpack.c.l.b16 %v2043
        %v2081 = vunpack.c.l.b16 %v2044
        %v2082 = vunpack.c.l.b16 %v2045
        %v2083 = vunpack.c.l.b16 %v2046
        %v2084 = vpack.c.b16 %v2069, %v2068
        %v2085 = vpack.c.b16 %v2071, %v2070
        %v2086 = vpack.c.b16 %v2073, %v2072
        %v2087 = vpack.c.b16 %v2075, %v2074
        %v2088 = vpack.c.b16 %v2077, %v2076
        %v2089 = vpack.c.b16 %v2079, %v2078
        %v2090 = vpack.c.b16 %v2081, %v2080
        %v2091 = vpack.c.b16 %v2083, %v2082
        %2100 = vmatpush.bf16.msra.mxu0 %v2091
        %2101 = vmatpush.bf16.msra.mxu0 %v2090
        %2102 = vmatpush.bf16.msra.mxu0 %v2089
        %2103 = vmatpush.bf16.msra.mxu0 %v2088
        %2104 = vmatpush.bf16.msra.mxu0 %v2087
        %2105 = vmatpush.bf16.msra.mxu0 %v2086
        %2106 = vmatpush.bf16.msra.mxu0 %v2085
        %2107 = vmatpush.bf16.msra.mxu0 %v2084
        %2108 = vmatmul.bf16.gmra.mxu0 %v2028
        %v2109 = vpop.f32.mrf.mxu0
        %v2110 = vadd.f32 %v2050, %v2109
        %v2111 = vpop.f32.mrf.mxu0
        %2112 = vdwg.mxu0
        %s2113 = scalar_lea.vmem [#allocation5], 192
        %v2114 = vld [vmem:[%s2113] sm:$0xf]
        %v2115 = vld [vmem:[%s2113 + $0x4] sm:$0xf]
        %v2116 = vld [vmem:[%s2113 + $0x8] sm:$0xf]
        %v2117 = vld [vmem:[%s2113 + $0xc] sm:$0xf]
        %v2118 = vld [vmem:[%s2113 + $0x10] sm:$0xf]
        %v2119 = vld [vmem:[%s2113 + $0x14] sm:$0xf]
        %v2120 = vld [vmem:[%s2113 + $0x18] sm:$0xf]
        %v2121 = vld [vmem:[%s2113 + $0x1c] sm:$0xf]
        %v2122 = vld [vmem:[%s2113 + $0x20] sm:$0xf]
        %v2123 = vld [vmem:[%s2113 + $0x24] sm:$0xf]
        %v2124 = vld [vmem:[%s2113 + $0x28] sm:$0xf]
        %v2125 = vld [vmem:[%s2113 + $0x2c] sm:$0xf]
        %v2126 = vld [vmem:[%s2113 + $0x30] sm:$0xf]
        %v2127 = vld [vmem:[%s2113 + $0x34] sm:$0xf]
        %v2128 = vld [vmem:[%s2113 + $0x38] sm:$0xf]
        %v2129 = vld [vmem:[%s2113 + $0x3c] sm:$0xf]
        %s2130 = scalar_lea.vmem %s4, 3
        %v2131 = vld [vmem:[%s2130] sm:$0x1]
        %v2133 = vperm.slane %v2131, 0
        %v2151 = vunpack.c.l.b16 %v2114
        %v2152 = vunpack.c.l.b16 %v2115
        %v2153 = vunpack.c.l.b16 %v2116
        %v2154 = vunpack.c.l.b16 %v2117
        %v2155 = vunpack.c.l.b16 %v2118
        %v2156 = vunpack.c.l.b16 %v2119
        %v2157 = vunpack.c.l.b16 %v2120
        %v2158 = vunpack.c.l.b16 %v2121
        %v2159 = vunpack.c.l.b16 %v2122
        %v2160 = vunpack.c.l.b16 %v2123
        %v2161 = vunpack.c.l.b16 %v2124
        %v2162 = vunpack.c.l.b16 %v2125
        %v2163 = vunpack.c.l.b16 %v2126
        %v2164 = vunpack.c.l.b16 %v2127
        %v2165 = vunpack.c.l.b16 %v2128
        %v2166 = vunpack.c.l.b16 %v2129
        %v2167 = vpack.c.b16 %v2152, %v2151
        %v2168 = vpack.c.b16 %v2154, %v2153
        %v2169 = vpack.c.b16 %v2156, %v2155
        %v2170 = vpack.c.b16 %v2158, %v2157
        %v2171 = vpack.c.b16 %v2160, %v2159
        %v2172 = vpack.c.b16 %v2162, %v2161
        %v2173 = vpack.c.b16 %v2164, %v2163
        %v2174 = vpack.c.b16 %v2166, %v2165
        %2183 = vmatpush.bf16.msra.mxu0 %v2174
        %2184 = vmatpush.bf16.msra.mxu0 %v2173
        %2185 = vmatpush.bf16.msra.mxu0 %v2172
        %2186 = vmatpush.bf16.msra.mxu0 %v2171
        %2187 = vmatpush.bf16.msra.mxu0 %v2170
        %2188 = vmatpush.bf16.msra.mxu0 %v2169
        %2189 = vmatpush.bf16.msra.mxu0 %v2168
        %2190 = vmatpush.bf16.msra.mxu0 %v2167
        %2191 = vmatmul.bf16.gmra.mxu0 %v2029
        %v2192 = vpop.f32.mrf.mxu0
        %v2193 = vadd.f32 %v2133, %v2192
        %v2194 = vpop.f32.mrf.mxu0
        %2195 = vdwg.mxu0
        %v2196 = vpack.c.bf16 %v2110, %v2110
        %v2197 = vpack.c.bf16 %v2193, %v2193
        %s2198 = scalar_lea.vmem %s6, 2
        %v2199 = vld [vmem:[%s2198] sm:$0x3]
        %v2202 = vunpack.c.l.b16 %v2196
        %v2203 = vunpack.c.l.b16 %v2197
        %v2204 = vpack.c.b16 %v2203, %v2202
        %2206 = vmatpush.bf16.xpose.msra.mxu0 0
        %2207 = vmatpush.bf16.xpose.msra.mxu0 0
        %2208 = vmatpush.bf16.xpose.msra.mxu0 0
        %2209 = vmatpush.bf16.xpose.msra.mxu0 0
        %2210 = vmatpush.bf16.xpose.msra.mxu0 0
        %2211 = vmatpush.bf16.xpose.msra.mxu0 0
        %2212 = vmatpush.bf16.xpose.msra.mxu0 0
        %2213 = vmatpush.bf16.xpose.msra.mxu0 %v2199
        %2214 = vmatmul.bf16.gmra.mxu0 %v2204
        %v2215 = vpop.f32.mrf.mxu0
        %v2216 = vadd.f32 0.0, %v2215
        %v2217 = vpop.f32.mrf.mxu0
        %v2218 = vadd.f32 0.0, %v2217
        %2219 = vdwg.mxu0
        %s2220 = scalar_lea.vmem %s5, 2
        %v2221 = vld [vmem:[%s2220] sm:$0x3]
        %2222 = vmatpush.bf16.xpose.msra.mxu0 0
        %2223 = vmatpush.bf16.xpose.msra.mxu0 0
        %2224 = vmatpush.bf16.xpose.msra.mxu0 0
        %2225 = vmatpush.bf16.xpose.msra.mxu0 0
        %2226 = vmatpush.bf16.xpose.msra.mxu0 0
        %2227 = vmatpush.bf16.xpose.msra.mxu0 0
        %2228 = vmatpush.bf16.xpose.msra.mxu0 0
        %2229 = vmatpush.bf16.xpose.msra.mxu0 %v2204
        %2230 = vmatmul.bf16.gmra.mxu0 %v2221
        %v2231 = vpop.f32.mrf.mxu0
        %v2232 = vadd.f32 0.0, %v2231
        %v2233 = vpop.f32.mrf.mxu0
        %2234 = vdwg.mxu0
        %2236 = vset.pattern.permute.xlu0 0
        %2237 = vperm.xlu0 %2236, %v2216
        %v2238 = vpop.permute.xlu0 %2237
        %v2240 = vperm.slane %v2232, 0
        %v2241 = vadd.f32 %v2238, %v2240
        %s2242 = scalar_lea.vmem %s7, 4
        %v2243 = vld [vmem:[%s2242] sm:$0x1]
        %v2245 = vperm.slane %v2243, 0
        %2246 = vset.pattern.permute.xlu0 0
        %2247 = vperm.xlu0 %2246, %v2245
        %v2248 = vpop.permute.xlu0 %2247
        %v2250 = vmul.f32 %v2248, %v828
        %v2251 = vadd.f32 %v2241, %v2250
        %s2252 = scalar_lea.vmem %s8, 4
        %v2253 = vld [vmem:[%s2252] sm:$0x1]
        %v2255 = vperm.slane %v2253, 0
        %2256 = vset.pattern.permute.xlu0 0
        %2257 = vperm.xlu0 %2256, %v2255
        %v2258 = vpop.permute.xlu0 %2257
        %v2260 = vadd.f32 %v2251, %v2258
        %v2261 = vmul.f32 %v2260, 0.2
        %v2262 = vmax.f32 %v2260, %v2261
        %v2263 = vadd.f32 %v2262, %v830
        %v2264 = vsel %vm858, %v2263, -inf
        %2265 = vmax.xlane.f32.xlu0 %v2264
        %v2266 = vpop.xlane.xlu0 %2265
        %vm2267 = vcmp.gt.f32.partialorder %v2266, -1e+29
        %v2268 = vsel %vm2267, %v2266, 0.0
        %v2269 = vsub.f32 %v2263, %v2268
        %v2270 = vmul.f32 %v2269, 1.442695
        %v2271 = vpow.pop %v2270
        %v2272 = vsel %vm858, %v2271, 0.0
        %2273 = vadd.xlane.f32.xlu0 %v2272
        %v2274 = vpop.xlane.xlu0 %2273
        %vm2275 = vcmp.gt.f32.partialorder %v2274, 0.0
        %v2276 = vsel %vm2275, %v2274, 1.0
        %v2277 = vrcp.pop %v2276
        %v2278 = vmul.f32 %v2271, %v2277
        %v2279 = vpack.c.bf16 %v2278, %v2278
        %v2281 = vsel %vm858, %v2279, 0
        %2283 = vmatpush.bf16.msra.mxu0 0
        %2284 = vmatpush.bf16.msra.mxu0 0
        %2285 = vmatpush.bf16.msra.mxu0 0
        %2286 = vmatpush.bf16.msra.mxu0 0
        %2287 = vmatpush.bf16.msra.mxu0 0
        %2288 = vmatpush.bf16.msra.mxu0 0
        %2289 = vmatpush.bf16.msra.mxu0 0
        %2290 = vmatpush.bf16.msra.mxu0 %v2204
        %2291 = vmatmul.bf16.gmra.mxu0 %v2281
        %v2292 = vpop.f32.mrf.mxu0
        %v2293 = vadd.f32 0.0, %v2292
        %v2294 = vpop.f32.mrf.mxu0
        %2295 = vdwg.mxu0
        %2297 = vset.pattern.permute.xlu0 1
        %2298 = vperm.xlu0 %2297, %v2218
        %v2299 = vpop.permute.xlu0 %2298
        %v2301 = vperm.slane %v2232, 1
        %v2302 = vadd.f32 %v2299, %v2301
        %s2303 = scalar_lea.vmem %s7, 5
        %v2304 = vld [vmem:[%s2303] sm:$0x1]
        %v2306 = vperm.slane %v2304, 0
        %2307 = vset.pattern.permute.xlu0 0
        %2308 = vperm.xlu0 %2307, %v2306
        %v2309 = vpop.permute.xlu0 %2308
        %v2311 = vmul.f32 %v2309, %v893
        %v2312 = vadd.f32 %v2302, %v2311
        %s2313 = scalar_lea.vmem %s8, 5
        %v2314 = vld [vmem:[%s2313] sm:$0x1]
        %v2316 = vperm.slane %v2314, 0
        %2317 = vset.pattern.permute.xlu0 0
        %2318 = vperm.xlu0 %2317, %v2316
        %v2319 = vpop.permute.xlu0 %2318
        %v2321 = vadd.f32 %v2312, %v2319
        %v2322 = vmul.f32 %v2321, 0.2
        %v2323 = vmax.f32 %v2321, %v2322
        %v2324 = vadd.f32 %v2323, %v896
        %v2325 = vsel %vm858, %v2324, -inf
        %2326 = vmax.xlane.f32.xlu0 %v2325
        %v2327 = vpop.xlane.xlu0 %2326
        %vm2328 = vcmp.gt.f32.partialorder %v2327, -1e+29
        %v2329 = vsel %vm2328, %v2327, 0.0
        %v2330 = vsub.f32 %v2324, %v2329
        %v2331 = vmul.f32 %v2330, 1.442695
        %v2332 = vpow.pop %v2331
        %v2333 = vsel %vm858, %v2332, 0.0
        %2334 = vadd.xlane.f32.xlu0 %v2333
        %v2335 = vpop.xlane.xlu0 %2334
        %vm2336 = vcmp.gt.f32.partialorder %v2335, 0.0
        %v2337 = vsel %vm2336, %v2335, 1.0
        %v2338 = vrcp.pop %v2337
        %v2339 = vmul.f32 %v2332, %v2338
        %v2340 = vpack.c.bf16 %v2339, %v2339
        %v2342 = vsel %vm858, %v2340, 0
        %2344 = vmatpush.bf16.msra.mxu0 0
        %2345 = vmatpush.bf16.msra.mxu0 0
        %2346 = vmatpush.bf16.msra.mxu0 0
        %2347 = vmatpush.bf16.msra.mxu0 0
        %2348 = vmatpush.bf16.msra.mxu0 0
        %2349 = vmatpush.bf16.msra.mxu0 0
        %2350 = vmatpush.bf16.msra.mxu0 0
        %2351 = vmatpush.bf16.msra.mxu0 %v2204
        %2352 = vmatmul.bf16.gmra.mxu0 %v2342
        %v2353 = vpop.f32.mrf.mxu0
        %v2354 = vadd.f32 0.0, %v2353
        %v2355 = vpop.f32.mrf.mxu0
        %2356 = vdwg.mxu0
        %2357 = vset.pattern.permute.xlu0 2
        %2358 = vperm.xlu0 %2357, %v2218
        %v2359 = vpop.permute.xlu0 %2358
        %v2361 = vperm.slane %v2232, 2
        %v2362 = vadd.f32 %v2359, %v2361
        %s2363 = scalar_lea.vmem %s7, 6
        %v2364 = vld [vmem:[%s2363] sm:$0x1]
        %v2366 = vperm.slane %v2364, 0
        %2367 = vset.pattern.permute.xlu0 0
        %2368 = vperm.xlu0 %2367, %v2366
        %v2369 = vpop.permute.xlu0 %2368
        %v2371 = vmul.f32 %v2369, %v960
        %v2372 = vadd.f32 %v2362, %v2371
        %s2373 = scalar_lea.vmem %s8, 6
        %v2374 = vld [vmem:[%s2373] sm:$0x1]
        %v2376 = vperm.slane %v2374, 0
        %2377 = vset.pattern.permute.xlu0 0
        %2378 = vperm.xlu0 %2377, %v2376
        %v2379 = vpop.permute.xlu0 %2378
        %v2381 = vadd.f32 %v2372, %v2379
        %v2382 = vmul.f32 %v2381, 0.2
        %v2383 = vmax.f32 %v2381, %v2382
        %v2384 = vadd.f32 %v2383, %v963
        %v2385 = vsel %vm858, %v2384, -inf
        %2386 = vmax.xlane.f32.xlu0 %v2385
        %v2387 = vpop.xlane.xlu0 %2386
        %vm2388 = vcmp.gt.f32.partialorder %v2387, -1e+29
        %v2389 = vsel %vm2388, %v2387, 0.0
        %v2390 = vsub.f32 %v2384, %v2389
        %v2391 = vmul.f32 %v2390, 1.442695
        %v2392 = vpow.pop %v2391
        %v2393 = vsel %vm858, %v2392, 0.0
        %2394 = vadd.xlane.f32.xlu0 %v2393
        %v2395 = vpop.xlane.xlu0 %2394
        %vm2396 = vcmp.gt.f32.partialorder %v2395, 0.0
        %v2397 = vsel %vm2396, %v2395, 1.0
        %v2398 = vrcp.pop %v2397
        %v2399 = vmul.f32 %v2392, %v2398
        %v2400 = vpack.c.bf16 %v2399, %v2399
        %v2402 = vsel %vm858, %v2400, 0
        %2404 = vmatpush.bf16.msra.mxu0 0
        %2405 = vmatpush.bf16.msra.mxu0 0
        %2406 = vmatpush.bf16.msra.mxu0 0
        %2407 = vmatpush.bf16.msra.mxu0 0
        %2408 = vmatpush.bf16.msra.mxu0 0
        %2409 = vmatpush.bf16.msra.mxu0 0
        %2410 = vmatpush.bf16.msra.mxu0 0
        %2411 = vmatpush.bf16.msra.mxu0 %v2204
        %2412 = vmatmul.bf16.gmra.mxu0 %v2402
        %v2413 = vpop.f32.mrf.mxu0
        %v2414 = vadd.f32 0.0, %v2413
        %v2415 = vpop.f32.mrf.mxu0
        %2416 = vdwg.mxu0
        %2417 = vset.pattern.permute.xlu0 3
        %2418 = vperm.xlu0 %2417, %v2216
        %v2419 = vpop.permute.xlu0 %2418
        %v2421 = vperm.slane %v2232, 3
        %v2422 = vadd.f32 %v2419, %v2421
        %s2423 = scalar_lea.vmem %s7, 7
        %v2424 = vld [vmem:[%s2423] sm:$0x1]
        %v2426 = vperm.slane %v2424, 0
        %2427 = vset.pattern.permute.xlu0 0
        %2428 = vperm.xlu0 %2427, %v2426
        %v2429 = vpop.permute.xlu0 %2428
        %v2431 = vmul.f32 %v2429, %v1026
        %v2432 = vadd.f32 %v2422, %v2431
        %s2433 = scalar_lea.vmem %s8, 7
        %v2434 = vld [vmem:[%s2433] sm:$0x1]
        %v2436 = vperm.slane %v2434, 0
        %2437 = vset.pattern.permute.xlu0 0
        %2438 = vperm.xlu0 %2437, %v2436
        %v2439 = vpop.permute.xlu0 %2438
        %v2441 = vadd.f32 %v2432, %v2439
        %v2442 = vmul.f32 %v2441, 0.2
        %v2443 = vmax.f32 %v2441, %v2442
        %v2444 = vadd.f32 %v2443, %v1029
        %v2445 = vsel %vm858, %v2444, -inf
        %2446 = vmax.xlane.f32.xlu0 %v2445
        %v2447 = vpop.xlane.xlu0 %2446
        %vm2448 = vcmp.gt.f32.partialorder %v2447, -1e+29
        %v2449 = vsel %vm2448, %v2447, 0.0
        %v2450 = vsub.f32 %v2444, %v2449
        %v2451 = vmul.f32 %v2450, 1.442695
        %v2452 = vpow.pop %v2451
        %v2453 = vsel %vm858, %v2452, 0.0
        %2454 = vadd.xlane.f32.xlu0 %v2453
        %v2455 = vpop.xlane.xlu0 %2454
        %vm2456 = vcmp.gt.f32.partialorder %v2455, 0.0
        %v2457 = vsel %vm2456, %v2455, 1.0
        %v2458 = vrcp.pop %v2457
        %v2459 = vmul.f32 %v2452, %v2458
        %v2460 = vpack.c.bf16 %v2459, %v2459
        %v2462 = vsel %vm858, %v2460, 0
        %2464 = vmatpush.bf16.msra.mxu0 0
        %2465 = vmatpush.bf16.msra.mxu0 0
        %2466 = vmatpush.bf16.msra.mxu0 0
        %2467 = vmatpush.bf16.msra.mxu0 0
        %2468 = vmatpush.bf16.msra.mxu0 0
        %2469 = vmatpush.bf16.msra.mxu0 0
        %2470 = vmatpush.bf16.msra.mxu0 0
        %2471 = vmatpush.bf16.msra.mxu0 %v2204
        %2472 = vmatmul.bf16.gmra.mxu0 %v2462
        %v2473 = vpop.f32.mrf.mxu0
        %v2474 = vadd.f32 0.0, %v2473
        %v2475 = vpop.f32.mrf.mxu0
        %2476 = vdwg.mxu0
        %v2477 = vpack.c.bf16 %v2293, %v2293
        %s2478 = scalar_lea.vmem [#allocation7], 256
        %v2479 = vld [vmem:[%s2478] sm:$0xf]
        %v2480 = vld [vmem:[%s2478 + $0x4] sm:$0xf]
        %v2481 = vld [vmem:[%s2478 + $0x8] sm:$0xf]
        %v2482 = vld [vmem:[%s2478 + $0xc] sm:$0xf]
        %v2483 = vld [vmem:[%s2478 + $0x10] sm:$0xf]
        %v2484 = vld [vmem:[%s2478 + $0x14] sm:$0xf]
        %v2485 = vld [vmem:[%s2478 + $0x18] sm:$0xf]
        %v2486 = vld [vmem:[%s2478 + $0x1c] sm:$0xf]
        %v2487 = vld [vmem:[%s2478 + $0x20] sm:$0xf]
        %v2488 = vld [vmem:[%s2478 + $0x24] sm:$0xf]
        %v2489 = vld [vmem:[%s2478 + $0x28] sm:$0xf]
        %v2490 = vld [vmem:[%s2478 + $0x2c] sm:$0xf]
        %v2491 = vld [vmem:[%s2478 + $0x30] sm:$0xf]
        %v2492 = vld [vmem:[%s2478 + $0x34] sm:$0xf]
        %v2493 = vld [vmem:[%s2478 + $0x38] sm:$0xf]
        %v2494 = vld [vmem:[%s2478 + $0x3c] sm:$0xf]
        %s2495 = scalar_lea.vmem [#allocation8], 256
        %v2496 = vld [vmem:[%s2495] sm:$0xf]
        %v2497 = vld [vmem:[%s2495 + $0x4] sm:$0xf]
        %v2498 = vld [vmem:[%s2495 + $0x8] sm:$0xf]
        %v2499 = vld [vmem:[%s2495 + $0xc] sm:$0xf]
        %v2500 = vld [vmem:[%s2495 + $0x10] sm:$0xf]
        %v2501 = vld [vmem:[%s2495 + $0x14] sm:$0xf]
        %v2502 = vld [vmem:[%s2495 + $0x18] sm:$0xf]
        %v2503 = vld [vmem:[%s2495 + $0x1c] sm:$0xf]
        %v2504 = vld [vmem:[%s2495 + $0x20] sm:$0xf]
        %v2505 = vld [vmem:[%s2495 + $0x24] sm:$0xf]
        %v2506 = vld [vmem:[%s2495 + $0x28] sm:$0xf]
        %v2507 = vld [vmem:[%s2495 + $0x2c] sm:$0xf]
        %v2508 = vld [vmem:[%s2495 + $0x30] sm:$0xf]
        %v2509 = vld [vmem:[%s2495 + $0x34] sm:$0xf]
        %v2510 = vld [vmem:[%s2495 + $0x38] sm:$0xf]
        %v2511 = vld [vmem:[%s2495 + $0x3c] sm:$0xf]
        %v2528 = vunpack.c.l.b16 %v2496
        %v2529 = vunpack.c.l.b16 %v2497
        %v2530 = vunpack.c.l.b16 %v2498
        %v2531 = vunpack.c.l.b16 %v2499
        %v2532 = vunpack.c.l.b16 %v2500
        %v2533 = vunpack.c.l.b16 %v2501
        %v2534 = vunpack.c.l.b16 %v2502
        %v2535 = vunpack.c.l.b16 %v2503
        %v2536 = vunpack.c.l.b16 %v2504
        %v2537 = vunpack.c.l.b16 %v2505
        %v2538 = vunpack.c.l.b16 %v2506
        %v2539 = vunpack.c.l.b16 %v2507
        %v2540 = vunpack.c.l.b16 %v2508
        %v2541 = vunpack.c.l.b16 %v2509
        %v2542 = vunpack.c.l.b16 %v2510
        %v2543 = vunpack.c.l.b16 %v2511
        %v2544 = vpack.c.b16 %v2529, %v2528
        %v2545 = vpack.c.b16 %v2531, %v2530
        %v2546 = vpack.c.b16 %v2533, %v2532
        %v2547 = vpack.c.b16 %v2535, %v2534
        %v2548 = vpack.c.b16 %v2537, %v2536
        %v2549 = vpack.c.b16 %v2539, %v2538
        %v2550 = vpack.c.b16 %v2541, %v2540
        %v2551 = vpack.c.b16 %v2543, %v2542
        %2560 = vmatpush.bf16.msra.mxu0 %v2551
        %2561 = vmatpush.bf16.msra.mxu0 %v2550
        %2562 = vmatpush.bf16.msra.mxu0 %v2549
        %2563 = vmatpush.bf16.msra.mxu0 %v2548
        %2564 = vmatpush.bf16.msra.mxu0 %v2547
        %2565 = vmatpush.bf16.msra.mxu0 %v2546
        %2566 = vmatpush.bf16.msra.mxu0 %v2545
        %2567 = vmatpush.bf16.msra.mxu0 %v2544
        %2568 = vmatmul.bf16.gmra.mxu0 %v2196
        %v2569 = vpop.f32.mrf.mxu0
        %v2570 = vadd.f32 0.0, %v2569
        %v2571 = vpop.f32.mrf.mxu0
        %2572 = vdwg.mxu0
        %v2589 = vunpack.c.l.b16 %v2479
        %v2590 = vunpack.c.l.b16 %v2480
        %v2591 = vunpack.c.l.b16 %v2481
        %v2592 = vunpack.c.l.b16 %v2482
        %v2593 = vunpack.c.l.b16 %v2483
        %v2594 = vunpack.c.l.b16 %v2484
        %v2595 = vunpack.c.l.b16 %v2485
        %v2596 = vunpack.c.l.b16 %v2486
        %v2597 = vunpack.c.l.b16 %v2487
        %v2598 = vunpack.c.l.b16 %v2488
        %v2599 = vunpack.c.l.b16 %v2489
        %v2600 = vunpack.c.l.b16 %v2490
        %v2601 = vunpack.c.l.b16 %v2491
        %v2602 = vunpack.c.l.b16 %v2492
        %v2603 = vunpack.c.l.b16 %v2493
        %v2604 = vunpack.c.l.b16 %v2494
        %v2605 = vpack.c.b16 %v2590, %v2589
        %v2606 = vpack.c.b16 %v2592, %v2591
        %v2607 = vpack.c.b16 %v2594, %v2593
        %v2608 = vpack.c.b16 %v2596, %v2595
        %v2609 = vpack.c.b16 %v2598, %v2597
        %v2610 = vpack.c.b16 %v2600, %v2599
        %v2611 = vpack.c.b16 %v2602, %v2601
        %v2612 = vpack.c.b16 %v2604, %v2603
        %2621 = vmatpush.bf16.msra.mxu0 %v2612
        %2622 = vmatpush.bf16.msra.mxu0 %v2611
        %2623 = vmatpush.bf16.msra.mxu0 %v2610
        %2624 = vmatpush.bf16.msra.mxu0 %v2609
        %2625 = vmatpush.bf16.msra.mxu0 %v2608
        %2626 = vmatpush.bf16.msra.mxu0 %v2607
        %2627 = vmatpush.bf16.msra.mxu0 %v2606
        %2628 = vmatpush.bf16.msra.mxu0 %v2605
        %2629 = vmatmul.bf16.gmra.mxu0 %v2477
        %v2630 = vpop.f32.mrf.mxu0
        %v2631 = vadd.f32 %v2570, %v2630
        %v2632 = vpop.f32.mrf.mxu0
        %2633 = vdwg.mxu0
        %s2634 = scalar_lea.vmem %s11, 4
        %v2635 = vld [vmem:[%s2634] sm:$0x1]
        %v2637 = vperm.slane %v2635, 0
        %v2639 = vadd.f32 %v2631, %v2637
        %v2640 = vmax.f32 %v2639, 0.0
        %v2641 = vpack.c.bf16 %v2354, %v2354
        %s2642 = scalar_lea.vmem [#allocation7], 320
        %v2643 = vld [vmem:[%s2642] sm:$0xf]
        %v2644 = vld [vmem:[%s2642 + $0x4] sm:$0xf]
        %v2645 = vld [vmem:[%s2642 + $0x8] sm:$0xf]
        %v2646 = vld [vmem:[%s2642 + $0xc] sm:$0xf]
        %v2647 = vld [vmem:[%s2642 + $0x10] sm:$0xf]
        %v2648 = vld [vmem:[%s2642 + $0x14] sm:$0xf]
        %v2649 = vld [vmem:[%s2642 + $0x18] sm:$0xf]
        %v2650 = vld [vmem:[%s2642 + $0x1c] sm:$0xf]
        %v2651 = vld [vmem:[%s2642 + $0x20] sm:$0xf]
        %v2652 = vld [vmem:[%s2642 + $0x24] sm:$0xf]
        %v2653 = vld [vmem:[%s2642 + $0x28] sm:$0xf]
        %v2654 = vld [vmem:[%s2642 + $0x2c] sm:$0xf]
        %v2655 = vld [vmem:[%s2642 + $0x30] sm:$0xf]
        %v2656 = vld [vmem:[%s2642 + $0x34] sm:$0xf]
        %v2657 = vld [vmem:[%s2642 + $0x38] sm:$0xf]
        %v2658 = vld [vmem:[%s2642 + $0x3c] sm:$0xf]
        %s2659 = scalar_lea.vmem [#allocation8], 320
        %v2660 = vld [vmem:[%s2659] sm:$0xf]
        %v2661 = vld [vmem:[%s2659 + $0x4] sm:$0xf]
        %v2662 = vld [vmem:[%s2659 + $0x8] sm:$0xf]
        %v2663 = vld [vmem:[%s2659 + $0xc] sm:$0xf]
        %v2664 = vld [vmem:[%s2659 + $0x10] sm:$0xf]
        %v2665 = vld [vmem:[%s2659 + $0x14] sm:$0xf]
        %v2666 = vld [vmem:[%s2659 + $0x18] sm:$0xf]
        %v2667 = vld [vmem:[%s2659 + $0x1c] sm:$0xf]
        %v2668 = vld [vmem:[%s2659 + $0x20] sm:$0xf]
        %v2669 = vld [vmem:[%s2659 + $0x24] sm:$0xf]
        %v2670 = vld [vmem:[%s2659 + $0x28] sm:$0xf]
        %v2671 = vld [vmem:[%s2659 + $0x2c] sm:$0xf]
        %v2672 = vld [vmem:[%s2659 + $0x30] sm:$0xf]
        %v2673 = vld [vmem:[%s2659 + $0x34] sm:$0xf]
        %v2674 = vld [vmem:[%s2659 + $0x38] sm:$0xf]
        %v2675 = vld [vmem:[%s2659 + $0x3c] sm:$0xf]
        %v2692 = vunpack.c.l.b16 %v2660
        %v2693 = vunpack.c.l.b16 %v2661
        %v2694 = vunpack.c.l.b16 %v2662
        %v2695 = vunpack.c.l.b16 %v2663
        %v2696 = vunpack.c.l.b16 %v2664
        %v2697 = vunpack.c.l.b16 %v2665
        %v2698 = vunpack.c.l.b16 %v2666
        %v2699 = vunpack.c.l.b16 %v2667
        %v2700 = vunpack.c.l.b16 %v2668
        %v2701 = vunpack.c.l.b16 %v2669
        %v2702 = vunpack.c.l.b16 %v2670
        %v2703 = vunpack.c.l.b16 %v2671
        %v2704 = vunpack.c.l.b16 %v2672
        %v2705 = vunpack.c.l.b16 %v2673
        %v2706 = vunpack.c.l.b16 %v2674
        %v2707 = vunpack.c.l.b16 %v2675
        %v2708 = vpack.c.b16 %v2693, %v2692
        %v2709 = vpack.c.b16 %v2695, %v2694
        %v2710 = vpack.c.b16 %v2697, %v2696
        %v2711 = vpack.c.b16 %v2699, %v2698
        %v2712 = vpack.c.b16 %v2701, %v2700
        %v2713 = vpack.c.b16 %v2703, %v2702
        %v2714 = vpack.c.b16 %v2705, %v2704
        %v2715 = vpack.c.b16 %v2707, %v2706
        %2724 = vmatpush.bf16.msra.mxu0 %v2715
        %2725 = vmatpush.bf16.msra.mxu0 %v2714
        %2726 = vmatpush.bf16.msra.mxu0 %v2713
        %2727 = vmatpush.bf16.msra.mxu0 %v2712
        %2728 = vmatpush.bf16.msra.mxu0 %v2711
        %2729 = vmatpush.bf16.msra.mxu0 %v2710
        %2730 = vmatpush.bf16.msra.mxu0 %v2709
        %2731 = vmatpush.bf16.msra.mxu0 %v2708
        %2732 = vmatmul.bf16.gmra.mxu0 %v2197
        %v2733 = vpop.f32.mrf.mxu0
        %v2734 = vadd.f32 0.0, %v2733
        %v2735 = vpop.f32.mrf.mxu0
        %2736 = vdwg.mxu0
        %v2753 = vunpack.c.l.b16 %v2643
        %v2754 = vunpack.c.l.b16 %v2644
        %v2755 = vunpack.c.l.b16 %v2645
        %v2756 = vunpack.c.l.b16 %v2646
        %v2757 = vunpack.c.l.b16 %v2647
        %v2758 = vunpack.c.l.b16 %v2648
        %v2759 = vunpack.c.l.b16 %v2649
        %v2760 = vunpack.c.l.b16 %v2650
        %v2761 = vunpack.c.l.b16 %v2651
        %v2762 = vunpack.c.l.b16 %v2652
        %v2763 = vunpack.c.l.b16 %v2653
        %v2764 = vunpack.c.l.b16 %v2654
        %v2765 = vunpack.c.l.b16 %v2655
        %v2766 = vunpack.c.l.b16 %v2656
        %v2767 = vunpack.c.l.b16 %v2657
        %v2768 = vunpack.c.l.b16 %v2658
        %v2769 = vpack.c.b16 %v2754, %v2753
        %v2770 = vpack.c.b16 %v2756, %v2755
        %v2771 = vpack.c.b16 %v2758, %v2757
        %v2772 = vpack.c.b16 %v2760, %v2759
        %v2773 = vpack.c.b16 %v2762, %v2761
        %v2774 = vpack.c.b16 %v2764, %v2763
        %v2775 = vpack.c.b16 %v2766, %v2765
        %v2776 = vpack.c.b16 %v2768, %v2767
        %2785 = vmatpush.bf16.msra.mxu0 %v2776
        %2786 = vmatpush.bf16.msra.mxu0 %v2775
        %2787 = vmatpush.bf16.msra.mxu0 %v2774
        %2788 = vmatpush.bf16.msra.mxu0 %v2773
        %2789 = vmatpush.bf16.msra.mxu0 %v2772
        %2790 = vmatpush.bf16.msra.mxu0 %v2771
        %2791 = vmatpush.bf16.msra.mxu0 %v2770
        %2792 = vmatpush.bf16.msra.mxu0 %v2769
        %2793 = vmatmul.bf16.gmra.mxu0 %v2641
        %v2794 = vpop.f32.mrf.mxu0
        %v2795 = vadd.f32 %v2734, %v2794
        %v2796 = vpop.f32.mrf.mxu0
        %2797 = vdwg.mxu0
        %s2798 = scalar_lea.vmem %s11, 5
        %v2799 = vld [vmem:[%s2798] sm:$0x1]
        %v2801 = vperm.slane %v2799, 0
        %v2803 = vadd.f32 %v2795, %v2801
        %v2804 = vmax.f32 %v2803, 0.0
        %v2805 = vpack.c.bf16 %v2414, %v2414
        %s2806 = scalar_lea.vmem [#allocation7], 384
        %v2807 = vld [vmem:[%s2806] sm:$0xf]
        %v2808 = vld [vmem:[%s2806 + $0x4] sm:$0xf]
        %v2809 = vld [vmem:[%s2806 + $0x8] sm:$0xf]
        %v2810 = vld [vmem:[%s2806 + $0xc] sm:$0xf]
        %v2811 = vld [vmem:[%s2806 + $0x10] sm:$0xf]
        %v2812 = vld [vmem:[%s2806 + $0x14] sm:$0xf]
        %v2813 = vld [vmem:[%s2806 + $0x18] sm:$0xf]
        %v2814 = vld [vmem:[%s2806 + $0x1c] sm:$0xf]
        %v2815 = vld [vmem:[%s2806 + $0x20] sm:$0xf]
        %v2816 = vld [vmem:[%s2806 + $0x24] sm:$0xf]
        %v2817 = vld [vmem:[%s2806 + $0x28] sm:$0xf]
        %v2818 = vld [vmem:[%s2806 + $0x2c] sm:$0xf]
        %v2819 = vld [vmem:[%s2806 + $0x30] sm:$0xf]
        %v2820 = vld [vmem:[%s2806 + $0x34] sm:$0xf]
        %v2821 = vld [vmem:[%s2806 + $0x38] sm:$0xf]
        %v2822 = vld [vmem:[%s2806 + $0x3c] sm:$0xf]
        %s2823 = scalar_lea.vmem [#allocation8], 384
        %v2824 = vld [vmem:[%s2823] sm:$0xf]
        %v2825 = vld [vmem:[%s2823 + $0x4] sm:$0xf]
        %v2826 = vld [vmem:[%s2823 + $0x8] sm:$0xf]
        %v2827 = vld [vmem:[%s2823 + $0xc] sm:$0xf]
        %v2828 = vld [vmem:[%s2823 + $0x10] sm:$0xf]
        %v2829 = vld [vmem:[%s2823 + $0x14] sm:$0xf]
        %v2830 = vld [vmem:[%s2823 + $0x18] sm:$0xf]
        %v2831 = vld [vmem:[%s2823 + $0x1c] sm:$0xf]
        %v2832 = vld [vmem:[%s2823 + $0x20] sm:$0xf]
        %v2833 = vld [vmem:[%s2823 + $0x24] sm:$0xf]
        %v2834 = vld [vmem:[%s2823 + $0x28] sm:$0xf]
        %v2835 = vld [vmem:[%s2823 + $0x2c] sm:$0xf]
        %v2836 = vld [vmem:[%s2823 + $0x30] sm:$0xf]
        %v2837 = vld [vmem:[%s2823 + $0x34] sm:$0xf]
        %v2838 = vld [vmem:[%s2823 + $0x38] sm:$0xf]
        %v2839 = vld [vmem:[%s2823 + $0x3c] sm:$0xf]
        %v2856 = vunpack.c.l.b16 %v2824
        %v2857 = vunpack.c.l.b16 %v2825
        %v2858 = vunpack.c.l.b16 %v2826
        %v2859 = vunpack.c.l.b16 %v2827
        %v2860 = vunpack.c.l.b16 %v2828
        %v2861 = vunpack.c.l.b16 %v2829
        %v2862 = vunpack.c.l.b16 %v2830
        %v2863 = vunpack.c.l.b16 %v2831
        %v2864 = vunpack.c.l.b16 %v2832
        %v2865 = vunpack.c.l.b16 %v2833
        %v2866 = vunpack.c.l.b16 %v2834
        %v2867 = vunpack.c.l.b16 %v2835
        %v2868 = vunpack.c.l.b16 %v2836
        %v2869 = vunpack.c.l.b16 %v2837
        %v2870 = vunpack.c.l.b16 %v2838
        %v2871 = vunpack.c.l.b16 %v2839
        %v2872 = vpack.c.b16 %v2857, %v2856
        %v2873 = vpack.c.b16 %v2859, %v2858
        %v2874 = vpack.c.b16 %v2861, %v2860
        %v2875 = vpack.c.b16 %v2863, %v2862
        %v2876 = vpack.c.b16 %v2865, %v2864
        %v2877 = vpack.c.b16 %v2867, %v2866
        %v2878 = vpack.c.b16 %v2869, %v2868
        %v2879 = vpack.c.b16 %v2871, %v2870
        %2888 = vmatpush.bf16.msra.mxu0 %v2879
        %2889 = vmatpush.bf16.msra.mxu0 %v2878
        %2890 = vmatpush.bf16.msra.mxu0 %v2877
        %2891 = vmatpush.bf16.msra.mxu0 %v2876
        %2892 = vmatpush.bf16.msra.mxu0 %v2875
        %2893 = vmatpush.bf16.msra.mxu0 %v2874
        %2894 = vmatpush.bf16.msra.mxu0 %v2873
        %2895 = vmatpush.bf16.msra.mxu0 %v2872
        %2896 = vmatmul.bf16.gmra.mxu0 %v2197
        %v2897 = vpop.f32.mrf.mxu0
        %v2898 = vadd.f32 0.0, %v2897
        %v2899 = vpop.f32.mrf.mxu0
        %2900 = vdwg.mxu0
        %v2917 = vunpack.c.l.b16 %v2807
        %v2918 = vunpack.c.l.b16 %v2808
        %v2919 = vunpack.c.l.b16 %v2809
        %v2920 = vunpack.c.l.b16 %v2810
        %v2921 = vunpack.c.l.b16 %v2811
        %v2922 = vunpack.c.l.b16 %v2812
        %v2923 = vunpack.c.l.b16 %v2813
        %v2924 = vunpack.c.l.b16 %v2814
        %v2925 = vunpack.c.l.b16 %v2815
        %v2926 = vunpack.c.l.b16 %v2816
        %v2927 = vunpack.c.l.b16 %v2817
        %v2928 = vunpack.c.l.b16 %v2818
        %v2929 = vunpack.c.l.b16 %v2819
        %v2930 = vunpack.c.l.b16 %v2820
        %v2931 = vunpack.c.l.b16 %v2821
        %v2932 = vunpack.c.l.b16 %v2822
        %v2933 = vpack.c.b16 %v2918, %v2917
        %v2934 = vpack.c.b16 %v2920, %v2919
        %v2935 = vpack.c.b16 %v2922, %v2921
        %v2936 = vpack.c.b16 %v2924, %v2923
        %v2937 = vpack.c.b16 %v2926, %v2925
        %v2938 = vpack.c.b16 %v2928, %v2927
        %v2939 = vpack.c.b16 %v2930, %v2929
        %v2940 = vpack.c.b16 %v2932, %v2931
        %2949 = vmatpush.bf16.msra.mxu0 %v2940
        %2950 = vmatpush.bf16.msra.mxu0 %v2939
        %2951 = vmatpush.bf16.msra.mxu0 %v2938
        %2952 = vmatpush.bf16.msra.mxu0 %v2937
        %2953 = vmatpush.bf16.msra.mxu0 %v2936
        %2954 = vmatpush.bf16.msra.mxu0 %v2935
        %2955 = vmatpush.bf16.msra.mxu0 %v2934
        %2956 = vmatpush.bf16.msra.mxu0 %v2933
        %2957 = vmatmul.bf16.gmra.mxu0 %v2805
        %v2958 = vpop.f32.mrf.mxu0
        %v2959 = vadd.f32 %v2898, %v2958
        %v2960 = vpop.f32.mrf.mxu0
        %2961 = vdwg.mxu0
        %s2962 = scalar_lea.vmem %s11, 6
        %v2963 = vld [vmem:[%s2962] sm:$0x1]
        %v2965 = vperm.slane %v2963, 0
        %v2967 = vadd.f32 %v2959, %v2965
        %v2968 = vmax.f32 %v2967, 0.0
        %v2969 = vpack.c.bf16 %v2474, %v2474
        %s2970 = scalar_lea.vmem [#allocation7], 448
        %v2971 = vld [vmem:[%s2970] sm:$0xf]
        %v2972 = vld [vmem:[%s2970 + $0x4] sm:$0xf]
        %v2973 = vld [vmem:[%s2970 + $0x8] sm:$0xf]
        %v2974 = vld [vmem:[%s2970 + $0xc] sm:$0xf]
        %v2975 = vld [vmem:[%s2970 + $0x10] sm:$0xf]
        %v2976 = vld [vmem:[%s2970 + $0x14] sm:$0xf]
        %v2977 = vld [vmem:[%s2970 + $0x18] sm:$0xf]
        %v2978 = vld [vmem:[%s2970 + $0x1c] sm:$0xf]
        %v2979 = vld [vmem:[%s2970 + $0x20] sm:$0xf]
        %v2980 = vld [vmem:[%s2970 + $0x24] sm:$0xf]
        %v2981 = vld [vmem:[%s2970 + $0x28] sm:$0xf]
        %v2982 = vld [vmem:[%s2970 + $0x2c] sm:$0xf]
        %v2983 = vld [vmem:[%s2970 + $0x30] sm:$0xf]
        %v2984 = vld [vmem:[%s2970 + $0x34] sm:$0xf]
        %v2985 = vld [vmem:[%s2970 + $0x38] sm:$0xf]
        %v2986 = vld [vmem:[%s2970 + $0x3c] sm:$0xf]
        %s2987 = scalar_lea.vmem [#allocation8], 448
        %v2988 = vld [vmem:[%s2987] sm:$0xf]
        %v2989 = vld [vmem:[%s2987 + $0x4] sm:$0xf]
        %v2990 = vld [vmem:[%s2987 + $0x8] sm:$0xf]
        %v2991 = vld [vmem:[%s2987 + $0xc] sm:$0xf]
        %v2992 = vld [vmem:[%s2987 + $0x10] sm:$0xf]
        %v2993 = vld [vmem:[%s2987 + $0x14] sm:$0xf]
        %v2994 = vld [vmem:[%s2987 + $0x18] sm:$0xf]
        %v2995 = vld [vmem:[%s2987 + $0x1c] sm:$0xf]
        %v2996 = vld [vmem:[%s2987 + $0x20] sm:$0xf]
        %v2997 = vld [vmem:[%s2987 + $0x24] sm:$0xf]
        %v2998 = vld [vmem:[%s2987 + $0x28] sm:$0xf]
        %v2999 = vld [vmem:[%s2987 + $0x2c] sm:$0xf]
        %v3000 = vld [vmem:[%s2987 + $0x30] sm:$0xf]
        %v3001 = vld [vmem:[%s2987 + $0x34] sm:$0xf]
        %v3002 = vld [vmem:[%s2987 + $0x38] sm:$0xf]
        %v3003 = vld [vmem:[%s2987 + $0x3c] sm:$0xf]
        %v3020 = vunpack.c.l.b16 %v2988
        %v3021 = vunpack.c.l.b16 %v2989
        %v3022 = vunpack.c.l.b16 %v2990
        %v3023 = vunpack.c.l.b16 %v2991
        %v3024 = vunpack.c.l.b16 %v2992
        %v3025 = vunpack.c.l.b16 %v2993
        %v3026 = vunpack.c.l.b16 %v2994
        %v3027 = vunpack.c.l.b16 %v2995
        %v3028 = vunpack.c.l.b16 %v2996
        %v3029 = vunpack.c.l.b16 %v2997
        %v3030 = vunpack.c.l.b16 %v2998
        %v3031 = vunpack.c.l.b16 %v2999
        %v3032 = vunpack.c.l.b16 %v3000
        %v3033 = vunpack.c.l.b16 %v3001
        %v3034 = vunpack.c.l.b16 %v3002
        %v3035 = vunpack.c.l.b16 %v3003
        %v3036 = vpack.c.b16 %v3021, %v3020
        %v3037 = vpack.c.b16 %v3023, %v3022
        %v3038 = vpack.c.b16 %v3025, %v3024
        %v3039 = vpack.c.b16 %v3027, %v3026
        %v3040 = vpack.c.b16 %v3029, %v3028
        %v3041 = vpack.c.b16 %v3031, %v3030
        %v3042 = vpack.c.b16 %v3033, %v3032
        %v3043 = vpack.c.b16 %v3035, %v3034
        %3052 = vmatpush.bf16.msra.mxu0 %v3043
        %3053 = vmatpush.bf16.msra.mxu0 %v3042
        %3054 = vmatpush.bf16.msra.mxu0 %v3041
        %3055 = vmatpush.bf16.msra.mxu0 %v3040
        %3056 = vmatpush.bf16.msra.mxu0 %v3039
        %3057 = vmatpush.bf16.msra.mxu0 %v3038
        %3058 = vmatpush.bf16.msra.mxu0 %v3037
        %3059 = vmatpush.bf16.msra.mxu0 %v3036
        %3060 = vmatmul.bf16.gmra.mxu0 %v2196
        %v3061 = vpop.f32.mrf.mxu0
        %v3062 = vadd.f32 0.0, %v3061
        %v3063 = vpop.f32.mrf.mxu0
        %3064 = vdwg.mxu0
        %v3081 = vunpack.c.l.b16 %v2971
        %v3082 = vunpack.c.l.b16 %v2972
        %v3083 = vunpack.c.l.b16 %v2973
        %v3084 = vunpack.c.l.b16 %v2974
        %v3085 = vunpack.c.l.b16 %v2975
        %v3086 = vunpack.c.l.b16 %v2976
        %v3087 = vunpack.c.l.b16 %v2977
        %v3088 = vunpack.c.l.b16 %v2978
        %v3089 = vunpack.c.l.b16 %v2979
        %v3090 = vunpack.c.l.b16 %v2980
        %v3091 = vunpack.c.l.b16 %v2981
        %v3092 = vunpack.c.l.b16 %v2982
        %v3093 = vunpack.c.l.b16 %v2983
        %v3094 = vunpack.c.l.b16 %v2984
        %v3095 = vunpack.c.l.b16 %v2985
        %v3096 = vunpack.c.l.b16 %v2986
        %v3097 = vpack.c.b16 %v3082, %v3081
        %v3098 = vpack.c.b16 %v3084, %v3083
        %v3099 = vpack.c.b16 %v3086, %v3085
        %v3100 = vpack.c.b16 %v3088, %v3087
        %v3101 = vpack.c.b16 %v3090, %v3089
        %v3102 = vpack.c.b16 %v3092, %v3091
        %v3103 = vpack.c.b16 %v3094, %v3093
        %v3104 = vpack.c.b16 %v3096, %v3095
        %3113 = vmatpush.bf16.msra.mxu0 %v3104
        %3114 = vmatpush.bf16.msra.mxu0 %v3103
        %3115 = vmatpush.bf16.msra.mxu0 %v3102
        %3116 = vmatpush.bf16.msra.mxu0 %v3101
        %3117 = vmatpush.bf16.msra.mxu0 %v3100
        %3118 = vmatpush.bf16.msra.mxu0 %v3099
        %3119 = vmatpush.bf16.msra.mxu0 %v3098
        %3120 = vmatpush.bf16.msra.mxu0 %v3097
        %3121 = vmatmul.bf16.gmra.mxu0 %v2969
        %v3122 = vpop.f32.mrf.mxu0
        %v3123 = vadd.f32 %v3062, %v3122
        %v3124 = vpop.f32.mrf.mxu0
        %3125 = vdwg.mxu0
        %s3126 = scalar_lea.vmem %s11, 7
        %v3127 = vld [vmem:[%s3126] sm:$0x1]
        %v3129 = vperm.slane %v3127, 0
        %v3131 = vadd.f32 %v3123, %v3129
        %v3132 = vmax.f32 %v3131, 0.0
        %v3133 = vpack.c.bf16 %v2640, %v2640
        %s3134 = scalar_lea.vmem [#allocation10], 128
        %v3135 = vld [vmem:[%s3134] sm:$0xf]
        %v3136 = vld [vmem:[%s3134 + $0x4] sm:$0xf]
        %v3137 = vld [vmem:[%s3134 + $0x8] sm:$0xf]
        %v3138 = vld [vmem:[%s3134 + $0xc] sm:$0xf]
        %v3139 = vld [vmem:[%s3134 + $0x10] sm:$0xf]
        %v3140 = vld [vmem:[%s3134 + $0x14] sm:$0xf]
        %v3141 = vld [vmem:[%s3134 + $0x18] sm:$0xf]
        %v3142 = vld [vmem:[%s3134 + $0x1c] sm:$0xf]
        %v3143 = vld [vmem:[%s3134 + $0x20] sm:$0xf]
        %v3144 = vld [vmem:[%s3134 + $0x24] sm:$0xf]
        %v3145 = vld [vmem:[%s3134 + $0x28] sm:$0xf]
        %v3146 = vld [vmem:[%s3134 + $0x2c] sm:$0xf]
        %v3147 = vld [vmem:[%s3134 + $0x30] sm:$0xf]
        %v3148 = vld [vmem:[%s3134 + $0x34] sm:$0xf]
        %v3149 = vld [vmem:[%s3134 + $0x38] sm:$0xf]
        %v3150 = vld [vmem:[%s3134 + $0x3c] sm:$0xf]
        %s3151 = scalar_lea.vmem %s14, 2
        %v3152 = vld [vmem:[%s3151] sm:$0x1]
        %v3154 = vperm.slane %v3152, 0
        %v3172 = vunpack.c.l.b16 %v3135
        %v3173 = vunpack.c.l.b16 %v3136
        %v3174 = vunpack.c.l.b16 %v3137
        %v3175 = vunpack.c.l.b16 %v3138
        %v3176 = vunpack.c.l.b16 %v3139
        %v3177 = vunpack.c.l.b16 %v3140
        %v3178 = vunpack.c.l.b16 %v3141
        %v3179 = vunpack.c.l.b16 %v3142
        %v3180 = vunpack.c.l.b16 %v3143
        %v3181 = vunpack.c.l.b16 %v3144
        %v3182 = vunpack.c.l.b16 %v3145
        %v3183 = vunpack.c.l.b16 %v3146
        %v3184 = vunpack.c.l.b16 %v3147
        %v3185 = vunpack.c.l.b16 %v3148
        %v3186 = vunpack.c.l.b16 %v3149
        %v3187 = vunpack.c.l.b16 %v3150
        %v3188 = vpack.c.b16 %v3173, %v3172
        %v3189 = vpack.c.b16 %v3175, %v3174
        %v3190 = vpack.c.b16 %v3177, %v3176
        %v3191 = vpack.c.b16 %v3179, %v3178
        %v3192 = vpack.c.b16 %v3181, %v3180
        %v3193 = vpack.c.b16 %v3183, %v3182
        %v3194 = vpack.c.b16 %v3185, %v3184
        %v3195 = vpack.c.b16 %v3187, %v3186
        %3204 = vmatpush.bf16.msra.mxu0 %v3195
        %3205 = vmatpush.bf16.msra.mxu0 %v3194
        %3206 = vmatpush.bf16.msra.mxu0 %v3193
        %3207 = vmatpush.bf16.msra.mxu0 %v3192
        %3208 = vmatpush.bf16.msra.mxu0 %v3191
        %3209 = vmatpush.bf16.msra.mxu0 %v3190
        %3210 = vmatpush.bf16.msra.mxu0 %v3189
        %3211 = vmatpush.bf16.msra.mxu0 %v3188
        %3212 = vmatmul.bf16.gmra.mxu0 %v3133
        %v3213 = vpop.f32.mrf.mxu0
        %v3214 = vadd.f32 %v3154, %v3213
        %v3215 = vpop.f32.mrf.mxu0
        %3216 = vdwg.mxu0
        %v3217 = vtanh.pop %v3214
        %v3218 = vrot.slane %v3217, 4
        %v3219 = vadd.f32 %v3217, %v3218
        %v3220 = vrot.slane %v3219, 2
        %v3221 = vadd.f32 %v3219, %v3220
        %v3222 = vrot.slane %v3221, 1
        %v3223 = vadd.f32 %v3221, %v3222
        %v3224 = vmul.f32 %v3223, %v1838
        %s3225 = scalar_lea.vmem %s12, 2
        %v3226 = vld [vmem:[%s3225] sm:$0x1]
        %v3227 = vmul.f32 %v3226, %v3224
        %v3228 = vsel %vm1842, %v3227, 0.0
        %3229 = vadd.xlane.f32.xlu0 %v3228
        %v3230 = vpop.xlane.xlu0 %3229
        %v3231 = vpack.c.bf16 %v3132, %v3132
        %3232 = vmatpush.bf16.msra.mxu0 %v3195
        %3233 = vmatpush.bf16.msra.mxu0 %v3194
        %3234 = vmatpush.bf16.msra.mxu0 %v3193
        %3235 = vmatpush.bf16.msra.mxu0 %v3192
        %3236 = vmatpush.bf16.msra.mxu0 %v3191
        %3237 = vmatpush.bf16.msra.mxu0 %v3190
        %3238 = vmatpush.bf16.msra.mxu0 %v3189
        %3239 = vmatpush.bf16.msra.mxu0 %v3188
        %3240 = vmatmul.bf16.gmra.mxu0 %v3231
        %v3241 = vpop.f32.mrf.mxu0
        %v3242 = vadd.f32 %v3154, %v3241
        %v3243 = vpop.f32.mrf.mxu0
        %3244 = vdwg.mxu0
        %v3245 = vtanh.pop %v3242
        %v3246 = vrot.slane %v3245, 4
        %v3247 = vadd.f32 %v3245, %v3246
        %v3248 = vrot.slane %v3247, 2
        %v3249 = vadd.f32 %v3247, %v3248
        %v3250 = vrot.slane %v3249, 1
        %v3251 = vadd.f32 %v3249, %v3250
        %v3252 = vmul.f32 %v3251, %v1838
        %v3253 = vmul.f32 %v3226, %v3252
        %v3254 = vsel %vm1842, %v3253, 0.0
        %3255 = vadd.xlane.f32.xlu0 %v3254
        %v3256 = vpop.xlane.xlu0 %3255
        %v3257 = vmax.f32 %v3230, %v3256
        %v3258 = vsub.f32 %v3230, %v3257
        %v3259 = vmul.f32 %v3258, 1.442695
        %v3260 = vpow.pop %v3259
        %v3261 = vsub.f32 %v3256, %v3257
        %v3262 = vmul.f32 %v3261, 1.442695
        %v3263 = vpow.pop %v3262
        %v3264 = vadd.f32 %v3260, %v3263
        %v3265 = vrcp.pop %v3264
        %v3266 = vmul.f32 %v3260, %v3265
        %v3267 = vperm.slane %v3266, 0
        %v3268 = vmul.f32 %v3267, %v2640
        %v3269 = vmul.f32 %v3263, %v3265
        %v3270 = vperm.slane %v3269, 0
        %v3271 = vmul.f32 %v3270, %v3132
        %v3272 = vadd.f32 %v3268, %v3271
        %v3273 = vpack.c.bf16 %v2804, %v2804
        %s3274 = scalar_lea.vmem [#allocation10], 192
        %v3275 = vld [vmem:[%s3274] sm:$0xf]
        %v3276 = vld [vmem:[%s3274 + $0x4] sm:$0xf]
        %v3277 = vld [vmem:[%s3274 + $0x8] sm:$0xf]
        %v3278 = vld [vmem:[%s3274 + $0xc] sm:$0xf]
        %v3279 = vld [vmem:[%s3274 + $0x10] sm:$0xf]
        %v3280 = vld [vmem:[%s3274 + $0x14] sm:$0xf]
        %v3281 = vld [vmem:[%s3274 + $0x18] sm:$0xf]
        %v3282 = vld [vmem:[%s3274 + $0x1c] sm:$0xf]
        %v3283 = vld [vmem:[%s3274 + $0x20] sm:$0xf]
        %v3284 = vld [vmem:[%s3274 + $0x24] sm:$0xf]
        %v3285 = vld [vmem:[%s3274 + $0x28] sm:$0xf]
        %v3286 = vld [vmem:[%s3274 + $0x2c] sm:$0xf]
        %v3287 = vld [vmem:[%s3274 + $0x30] sm:$0xf]
        %v3288 = vld [vmem:[%s3274 + $0x34] sm:$0xf]
        %v3289 = vld [vmem:[%s3274 + $0x38] sm:$0xf]
        %v3290 = vld [vmem:[%s3274 + $0x3c] sm:$0xf]
        %s3291 = scalar_lea.vmem %s14, 3
        %v3292 = vld [vmem:[%s3291] sm:$0x1]
        %v3294 = vperm.slane %v3292, 0
        %v3312 = vunpack.c.l.b16 %v3275
        %v3313 = vunpack.c.l.b16 %v3276
        %v3314 = vunpack.c.l.b16 %v3277
        %v3315 = vunpack.c.l.b16 %v3278
        %v3316 = vunpack.c.l.b16 %v3279
        %v3317 = vunpack.c.l.b16 %v3280
        %v3318 = vunpack.c.l.b16 %v3281
        %v3319 = vunpack.c.l.b16 %v3282
        %v3320 = vunpack.c.l.b16 %v3283
        %v3321 = vunpack.c.l.b16 %v3284
        %v3322 = vunpack.c.l.b16 %v3285
        %v3323 = vunpack.c.l.b16 %v3286
        %v3324 = vunpack.c.l.b16 %v3287
        %v3325 = vunpack.c.l.b16 %v3288
        %v3326 = vunpack.c.l.b16 %v3289
        %v3327 = vunpack.c.l.b16 %v3290
        %v3328 = vpack.c.b16 %v3313, %v3312
        %v3329 = vpack.c.b16 %v3315, %v3314
        %v3330 = vpack.c.b16 %v3317, %v3316
        %v3331 = vpack.c.b16 %v3319, %v3318
        %v3332 = vpack.c.b16 %v3321, %v3320
        %v3333 = vpack.c.b16 %v3323, %v3322
        %v3334 = vpack.c.b16 %v3325, %v3324
        %v3335 = vpack.c.b16 %v3327, %v3326
        %3344 = vmatpush.bf16.msra.mxu0 %v3335
        %3345 = vmatpush.bf16.msra.mxu0 %v3334
        %3346 = vmatpush.bf16.msra.mxu0 %v3333
        %3347 = vmatpush.bf16.msra.mxu0 %v3332
        %3348 = vmatpush.bf16.msra.mxu0 %v3331
        %3349 = vmatpush.bf16.msra.mxu0 %v3330
        %3350 = vmatpush.bf16.msra.mxu0 %v3329
        %3351 = vmatpush.bf16.msra.mxu0 %v3328
        %3352 = vmatmul.bf16.gmra.mxu0 %v3273
        %v3353 = vpop.f32.mrf.mxu0
        %v3354 = vadd.f32 %v3294, %v3353
        %v3355 = vpop.f32.mrf.mxu0
        %3356 = vdwg.mxu0
        %v3357 = vtanh.pop %v3354
        %v3358 = vrot.slane %v3357, 4
        %v3359 = vadd.f32 %v3357, %v3358
        %v3360 = vrot.slane %v3359, 2
        %v3361 = vadd.f32 %v3359, %v3360
        %v3362 = vrot.slane %v3361, 1
        %v3363 = vadd.f32 %v3361, %v3362
        %v3364 = vmul.f32 %v3363, %v1838
        %s3365 = scalar_lea.vmem %s12, 3
        %v3366 = vld [vmem:[%s3365] sm:$0x1]
        %v3367 = vmul.f32 %v3366, %v3364
        %v3368 = vsel %vm1842, %v3367, 0.0
        %3369 = vadd.xlane.f32.xlu0 %v3368
        %v3370 = vpop.xlane.xlu0 %3369
        %v3371 = vpack.c.bf16 %v2968, %v2968
        %3372 = vmatpush.bf16.msra.mxu0 %v3335
        %3373 = vmatpush.bf16.msra.mxu0 %v3334
        %3374 = vmatpush.bf16.msra.mxu0 %v3333
        %3375 = vmatpush.bf16.msra.mxu0 %v3332
        %3376 = vmatpush.bf16.msra.mxu0 %v3331
        %3377 = vmatpush.bf16.msra.mxu0 %v3330
        %3378 = vmatpush.bf16.msra.mxu0 %v3329
        %3379 = vmatpush.bf16.msra.mxu0 %v3328
        %3380 = vmatmul.bf16.gmra.mxu0 %v3371
        %v3381 = vpop.f32.mrf.mxu0
        %v3382 = vadd.f32 %v3294, %v3381
        %v3383 = vpop.f32.mrf.mxu0
        %3384 = vdwg.mxu0
        %v3385 = vtanh.pop %v3382
        %v3386 = vrot.slane %v3385, 4
        %v3387 = vadd.f32 %v3385, %v3386
        %v3388 = vrot.slane %v3387, 2
        %v3389 = vadd.f32 %v3387, %v3388
        %v3390 = vrot.slane %v3389, 1
        %v3391 = vadd.f32 %v3389, %v3390
        %v3392 = vmul.f32 %v3391, %v1838
        %v3393 = vmul.f32 %v3366, %v3392
        %v3394 = vsel %vm1842, %v3393, 0.0
        %3395 = vadd.xlane.f32.xlu0 %v3394
        %v3396 = vpop.xlane.xlu0 %3395
        %v3397 = vmax.f32 %v3370, %v3396
        %v3398 = vsub.f32 %v3370, %v3397
        %v3399 = vmul.f32 %v3398, 1.442695
        %v3400 = vpow.pop %v3399
        %v3401 = vsub.f32 %v3396, %v3397
        %v3402 = vmul.f32 %v3401, 1.442695
        %v3403 = vpow.pop %v3402
        %v3404 = vadd.f32 %v3400, %v3403
        %v3405 = vrcp.pop %v3404
        %v3406 = vmul.f32 %v3400, %v3405
        %v3407 = vperm.slane %v3406, 0
        %v3408 = vmul.f32 %v3407, %v2804
        %v3409 = vmul.f32 %v3403, %v3405
        %v3410 = vperm.slane %v3409, 0
        %v3411 = vmul.f32 %v3410, %v2968
        %v3412 = vadd.f32 %v3408, %v3411
        %3413 = vst [vmem:[%s610] sm:$0xff] %v3272
        %3414 = vst [vmem:[%s610 + $0x8] sm:$0xff] %v3412
        %s3415 = sand.u32 %s372, 1
        %s3416 = scalar_lea.sflag [#allocation4], %s3415
        %s3417 = sand.u32 %s372, 1
        %s3418 = smul.addr %s3417, 16
        %s3419 = scalar_lea.vmem [#allocation11], %s3418
        // Predicated region
        $region101: #{hstg_attn_forward.1} parent=79 // pred_check
          %p3420 = pneg %p382
        $region102: #{hstg_attn_forward.1} parent=79 // pred_check_branch
          %3422 = sbr.rel (%p3420) target = $region104
        $region103: #{hstg_attn_forward.1} parent=79 // pred_region
          %3424 = vsyncadd %s3416, 0
          %s3425 = smul.addr %s34, 2
          %s3426 = smul.addr %s3425, 8
          %s3427 = scalar_lea.hbm %s15, %s3426
          %s3428 = sshll.u32 %s3419, 4
          %s3429 = int_to_ptr.vmem [resolvable:$true] %s3428
          %s3430 = sshll.u32 %s3427, 4
          %s3431 = int_to_ptr.hbm [resolvable:$true] %s3430
          %3436 = dma.vmem_to_hbm [thread:$0]  %s3429, 256, %s3431, %s3416, 128, 128, 8
        $region104: #{hstg_attn_forward.1} parent=79 // pred_fallthru
          _
      $region80: #{hstg_attn_forward.1} parent=5 // pred_fallthru
        _
      %p3437 = scmp.le.s32.totalorder 2, %s29
      // Predicated region
      $region105: #{hstg_attn_forward.1} parent=5 // pred_check
        %p3438 = pneg %p3437
      $region106: #{hstg_attn_forward.1} parent=5 // pred_check_branch
        %3440 = sbr.rel (%p3438) target = $region108
      $region107: #{hstg_attn_forward.1} parent=5 // pred_region
        %s3441 = ssub.s32 %s29, 2
        // Predicated region
        $region109: #{hstg_attn_forward.1} parent=107 // pred_check
          %p3442 = pneg %p388
        $region110: #{hstg_attn_forward.1} parent=107 // pred_check_branch
          %3444 = sbr.rel (%p3442) target = $region112
        $region111: #{hstg_attn_forward.1} parent=107 // pred_region
          %s3445 = sand.u32 %s373, 1
          %s3446 = scalar_lea.sflag [#allocation4], %s3445
          %s3447 = sand.u32 %s373, 1
          %s3448 = smul.addr %s3447, 16
          %s3449 = scalar_lea.vmem [#allocation11], %s3448
          %3451 = dma.done %s3446, 256
        $region112: #{hstg_attn_forward.1} parent=107 // pred_fallthru
          _
      $region108: #{hstg_attn_forward.1} parent=5 // pred_fallthru
        _
    $region6: #{hstg_attn_forward.1} parent=1 // loop_footer
      %s33 = sadd.s32 1, %s29
    $region7: #{hstg_attn_forward.1} parent=1 // loop_footer_branch
      %28 = sbr.rel target = $region3
    $region8: #{hstg_attn_forward.1} parent=1 // loop_exit
      _
    %3452 = vsyncpa [#allocation3], 1
    %s3453 = scalar_lea.sflag [#allocation3], 1
    %3454 = vsyncpa %s3453, 1
    %3455 = vsyncpa [#allocation6], 1
    %3456 = vsyncpa [#allocation9], 1
    %3457 = vsyncpa [#allocation4], 1
    %s3458 = scalar_lea.sflag [#allocation4], 1
    %3459 = vsyncpa %s3458, 1

</llo_original>
